<compile_context>
chip_gen: v7x
topology: tpu7x:2x2x1
jax: 0.10.0
libtpu: 0.0.40
codegen_flags: <defaults>
</compile_context>

<pallas_src>
import functools

import jax
import jax.numpy as jnp
from jax.experimental import pallas as pl
from jax.experimental.pallas import tpu as pltpu

# ----- small, module-consistent sizes (the real model uses 2048 / 256 / 2048) ----
NUM_POINTS = 32      # stands in for 2048 (must not be 1024, see TODO below)
LATENT_DIM = 32      # stands in for 256
HIDDEN = 256         # stands in for the hard-coded 2048 hidden width
BATCH = 2

_VMEM_LIMIT = 48 * 1024 * 1024   # safe on v7x (64 MiB VMEM), generous on v5e/v6e
# int8 weight tile width for the two streaming FCs: an 8192-wide i8 tile is
# <= 16 MiB per buffer (== 4096-wide bf16), so 2 buffers fit v7x comfortably.
_STREAM_BLOCK = 8192


def _pick_tile(dim, preferred):
    """Largest multiple-of-128 tile <= preferred that divides dim, else dim."""
    for t in (preferred, 8192, 4096, 2048, 1024, 512, 256, 128):
        if t <= dim and dim % t == 0:
            return t
    return dim


def _quantize_per_col(w):
    """Symmetric int8 quantization with a per-output-channel (column) scale."""
    scale = jnp.max(jnp.abs(w), axis=0, keepdims=True) / 127.0
    scale = jnp.maximum(scale, 1e-8).astype(jnp.float32)
    w_q = jnp.clip(jnp.round(w / scale), -127, 127).astype(jnp.int8)
    return w_q, scale


# ---------------------------------------------------------------------------
# Kernels
# ---------------------------------------------------------------------------
def _conv_pair_kernel(x_ref, w1_ref, b1_ref, w2_ref, b2_ref, o_ref, *, relu_last):
    # Channel-major fused 1x1 conv pair on one batch element:
    #   h = relu(W1 @ x + b1);  y = W2 @ h + b2 [+ relu]
    # x_ref: (Cin, N)  w1: (Cmid, Cin)  b1: (Cmid, 1)  w2: (Cout, Cmid)  b2: (Cout, 1)
    h = jnp.dot(w1_ref[...], x_ref[...], preferred_element_type=jnp.float32)
    h = jnp.maximum(h + b1_ref[...], 0.0)
    y = jnp.dot(w2_ref[...], h, preferred_element_type=jnp.float32) + b2_ref[...]
    if relu_last:
        y = jnp.maximum(y, 0.0)
    o_ref[...] = y.astype(o_ref.dtype)


def conv1x1_pair(x, w1, b1, w2, b2, *, relu_last, out_dtype=jnp.float32):
    """x:(B,Cin,N) NCL -> (B,Cout,N); two fused 1x1 convs, first ReLU always on."""
    B, Cin, N = x.shape
    Cmid = w1.shape[0]
    Cout = w2.shape[0]
    return pl.pallas_call(
        functools.partial(_conv_pair_kernel, relu_last=relu_last),
        grid=(B,),
        in_specs=[
            pl.BlockSpec((None, Cin, N), lambda b: (b, 0, 0)),
            pl.BlockSpec((Cmid, Cin), lambda b: (0, 0)),
            pl.BlockSpec((Cmid, 1), lambda b: (0, 0)),
            pl.BlockSpec((Cout, Cmid), lambda b: (0, 0)),
            pl.BlockSpec((Cout, 1), lambda b: (0, 0)),
        ],
        out_specs=pl.BlockSpec((None, Cout, N), lambda b: (b, 0, 0)),
        out_shape=jax.ShapeDtypeStruct((B, Cout, N), out_dtype),
        compiler_params=pltpu.CompilerParams(dimension_semantics=("parallel",)),
    )(x, w1, b1.reshape(Cmid, 1), w2, b2.reshape(Cout, 1))


def _linear_ktiled_kernel(x_ref, w_ref, s_ref, b_ref, o_ref, acc_ref, *, relu):
    # K-tiled y = (x @ dequant(w_i8)) * scale + b with f32 accumulator.
    # Grid = (n_blocks, k_blocks); k (reduction) is the innermost, "arbitrary" axis.
    @pl.when(pl.program_id(1) == 0)
    def _():
        acc_ref[...] = jnp.zeros_like(acc_ref)

    # x is already bf16; int8 weight tile dequantized on the VPU (scale deferred
    # to the epilogue since it is constant per output column).
    acc_ref[...] += jnp.dot(x_ref[...], w_ref[...].astype(jnp.bfloat16),
                            preferred_element_type=jnp.float32)

    @pl.when(pl.program_id(1) == pl.num_programs(1) - 1)
    def _():
        y = acc_ref[...] * s_ref[...] + b_ref[...]
        if relu:
            y = jnp.maximum(y, 0.0)
        o_ref[...] = y.astype(o_ref.dtype)


def linear_ktiled(x, w_q, w_scale, b, *, relu, block_k=_STREAM_BLOCK, n_split=2):
    """Large-K linear (encoder_fc1): x:(M,K)bf16 @ dequant(w_q:(K,N)i8) + b.

    K is streamed in tiles; the output/hidden dim is split into `n_split`
    "parallel" grid blocks so both v7x TensorCores stream weight halves.
    """
    M, K = x.shape
    N = w_q.shape[1]
    tk = _pick_tile(K, block_k)
    tn = N // n_split if (n_split > 1 and N % (n_split * 128) == 0) else N
    flops = 2 * M * K * N
    bytes_accessed = (x.size * x.dtype.itemsize * (N // tn)   # x re-streamed per N block
                      + w_q.size                               # int8 -> 1 B/elem
                      + 2 * N * 4 + M * N * 4)
    return pl.pallas_call(
        functools.partial(_linear_ktiled_kernel, relu=relu),
        grid=(N // tn, K // tk),
        in_specs=[
            pl.BlockSpec((M, tk), lambda j, k: (0, k)),
            pl.BlockSpec((tk, tn), lambda j, k: (k, j)),
            pl.BlockSpec((1, tn), lambda j, k: (0, j)),
            pl.BlockSpec((1, tn), lambda j, k: (0, j)),
        ],
        out_specs=pl.BlockSpec((M, tn), lambda j, k: (0, j)),
        out_shape=jax.ShapeDtypeStruct((M, N), jnp.float32),
        scratch_shapes=[pltpu.VMEM((M, tn), jnp.float32)],
        compiler_params=pltpu.CompilerParams(
            dimension_semantics=("parallel", "arbitrary"),
            vmem_limit_bytes=_VMEM_LIMIT),
        cost_estimate=pl.CostEstimate(flops=flops, transcendentals=0,
                                      bytes_accessed=bytes_accessed),
    )(x, w_q, w_scale, b.reshape(1, N))


def _linear_ntiled_kernel(x_ref, w_ref, s_ref, b_ref, o_ref, *, relu):
    y = jnp.dot(x_ref[...], w_ref[...].astype(jnp.bfloat16),
                preferred_element_type=jnp.float32)
    y = y * s_ref[...] + b_ref[...]
    if relu:
        y = jnp.maximum(y, 0.0)
    o_ref[...] = y.astype(o_ref.dtype)


def linear_ntiled(x, w_q, w_scale, b, *, relu, block_n=_STREAM_BLOCK,
                  out_dtype=jnp.bfloat16):
    """Large-N linear (decoder_fc2): output-N tiled, lane-dense multiple-of-128 tiles."""
    M, K = x.shape
    N = w_q.shape[1]
    tn = _pick_tile(N, block_n)
    flops = 2 * M * K * N
    bytes_accessed = (x.size * x.dtype.itemsize + w_q.size + 2 * N * 4
                      + M * N * jnp.dtype(out_dtype).itemsize)
    return pl.pallas_call(
        functools.partial(_linear_ntiled_kernel, relu=relu),
        grid=(N // tn,),
        in_specs=[
            pl.BlockSpec((M, K), lambda j: (0, 0)),
            pl.BlockSpec((K, tn), lambda j: (0, j)),
            pl.BlockSpec((1, tn), lambda j: (0, j)),
            pl.BlockSpec((1, tn), lambda j: (0, j)),
        ],
        out_specs=pl.BlockSpec((M, tn), lambda j: (0, j)),
        out_shape=jax.ShapeDtypeStruct((M, N), out_dtype),
        compiler_params=pltpu.CompilerParams(
            dimension_semantics=("parallel",),
            vmem_limit_bytes=_VMEM_LIMIT),
        cost_estimate=pl.CostEstimate(flops=flops, transcendentals=0,
                                      bytes_accessed=bytes_accessed),
    )(x, w_q, w_scale, b.reshape(1, N))


def _latent_dec1_kernel(h_ref, wm_ref, bm_ref, wl_ref, bl_ref, eps_ref,
                        wd_ref, bd_ref, z_ref, d_ref):
    # Fused: z_mean, z_logvar, reparameterization AND decoder_fc1 in one pass.
    h = h_ref[...]
    mean = jnp.dot(h, wm_ref[...], preferred_element_type=jnp.float32) + bm_ref[...]
    logvar = jnp.dot(h, wl_ref[...], preferred_element_type=jnp.float32) + bl_ref[...]
    z = mean + jnp.exp(0.5 * logvar) * eps_ref[...]
    z_ref[...] = z.astype(z_ref.dtype)
    d = jnp.dot(z, wd_ref[...], preferred_element_type=jnp.float32) + bd_ref[...]
    d_ref[...] = jnp.maximum(d, 0.0).astype(d_ref.dtype)


def latent_and_decoder_fc1(h, wm, bm, wl, bl, eps, wd, bd):
    B, H = h.shape
    L = wm.shape[1]
    return pl.pallas_call(
        _latent_dec1_kernel,
        grid=(1,),
        in_specs=[
            pl.BlockSpec((B, H), lambda i: (0, 0)),
            pl.BlockSpec((H, L), lambda i: (0, 0)),
            pl.BlockSpec((1, L), lambda i: (0, 0)),
            pl.BlockSpec((H, L), lambda i: (0, 0)),
            pl.BlockSpec((1, L), lambda i: (0, 0)),
            pl.BlockSpec((B, L), lambda i: (0, 0)),
            pl.BlockSpec((L, H), lambda i: (0, 0)),
            pl.BlockSpec((1, H), lambda i: (0, 0)),
        ],
        out_specs=[
            pl.BlockSpec((B, L), lambda i: (0, 0)),
            pl.BlockSpec((B, H), lambda i: (0, 0)),
        ],
        out_shape=(jax.ShapeDtypeStruct((B, L), jnp.float32),
                   jax.ShapeDtypeStruct((B, H), jnp.bfloat16)),
        compiler_params=pltpu.CompilerParams(dimension_semantics=("arbitrary",)),
    )(h, wm, bm.reshape(1, L), wl, bl.reshape(1, L), eps, wd, bd.reshape(1, H))


# ---------------------------------------------------------------------------
# Parameters (deterministic, synthetic)
# ---------------------------------------------------------------------------
def init_params(key, num_points, latent_dim, hidden):
    def w(k, shape, scale=0.05):
        return scale * jax.random.normal(k, shape, dtype=jnp.float32)

    ks = jax.random.split(key, 20)
    p = {}
    # 1x1 conv weights kept in PyTorch (Cout, Cin) form (kernel dim squeezed).
    p["ec1_w"], p["ec1_b"] = w(ks[0], (64, 3)), w(ks[1], (64,))
    p["ec2_w"], p["ec2_b"] = w(ks[2], (128, 64)), w(ks[3], (128,))
    # Two HBM-dominant FC weights stored int8 + per-output-channel scale
    # (FC weights stored transposed (in, out)).
    efc1_w = w(ks[4], (128 * num_points, hidden))
    p["efc1_wq"], p["efc1_ws"] = _quantize_per_col(efc1_w)
    p["efc1_b"] = w(ks[5], (hidden,))
    p["em_w"], p["em_b"] = w(ks[6], (hidden, latent_dim)), w(ks[7], (latent_dim,))
    p["elv_w"], p["elv_b"] = w(ks[8], (hidden, latent_dim)), w(ks[9], (latent_dim,))
    p["dfc1_w"], p["dfc1_b"] = w(ks[10], (latent_dim, hidden)), w(ks[11], (hidden,))
    dfc2_w = w(ks[12], (hidden, 128 * num_points))
    p["dfc2_wq"], p["dfc2_ws"] = _quantize_per_col(dfc2_w)
    p["dfc2_b"] = w(ks[13], (128 * num_points,))
    p["dc1_w"], p["dc1_b"] = w(ks[14], (64, 128)), w(ks[15], (64,))
    p["dc2_w"], p["dc2_b"] = w(ks[16], (3, 64)), w(ks[17], (3,))
    return p


# ---------------------------------------------------------------------------
# Forward pass (Pallas kernels)
# ---------------------------------------------------------------------------
def vae_forward(params, x, eps):
    """x: (B, 3, N) PyTorch NCL. Returns (recon (B,3,N), z (B,latent))."""
    B, _, N = x.shape

    # Encoder 1x1 convs in channel-major layout (lane-dense over N), bf16 out.
    h = conv1x1_pair(x, params["ec1_w"], params["ec1_b"],
                     params["ec2_w"], params["ec2_b"],
                     relu_last=True, out_dtype=jnp.bfloat16)            # (B,128,N)

    # TODO(synk): ConvTranspose1d upsample branch (only taken when N == 1024) not implemented.

    # Channel-major output flattens exactly like PyTorch's x.view(-1, 128*num_points).
    hflat = h.reshape(B, 128 * N)                                       # bf16

    # encoder_fc1: K-tiled int8-weight stream, f32 accumulate, ReLU epilogue.
    hfc = linear_ktiled(hflat, params["efc1_wq"], params["efc1_ws"],
                        params["efc1_b"], relu=True)                    # (B,hidden) f32

    # Fused z_mean / z_logvar / reparameterization / decoder_fc1 (ReLU).
    z, d = latent_and_decoder_fc1(hfc, params["em_w"], params["em_b"],
                                  params["elv_w"], params["elv_b"], eps,
                                  params["dfc1_w"], params["dfc1_b"])   # z f32, d bf16

    # decoder_fc2: output-N tiled int8-weight stream, ReLU, bf16 out.
    d = linear_ntiled(d, params["dfc2_wq"], params["dfc2_ws"],
                      params["dfc2_b"], relu=True, out_dtype=jnp.bfloat16)  # (B,128*N)

    # Matches PyTorch x.view(-1, 128, num_points); decoder convs stay channel-major.
    d = d.reshape(B, 128, N)
    out = conv1x1_pair(d, params["dc1_w"], params["dc1_b"],
                       params["dc2_w"], params["dc2_b"],
                       relu_last=False, out_dtype=jnp.float32)          # (B,3,N)
    return out, z


# ---------------------------------------------------------------------------
# Pure-JAX f32 reference (same quantized weights) for validation
# ---------------------------------------------------------------------------
def vae_forward_ref(params, x, eps):
    def conv(xx, w, b):
        return jnp.einsum('oc,bcn->bon', w, xx) + b[None, :, None]

    def deq(wq, ws):
        return wq.astype(jnp.float32) * ws

    B, _, N = x.shape
    h = jnp.maximum(conv(x, params["ec1_w"], params["ec1_b"]), 0.0)
    h = jnp.maximum(conv(h, params["ec2_w"], params["ec2_b"]), 0.0)
    hflat = h.reshape(B, 128 * N)
    hfc = jnp.maximum(hflat @ deq(params["efc1_wq"], params["efc1_ws"])
                      + params["efc1_b"], 0.0)
    mean = hfc @ params["em_w"] + params["em_b"]
    logvar = hfc @ params["elv_w"] + params["elv_b"]
    z = mean + jnp.exp(0.5 * logvar) * eps
    d = jnp.maximum(z @ params["dfc1_w"] + params["dfc1_b"], 0.0)
    d = jnp.maximum(d @ deq(params["dfc2_wq"], params["dfc2_ws"])
                    + params["dfc2_b"], 0.0)
    d = d.reshape(B, 128, N)
    o = jnp.maximum(conv(d, params["dc1_w"], params["dc1_b"]), 0.0)
    o = conv(o, params["dc2_w"], params["dc2_b"])
    return o, z


# ---------------------------------------------------------------------------
if __name__ == "__main__":
    key = jax.random.PRNGKey(0)
    k_param, k_x, k_eps = jax.random.split(key, 3)

    params = init_params(k_param, NUM_POINTS, LATENT_DIM, HIDDEN)
    x = jax.random.normal(k_x, (BATCH, 3, NUM_POINTS), dtype=jnp.float32)
    eps = jax.random.normal(k_eps, (BATCH, LATENT_DIM), dtype=jnp.float32)

    recon, z = jax.jit(vae_forward)(params, x, eps)
    jax.block_until_ready((recon, z))

    recon_ref, z_ref = jax.jit(vae_forward_ref)(params, x, eps)
    jax.block_until_ready((recon_ref, z_ref))

    assert recon.shape == (BATCH, 3, NUM_POINTS), recon.shape
    assert z.shape == (BATCH, LATENT_DIM), z.shape
    assert bool(jnp.all(jnp.isfinite(recon))) and bool(jnp.all(jnp.isfinite(z)))

    def rel_err(a, b):
        return float(jnp.linalg.norm((a - b).astype(jnp.float32))
                     / (jnp.linalg.norm(b.astype(jnp.float32)) + 1e-6))

    # bf16 intermediates / bf16 MXU inputs vs. the f32 reference -> ~1-2% expected.
    assert rel_err(recon, recon_ref) < 5e-2, rel_err(recon, recon_ref)
    assert rel_err(z, z_ref) < 5e-2, rel_err(z, z_ref)

    print("KERNEL_OK")
</pallas_src>

<mosaic_0001>
module attributes {stable_mosaic.version = 11 : i64} {
  func.func @_conv_pair_kernel(%arg0: i32, %arg1: memref<1x3x32xf32, #tpu.memory_space<vmem>>, %arg2: memref<64x3xf32, #tpu.memory_space<vmem>>, %arg3: memref<64x1xf32, #tpu.memory_space<vmem>>, %arg4: memref<128x64xf32, #tpu.memory_space<vmem>>, %arg5: memref<128x1xf32, #tpu.memory_space<vmem>>, %arg6: memref<1x128x32xbf16, #tpu.memory_space<vmem>>) attributes {dimension_semantics = [#tpu.dimension_semantics<parallel>], iteration_bounds = array<i64: 2>, scalar_prefetch = 0 : i64, scratch_operands = 0 : i64, tpu.core_type = #tpu.core_type<tc>, window_params = [{transform_indices = @transform_0, window_bounds = array<i64: 1, 3, 32>}, {pipeline_mode = #tpu.pipeline_mode<synchronous>, transform_indices = @transform_1, window_bounds = array<i64: 64, 3>}, {pipeline_mode = #tpu.pipeline_mode<synchronous>, transform_indices = @transform_2, window_bounds = array<i64: 64, 1>}, {pipeline_mode = #tpu.pipeline_mode<synchronous>, transform_indices = @transform_3, window_bounds = array<i64: 128, 64>}, {pipeline_mode = #tpu.pipeline_mode<synchronous>, transform_indices = @transform_4, window_bounds = array<i64: 128, 1>}, {transform_indices = @transform_5, window_bounds = array<i64: 1, 128, 32>}]} {
    %c0 = arith.constant 0 : index
    %c0_0 = arith.constant 0 : index
    %0 = vector.load %arg2[%c0, %c0_0] : memref<64x3xf32, #tpu.memory_space<vmem>>, vector<64x3xf32>
    %c0_1 = arith.constant 0 : index
    %c0_2 = arith.constant 0 : index
    %c0_3 = arith.constant 0 : index
    %1 = vector.load %arg1[%c0_1, %c0_2, %c0_3] : memref<1x3x32xf32, #tpu.memory_space<vmem>>, vector<1x3x32xf32>
    %2 = vector.shape_cast %1 : vector<1x3x32xf32> to vector<3x32xf32>
    %cst = arith.constant dense<0.000000e+00> : vector<64x32xf32>
    %3 = tpu.matmul %0, %2, %cst {dimension_numbers = #tpu.dot_dimension_numbers<[1], [0], [0], [1], [0, 0, 1, 1], [], []>} : vector<64x3xf32>, vector<3x32xf32>, vector<64x32xf32> -> vector<64x32xf32>
    %c0_4 = arith.constant 0 : index
    %c0_5 = arith.constant 0 : index
    %4 = vector.load %arg3[%c0_4, %c0_5] : memref<64x1xf32, #tpu.memory_space<vmem>>, vector<64x1xf32>
    %5 = vector.broadcast %4 : vector<64x1xf32> to vector<64x32xf32>
    %6 = arith.addf %3, %5 : vector<64x32xf32>
    %cst_6 = arith.constant 0.000000e+00 : f32
    %7 = vector.broadcast %cst_6 : f32 to vector<64x32xf32>
    %8 = arith.maximumf %6, %7 : vector<64x32xf32>
    %c0_7 = arith.constant 0 : index
    %c0_8 = arith.constant 0 : index
    %9 = vector.load %arg4[%c0_7, %c0_8] : memref<128x64xf32, #tpu.memory_space<vmem>>, vector<128x64xf32>
    %cst_9 = arith.constant dense<0.000000e+00> : vector<128x32xf32>
    %10 = tpu.matmul %9, %8, %cst_9 {dimension_numbers = #tpu.dot_dimension_numbers<[1], [0], [0], [1], [0, 0, 1, 1], [], []>} : vector<128x64xf32>, vector<64x32xf32>, vector<128x32xf32> -> vector<128x32xf32>
    %c0_10 = arith.constant 0 : index
    %c0_11 = arith.constant 0 : index
    %11 = vector.load %arg5[%c0_10, %c0_11] : memref<128x1xf32, #tpu.memory_space<vmem>>, vector<128x1xf32>
    %12 = vector.broadcast %11 : vector<128x1xf32> to vector<128x32xf32>
    %13 = arith.addf %10, %12 : vector<128x32xf32>
    %cst_12 = arith.constant 0.000000e+00 : f32
    %14 = vector.broadcast %cst_12 : f32 to vector<128x32xf32>
    %15 = arith.maximumf %13, %14 : vector<128x32xf32>
    %16 = arith.truncf %15 : vector<128x32xf32> to vector<128x32xbf16>
    %c0_13 = arith.constant 0 : index
    %c0_14 = arith.constant 0 : index
    %c0_15 = arith.constant 0 : index
    %17 = vector.load %arg6[%c0_13, %c0_14, %c0_15] : memref<1x128x32xbf16, #tpu.memory_space<vmem>>, vector<1x128x32xbf16>
    %18 = vector.shape_cast %17 : vector<1x128x32xbf16> to vector<128x32xbf16>
    %19 = vector.shape_cast %16 : vector<128x32xbf16> to vector<1x128x32xbf16>
    tpu.vector_store %arg6[%c0_13, %c0_14, %c0_15], %19 {strides = array<i32>} : memref<1x128x32xbf16, #tpu.memory_space<vmem>>, vector<1x128x32xbf16>,
    return
  }
  func.func @transform_0(%arg0: i32) -> (i32, i32, i32) {
    %c0_i32 = arith.constant 0 : i32
    %c0_i32_0 = arith.constant 0 : i32
    %c0_i32_1 = arith.constant 0 : i32
    return %arg0, %c0_i32, %c0_i32_0 : i32, i32, i32
  }
  func.func @transform_1(%arg0: i32) -> (i32, i32) {
    %c0_i32 = arith.constant 0 : i32
    %c0_i32_0 = arith.constant 0 : i32
    %c0_i32_1 = arith.constant 0 : i32
    return %c0_i32, %c0_i32_0 : i32, i32
  }
  func.func @transform_2(%arg0: i32) -> (i32, i32) {
    %c0_i32 = arith.constant 0 : i32
    %c0_i32_0 = arith.constant 0 : i32
    %c0_i32_1 = arith.constant 0 : i32
    return %c0_i32, %c0_i32_0 : i32, i32
  }
  func.func @transform_3(%arg0: i32) -> (i32, i32) {
    %c0_i32 = arith.constant 0 : i32
    %c0_i32_0 = arith.constant 0 : i32
    %c0_i32_1 = arith.constant 0 : i32
    return %c0_i32, %c0_i32_0 : i32, i32
  }
  func.func @transform_4(%arg0: i32) -> (i32, i32) {
    %c0_i32 = arith.constant 0 : i32
    %c0_i32_0 = arith.constant 0 : i32
    %c0_i32_1 = arith.constant 0 : i32
    return %c0_i32, %c0_i32_0 : i32, i32
  }
  func.func @transform_5(%arg0: i32) -> (i32, i32, i32) {
    %c0_i32 = arith.constant 0 : i32
    %c0_i32_0 = arith.constant 0 : i32
    %c0_i32_1 = arith.constant 0 : i32
    return %arg0, %c0_i32, %c0_i32_0 : i32, i32, i32
  }
}

module attributes {stable_mosaic.version = 11 : i64} {
  func.func @_linear_ktiled_kernel(%arg0: i32, %arg1: i32, %arg2: memref<2x4096xbf16, #tpu.memory_space<vmem>>, %arg3: memref<4096x128xi8, #tpu.memory_space<vmem>>, %arg4: memref<1x128xf32, #tpu.memory_space<vmem>>, %arg5: memref<1x128xf32, #tpu.memory_space<vmem>>, %arg6: memref<2x128xf32, #tpu.memory_space<vmem>>, %arg7: memref<2x128xf32, #tpu.memory_space<vmem>>) attributes {dimension_semantics = [#tpu.dimension_semantics<parallel>, #tpu.dimension_semantics<arbitrary>], iteration_bounds = array<i64: 2, 1>, scalar_prefetch = 0 : i64, scratch_operands = 1 : i64, tpu.core_type = #tpu.core_type<tc>, window_params = [{transform_indices = @transform_0, window_bounds = array<i64: 2, 4096>}, {transform_indices = @transform_1, window_bounds = array<i64: 4096, 128>}, {transform_indices = @transform_2, window_bounds = array<i64: 1, 128>}, {transform_indices = @transform_3, window_bounds = array<i64: 1, 128>}, {transform_indices = @transform_4, window_bounds = array<i64: 2, 128>}]} {
    %c0_i32 = arith.constant 0 : i32
    %0 = arith.cmpi eq, %arg1, %c0_i32 : i32
    %1 = arith.extui %0 : i1 to i32
    %c0_i32_0 = arith.constant 0 : i32
    %2 = arith.cmpi ne, %1, %c0_i32_0 : i32
    scf.if %2 {
      %cst_10 = arith.constant 0.000000e+00 : f32
      %13 = vector.broadcast %cst_10 : f32 to vector<2x128xf32>
      %c0_11 = arith.constant 0 : index
      %c0_12 = arith.constant 0 : index
      %14 = vector.load %arg7[%c0_11, %c0_12] : memref<2x128xf32, #tpu.memory_space<vmem>>, vector<2x128xf32>
      tpu.vector_store %arg7[%c0_11, %c0_12], %13 {strides = array<i32>} : memref<2x128xf32, #tpu.memory_space<vmem>>, vector<2x128xf32>,
    } else {
    }
    %c0 = arith.constant 0 : index
    %c0_1 = arith.constant 0 : index
    %3 = vector.load %arg7[%c0, %c0_1] : memref<2x128xf32, #tpu.memory_space<vmem>>, vector<2x128xf32>
    %c0_2 = arith.constant 0 : index
    %c0_3 = arith.constant 0 : index
    %4 = vector.load %arg2[%c0_2, %c0_3] : memref<2x4096xbf16, #tpu.memory_space<vmem>>, vector<2x4096xbf16>
    %c0_4 = arith.constant 0 : index
    %c0_5 = arith.constant 0 : index
    %5 = vector.load %arg3[%c0_4, %c0_5] : memref<4096x128xi8, #tpu.memory_space<vmem>>, vector<4096x128xi8>
    %6 = arith.sitofp %5 : vector<4096x128xi8> to vector<4096x128xbf16>
    %cst = arith.constant dense<0.000000e+00> : vector<2x128xf32>
    %7 = tpu.matmul %4, %6, %cst {dimension_numbers = #tpu.dot_dimension_numbers<[1], [0], [0], [1], [0, 0, 1, 1], [], []>} : vector<2x4096xbf16>, vector<4096x128xbf16>, vector<2x128xf32> -> vector<2x128xf32>
    %8 = arith.addf %3, %7 : vector<2x128xf32>
    %c0_6 = arith.constant 0 : index
    %c0_7 = arith.constant 0 : index
    %9 = vector.load %arg7[%c0_6, %c0_7] : memref<2x128xf32, #tpu.memory_space<vmem>>, vector<2x128xf32>
    tpu.vector_store %arg7[%c0_6, %c0_7], %8 {strides = array<i32>} : memref<2x128xf32, #tpu.memory_space<vmem>>, vector<2x128xf32>,
    %c0_i32_8 = arith.constant 0 : i32
    %10 = arith.cmpi eq, %arg1, %c0_i32_8 : i32
    %11 = arith.extui %10 : i1 to i32
    %c0_i32_9 = arith.constant 0 : i32
    %12 = arith.cmpi ne, %11, %c0_i32_9 : i32
    scf.if %12 {
      %c0_10 = arith.constant 0 : index
      %c0_11 = arith.constant 0 : index
      %13 = vector.load %arg7[%c0_10, %c0_11] : memref<2x128xf32, #tpu.memory_space<vmem>>, vector<2x128xf32>
      %c0_12 = arith.constant 0 : index
      %c0_13 = arith.constant 0 : index
      %14 = vector.load %arg4[%c0_12, %c0_13] : memref<1x128xf32, #tpu.memory_space<vmem>>, vector<1x128xf32>
      %15 = vector.broadcast %14 : vector<1x128xf32> to vector<2x128xf32>
      %16 = arith.mulf %13, %15 : vector<2x128xf32>
      %c0_14 = arith.constant 0 : index
      %c0_15 = arith.constant 0 : index
      %17 = vector.load %arg5[%c0_14, %c0_15] : memref<1x128xf32, #tpu.memory_space<vmem>>, vector<1x128xf32>
      %18 = vector.broadcast %17 : vector<1x128xf32> to vector<2x128xf32>
      %19 = arith.addf %16, %18 : vector<2x128xf32>
      %cst_16 = arith.constant 0.000000e+00 : f32
      %20 = vector.broadcast %cst_16 : f32 to vector<2x128xf32>
      %21 = arith.maximumf %19, %20 : vector<2x128xf32>
      %c0_17 = arith.constant 0 : index
      %c0_18 = arith.constant 0 : index
      %22 = vector.load %arg6[%c0_17, %c0_18] : memref<2x128xf32, #tpu.memory_space<vmem>>, vector<2x128xf32>
      tpu.vector_store %arg6[%c0_17, %c0_18], %21 {strides = array<i32>} : memref<2x128xf32, #tpu.memory_space<vmem>>, vector<2x128xf32>,
    } else {
    }
    return
  }
  func.func @transform_0(%arg0: i32, %arg1: i32) -> (i32, i32) {
    %c0_i32 = arith.constant 0 : i32
    %c0_i32_0 = arith.constant 0 : i32
    return %c0_i32, %arg1 : i32, i32
  }
  func.func @transform_1(%arg0: i32, %arg1: i32) -> (i32, i32) {
    %c0_i32 = arith.constant 0 : i32
    return %arg1, %arg0 : i32, i32
  }
  func.func @transform_2(%arg0: i32, %arg1: i32) -> (i32, i32) {
    %c0_i32 = arith.constant 0 : i32
    %c0_i32_0 = arith.constant 0 : i32
    return %c0_i32, %arg0 : i32, i32
  }
  func.func @transform_3(%arg0: i32, %arg1: i32) -> (i32, i32) {
    %c0_i32 = arith.constant 0 : i32
    %c0_i32_0 = arith.constant 0 : i32
    return %c0_i32, %arg0 : i32, i32
  }
  func.func @transform_4(%arg0: i32, %arg1: i32) -> (i32, i32) {
    %c0_i32 = arith.constant 0 : i32
    %c0_i32_0 = arith.constant 0 : i32
    return %c0_i32, %arg0 : i32, i32
  }
}

module attributes {stable_mosaic.version = 11 : i64} {
  func.func @_latent_dec1_kernel(%arg0: i32, %arg1: memref<2x256xf32, #tpu.memory_space<vmem>>, %arg2: memref<256x32xf32, #tpu.memory_space<vmem>>, %arg3: memref<1x32xf32, #tpu.memory_space<vmem>>, %arg4: memref<256x32xf32, #tpu.memory_space<vmem>>, %arg5: memref<1x32xf32, #tpu.memory_space<vmem>>, %arg6: memref<2x32xf32, #tpu.memory_space<vmem>>, %arg7: memref<32x256xf32, #tpu.memory_space<vmem>>, %arg8: memref<1x256xf32, #tpu.memory_space<vmem>>, %arg9: memref<2x32xf32, #tpu.memory_space<vmem>>, %arg10: memref<2x256xbf16, #tpu.memory_space<vmem>>) attributes {dimension_semantics = [#tpu.dimension_semantics<arbitrary>], iteration_bounds = array<i64: 1>, scalar_prefetch = 0 : i64, scratch_operands = 0 : i64, tpu.core_type = #tpu.core_type<tc>, window_params = [{pipeline_mode = #tpu.pipeline_mode<synchronous>, transform_indices = @transform_0, window_bounds = array<i64: 2, 256>}, {pipeline_mode = #tpu.pipeline_mode<synchronous>, transform_indices = @transform_1, window_bounds = array<i64: 256, 32>}, {pipeline_mode = #tpu.pipeline_mode<synchronous>, transform_indices = @transform_2, window_bounds = array<i64: 1, 32>}, {pipeline_mode = #tpu.pipeline_mode<synchronous>, transform_indices = @transform_3, window_bounds = array<i64: 256, 32>}, {pipeline_mode = #tpu.pipeline_mode<synchronous>, transform_indices = @transform_4, window_bounds = array<i64: 1, 32>}, {pipeline_mode = #tpu.pipeline_mode<synchronous>, transform_indices = @transform_5, window_bounds = array<i64: 2, 32>}, {pipeline_mode = #tpu.pipeline_mode<synchronous>, transform_indices = @transform_6, window_bounds = array<i64: 32, 256>}, {pipeline_mode = #tpu.pipeline_mode<synchronous>, transform_indices = @transform_7, window_bounds = array<i64: 1, 256>}, {pipeline_mode = #tpu.pipeline_mode<synchronous>, transform_indices = @transform_8, window_bounds = array<i64: 2, 32>}, {pipeline_mode = #tpu.pipeline_mode<synchronous>, transform_indices = @transform_9, window_bounds = array<i64: 2, 256>}]} {
    %c0 = arith.constant 0 : index
    %c0_0 = arith.constant 0 : index
    %0 = vector.load %arg1[%c0, %c0_0] : memref<2x256xf32, #tpu.memory_space<vmem>>, vector<2x256xf32>
    %c0_1 = arith.constant 0 : index
    %c0_2 = arith.constant 0 : index
    %1 = vector.load %arg2[%c0_1, %c0_2] : memref<256x32xf32, #tpu.memory_space<vmem>>, vector<256x32xf32>
    %cst = arith.constant dense<0.000000e+00> : vector<2x32xf32>
    %2 = tpu.matmul %0, %1, %cst {dimension_numbers = #tpu.dot_dimension_numbers<[1], [0], [0], [1], [0, 0, 1, 1], [], []>} : vector<2x256xf32>, vector<256x32xf32>, vector<2x32xf32> -> vector<2x32xf32>
    %c0_3 = arith.constant 0 : index
    %c0_4 = arith.constant 0 : index
    %3 = vector.load %arg3[%c0_3, %c0_4] : memref<1x32xf32, #tpu.memory_space<vmem>>, vector<1x32xf32>
    %4 = vector.broadcast %3 : vector<1x32xf32> to vector<2x32xf32>
    %5 = arith.addf %2, %4 : vector<2x32xf32>
    %c0_5 = arith.constant 0 : index
    %c0_6 = arith.constant 0 : index
    %6 = vector.load %arg4[%c0_5, %c0_6] : memref<256x32xf32, #tpu.memory_space<vmem>>, vector<256x32xf32>
    %cst_7 = arith.constant dense<0.000000e+00> : vector<2x32xf32>
    %7 = tpu.matmul %0, %6, %cst_7 {dimension_numbers = #tpu.dot_dimension_numbers<[1], [0], [0], [1], [0, 0, 1, 1], [], []>} : vector<2x256xf32>, vector<256x32xf32>, vector<2x32xf32> -> vector<2x32xf32>
    %c0_8 = arith.constant 0 : index
    %c0_9 = arith.constant 0 : index
    %8 = vector.load %arg5[%c0_8, %c0_9] : memref<1x32xf32, #tpu.memory_space<vmem>>, vector<1x32xf32>
    %9 = vector.broadcast %8 : vector<1x32xf32> to vector<2x32xf32>
    %10 = arith.addf %7, %9 : vector<2x32xf32>
    %cst_10 = arith.constant 5.000000e-01 : f32
    %11 = vector.broadcast %cst_10 : f32 to vector<2x32xf32>
    %12 = arith.mulf %11, %10 : vector<2x32xf32>
    %13 = math.exp %12 : vector<2x32xf32>
    %c0_11 = arith.constant 0 : index
    %c0_12 = arith.constant 0 : index
    %14 = vector.load %arg6[%c0_11, %c0_12] : memref<2x32xf32, #tpu.memory_space<vmem>>, vector<2x32xf32>
    %15 = arith.mulf %13, %14 : vector<2x32xf32>
    %16 = arith.addf %5, %15 : vector<2x32xf32>
    %c0_13 = arith.constant 0 : index
    %c0_14 = arith.constant 0 : index
    %17 = vector.load %arg9[%c0_13, %c0_14] : memref<2x32xf32, #tpu.memory_space<vmem>>, vector<2x32xf32>
    tpu.vector_store %arg9[%c0_13, %c0_14], %16 {strides = array<i32>} : memref<2x32xf32, #tpu.memory_space<vmem>>, vector<2x32xf32>,
    %c0_15 = arith.constant 0 : index
    %c0_16 = arith.constant 0 : index
    %18 = vector.load %arg7[%c0_15, %c0_16] : memref<32x256xf32, #tpu.memory_space<vmem>>, vector<32x256xf32>
    %cst_17 = arith.constant dense<0.000000e+00> : vector<2x256xf32>
    %19 = tpu.matmul %16, %18, %cst_17 {dimension_numbers = #tpu.dot_dimension_numbers<[1], [0], [0], [1], [0, 0, 1, 1], [], []>} : vector<2x32xf32>, vector<32x256xf32>, vector<2x256xf32> -> vector<2x256xf32>
    %c0_18 = arith.constant 0 : index
    %c0_19 = arith.constant 0 : index
    %20 = vector.load %arg8[%c0_18, %c0_19] : memref<1x256xf32, #tpu.memory_space<vmem>>, vector<1x256xf32>
    %21 = vector.broadcast %20 : vector<1x256xf32> to vector<2x256xf32>
    %22 = arith.addf %19, %21 : vector<2x256xf32>
    %cst_20 = arith.constant 0.000000e+00 : f32
    %23 = vector.broadcast %cst_20 : f32 to vector<2x256xf32>
    %24 = arith.maximumf %22, %23 : vector<2x256xf32>
    %25 = arith.truncf %24 : vector<2x256xf32> to vector<2x256xbf16>
    %c0_21 = arith.constant 0 : index
    %c0_22 = arith.constant 0 : index
    %26 = vector.load %arg10[%c0_21, %c0_22] : memref<2x256xbf16, #tpu.memory_space<vmem>>, vector<2x256xbf16>
    tpu.vector_store %arg10[%c0_21, %c0_22], %25 {strides = array<i32>} : memref<2x256xbf16, #tpu.memory_space<vmem>>, vector<2x256xbf16>,
    return
  }
  func.func @transform_0(%arg0: i32) -> (i32, i32) {
    %c0_i32 = arith.constant 0 : i32
    %c0_i32_0 = arith.constant 0 : i32
    %c0_i32_1 = arith.constant 0 : i32
    return %c0_i32, %c0_i32_0 : i32, i32
  }
  func.func @transform_1(%arg0: i32) -> (i32, i32) {
    %c0_i32 = arith.constant 0 : i32
    %c0_i32_0 = arith.constant 0 : i32
    %c0_i32_1 = arith.constant 0 : i32
    return %c0_i32, %c0_i32_0 : i32, i32
  }
  func.func @transform_2(%arg0: i32) -> (i32, i32) {
    %c0_i32 = arith.constant 0 : i32
    %c0_i32_0 = arith.constant 0 : i32
    %c0_i32_1 = arith.constant 0 : i32
    return %c0_i32, %c0_i32_0 : i32, i32
  }
  func.func @transform_3(%arg0: i32) -> (i32, i32) {
    %c0_i32 = arith.constant 0 : i32
    %c0_i32_0 = arith.constant 0 : i32
    %c0_i32_1 = arith.constant 0 : i32
    return %c0_i32, %c0_i32_0 : i32, i32
  }
  func.func @transform_4(%arg0: i32) -> (i32, i32) {
    %c0_i32 = arith.constant 0 : i32
    %c0_i32_0 = arith.constant 0 : i32
    %c0_i32_1 = arith.constant 0 : i32
    return %c0_i32, %c0_i32_0 : i32, i32
  }
  func.func @transform_5(%arg0: i32) -> (i32, i32) {
    %c0_i32 = arith.constant 0 : i32
    %c0_i32_0 = arith.constant 0 : i32
    %c0_i32_1 = arith.constant 0 : i32
    return %c0_i32, %c0_i32_0 : i32, i32
  }
  func.func @transform_6(%arg0: i32) -> (i32, i32) {
    %c0_i32 = arith.constant 0 : i32
    %c0_i32_0 = arith.constant 0 : i32
    %c0_i32_1 = arith.constant 0 : i32
    return %c0_i32, %c0_i32_0 : i32, i32
  }
  func.func @transform_7(%arg0: i32) -> (i32, i32) {
    %c0_i32 = arith.constant 0 : i32
    %c0_i32_0 = arith.constant 0 : i32
    %c0_i32_1 = arith.constant 0 : i32
    return %c0_i32, %c0_i32_0 : i32, i32
  }
  func.func @transform_8(%arg0: i32) -> (i32, i32) {
    %c0_i32 = arith.constant 0 : i32
    %c0_i32_0 = arith.constant 0 : i32
    %c0_i32_1 = arith.constant 0 : i32
    return %c0_i32, %c0_i32_0 : i32, i32
  }
  func.func @transform_9(%arg0: i32) -> (i32, i32) {
    %c0_i32 = arith.constant 0 : i32
    %c0_i32_0 = arith.constant 0 : i32
    %c0_i32_1 = arith.constant 0 : i32
    return %c0_i32, %c0_i32_0 : i32, i32
  }
}

module attributes {stable_mosaic.version = 11 : i64} {
  func.func @_linear_ntiled_kernel(%arg0: i32, %arg1: memref<2x256xbf16, #tpu.memory_space<vmem>>, %arg2: memref<256x4096xi8, #tpu.memory_space<vmem>>, %arg3: memref<1x4096xf32, #tpu.memory_space<vmem>>, %arg4: memref<1x4096xf32, #tpu.memory_space<vmem>>, %arg5: memref<2x4096xbf16, #tpu.memory_space<vmem>>) attributes {dimension_semantics = [#tpu.dimension_semantics<parallel>], iteration_bounds = array<i64: 1>, scalar_prefetch = 0 : i64, scratch_operands = 0 : i64, tpu.core_type = #tpu.core_type<tc>, window_params = [{pipeline_mode = #tpu.pipeline_mode<synchronous>, transform_indices = @transform_0, window_bounds = array<i64: 2, 256>}, {transform_indices = @transform_1, window_bounds = array<i64: 256, 4096>}, {transform_indices = @transform_2, window_bounds = array<i64: 1, 4096>}, {transform_indices = @transform_3, window_bounds = array<i64: 1, 4096>}, {transform_indices = @transform_4, window_bounds = array<i64: 2, 4096>}]} {
    %c0 = arith.constant 0 : index
    %c0_0 = arith.constant 0 : index
    %0 = vector.load %arg1[%c0, %c0_0] : memref<2x256xbf16, #tpu.memory_space<vmem>>, vector<2x256xbf16>
    %c0_1 = arith.constant 0 : index
    %c0_2 = arith.constant 0 : index
    %1 = vector.load %arg2[%c0_1, %c0_2] : memref<256x4096xi8, #tpu.memory_space<vmem>>, vector<256x4096xi8>
    %2 = arith.sitofp %1 : vector<256x4096xi8> to vector<256x4096xbf16>
    %cst = arith.constant dense<0.000000e+00> : vector<2x4096xf32>
    %3 = tpu.matmul %0, %2, %cst {dimension_numbers = #tpu.dot_dimension_numbers<[1], [0], [0], [1], [0, 0, 1, 1], [], []>} : vector<2x256xbf16>, vector<256x4096xbf16>, vector<2x4096xf32> -> vector<2x4096xf32>
    %c0_3 = arith.constant 0 : index
    %c0_4 = arith.constant 0 : index
    %4 = vector.load %arg3[%c0_3, %c0_4] : memref<1x4096xf32, #tpu.memory_space<vmem>>, vector<1x4096xf32>
    %5 = vector.broadcast %4 : vector<1x4096xf32> to vector<2x4096xf32>
    %6 = arith.mulf %3, %5 : vector<2x4096xf32>
    %c0_5 = arith.constant 0 : index
    %c0_6 = arith.constant 0 : index
    %7 = vector.load %arg4[%c0_5, %c0_6] : memref<1x4096xf32, #tpu.memory_space<vmem>>, vector<1x4096xf32>
    %8 = vector.broadcast %7 : vector<1x4096xf32> to vector<2x4096xf32>
    %9 = arith.addf %6, %8 : vector<2x4096xf32>
    %cst_7 = arith.constant 0.000000e+00 : f32
    %10 = vector.broadcast %cst_7 : f32 to vector<2x4096xf32>
    %11 = arith.maximumf %9, %10 : vector<2x4096xf32>
    %12 = arith.truncf %11 : vector<2x4096xf32> to vector<2x4096xbf16>
    %c0_8 = arith.constant 0 : index
    %c0_9 = arith.constant 0 : index
    %13 = vector.load %arg5[%c0_8, %c0_9] : memref<2x4096xbf16, #tpu.memory_space<vmem>>, vector<2x4096xbf16>
    tpu.vector_store %arg5[%c0_8, %c0_9], %12 {strides = array<i32>} : memref<2x4096xbf16, #tpu.memory_space<vmem>>, vector<2x4096xbf16>,
    return
  }
  func.func @transform_0(%arg0: i32) -> (i32, i32) {
    %c0_i32 = arith.constant 0 : i32
    %c0_i32_0 = arith.constant 0 : i32
    %c0_i32_1 = arith.constant 0 : i32
    return %c0_i32, %c0_i32_0 : i32, i32
  }
  func.func @transform_1(%arg0: i32) -> (i32, i32) {
    %c0_i32 = arith.constant 0 : i32
    %c0_i32_0 = arith.constant 0 : i32
    return %c0_i32, %arg0 : i32, i32
  }
  func.func @transform_2(%arg0: i32) -> (i32, i32) {
    %c0_i32 = arith.constant 0 : i32
    %c0_i32_0 = arith.constant 0 : i32
    return %c0_i32, %arg0 : i32, i32
  }
  func.func @transform_3(%arg0: i32) -> (i32, i32) {
    %c0_i32 = arith.constant 0 : i32
    %c0_i32_0 = arith.constant 0 : i32
    return %c0_i32, %arg0 : i32, i32
  }
  func.func @transform_4(%arg0: i32) -> (i32, i32) {
    %c0_i32 = arith.constant 0 : i32
    %c0_i32_0 = arith.constant 0 : i32
    return %c0_i32, %arg0 : i32, i32
  }
}

module attributes {stable_mosaic.version = 11 : i64} {
  func.func @_conv_pair_kernel(%arg0: i32, %arg1: memref<1x128x32xbf16, #tpu.memory_space<vmem>>, %arg2: memref<64x128xf32, #tpu.memory_space<vmem>>, %arg3: memref<64x1xf32, #tpu.memory_space<vmem>>, %arg4: memref<3x64xf32, #tpu.memory_space<vmem>>, %arg5: memref<3x1xf32, #tpu.memory_space<vmem>>, %arg6: memref<1x3x32xf32, #tpu.memory_space<vmem>>) attributes {dimension_semantics = [#tpu.dimension_semantics<parallel>], iteration_bounds = array<i64: 2>, scalar_prefetch = 0 : i64, scratch_operands = 0 : i64, tpu.core_type = #tpu.core_type<tc>, window_params = [{transform_indices = @transform_0, window_bounds = array<i64: 1, 128, 32>}, {pipeline_mode = #tpu.pipeline_mode<synchronous>, transform_indices = @transform_1, window_bounds = array<i64: 64, 128>}, {pipeline_mode = #tpu.pipeline_mode<synchronous>, transform_indices = @transform_2, window_bounds = array<i64: 64, 1>}, {pipeline_mode = #tpu.pipeline_mode<synchronous>, transform_indices = @transform_3, window_bounds = array<i64: 3, 64>}, {pipeline_mode = #tpu.pipeline_mode<synchronous>, transform_indices = @transform_4, window_bounds = array<i64: 3, 1>}, {transform_indices = @transform_5, window_bounds = array<i64: 1, 3, 32>}]} {
    %c0 = arith.constant 0 : index
    %c0_0 = arith.constant 0 : index
    %0 = vector.load %arg2[%c0, %c0_0] : memref<64x128xf32, #tpu.memory_space<vmem>>, vector<64x128xf32>
    %c0_1 = arith.constant 0 : index
    %c0_2 = arith.constant 0 : index
    %c0_3 = arith.constant 0 : index
    %1 = vector.load %arg1[%c0_1, %c0_2, %c0_3] : memref<1x128x32xbf16, #tpu.memory_space<vmem>>, vector<1x128x32xbf16>
    %2 = vector.shape_cast %1 : vector<1x128x32xbf16> to vector<128x32xbf16>
    %cst = arith.constant dense<0.000000e+00> : vector<64x32xf32>
    %3 = tpu.matmul %0, %2, %cst {dimension_numbers = #tpu.dot_dimension_numbers<[1], [0], [0], [1], [0, 0, 1, 1], [], []>} : vector<64x128xf32>, vector<128x32xbf16>, vector<64x32xf32> -> vector<64x32xf32>
    %c0_4 = arith.constant 0 : index
    %c0_5 = arith.constant 0 : index
    %4 = vector.load %arg3[%c0_4, %c0_5] : memref<64x1xf32, #tpu.memory_space<vmem>>, vector<64x1xf32>
    %5 = vector.broadcast %4 : vector<64x1xf32> to vector<64x32xf32>
    %6 = arith.addf %3, %5 : vector<64x32xf32>
    %cst_6 = arith.constant 0.000000e+00 : f32
    %7 = vector.broadcast %cst_6 : f32 to vector<64x32xf32>
    %8 = arith.maximumf %6, %7 : vector<64x32xf32>
    %c0_7 = arith.constant 0 : index
    %c0_8 = arith.constant 0 : index
    %9 = vector.load %arg4[%c0_7, %c0_8] : memref<3x64xf32, #tpu.memory_space<vmem>>, vector<3x64xf32>
    %cst_9 = arith.constant dense<0.000000e+00> : vector<3x32xf32>
    %10 = tpu.matmul %9, %8, %cst_9 {dimension_numbers = #tpu.dot_dimension_numbers<[1], [0], [0], [1], [0, 0, 1, 1], [], []>} : vector<3x64xf32>, vector<64x32xf32>, vector<3x32xf32> -> vector<3x32xf32>
    %c0_10 = arith.constant 0 : index
    %c0_11 = arith.constant 0 : index
    %11 = vector.load %arg5[%c0_10, %c0_11] : memref<3x1xf32, #tpu.memory_space<vmem>>, vector<3x1xf32>
    %12 = vector.broadcast %11 : vector<3x1xf32> to vector<3x32xf32>
    %13 = arith.addf %10, %12 : vector<3x32xf32>
    %c0_12 = arith.constant 0 : index
    %c0_13 = arith.constant 0 : index
    %c0_14 = arith.constant 0 : index
    %14 = vector.load %arg6[%c0_12, %c0_13, %c0_14] : memref<1x3x32xf32, #tpu.memory_space<vmem>>, vector<1x3x32xf32>
    %15 = vector.shape_cast %14 : vector<1x3x32xf32> to vector<3x32xf32>
    %16 = vector.shape_cast %13 : vector<3x32xf32> to vector<1x3x32xf32>
    tpu.vector_store %arg6[%c0_12, %c0_13, %c0_14], %16 {strides = array<i32>} : memref<1x3x32xf32, #tpu.memory_space<vmem>>, vector<1x3x32xf32>,
    return
  }
  func.func @transform_0(%arg0: i32) -> (i32, i32, i32) {
    %c0_i32 = arith.constant 0 : i32
    %c0_i32_0 = arith.constant 0 : i32
    %c0_i32_1 = arith.constant 0 : i32
    return %arg0, %c0_i32, %c0_i32_0 : i32, i32, i32
  }
  func.func @transform_1(%arg0: i32) -> (i32, i32) {
    %c0_i32 = arith.constant 0 : i32
    %c0_i32_0 = arith.constant 0 : i32
    %c0_i32_1 = arith.constant 0 : i32
    return %c0_i32, %c0_i32_0 : i32, i32
  }
  func.func @transform_2(%arg0: i32) -> (i32, i32) {
    %c0_i32 = arith.constant 0 : i32
    %c0_i32_0 = arith.constant 0 : i32
    %c0_i32_1 = arith.constant 0 : i32
    return %c0_i32, %c0_i32_0 : i32, i32
  }
  func.func @transform_3(%arg0: i32) -> (i32, i32) {
    %c0_i32 = arith.constant 0 : i32
    %c0_i32_0 = arith.constant 0 : i32
    %c0_i32_1 = arith.constant 0 : i32
    return %c0_i32, %c0_i32_0 : i32, i32
  }
  func.func @transform_4(%arg0: i32) -> (i32, i32) {
    %c0_i32 = arith.constant 0 : i32
    %c0_i32_0 = arith.constant 0 : i32
    %c0_i32_1 = arith.constant 0 : i32
    return %c0_i32, %c0_i32_0 : i32, i32
  }
  func.func @transform_5(%arg0: i32) -> (i32, i32, i32) {
    %c0_i32 = arith.constant 0 : i32
    %c0_i32_0 = arith.constant 0 : i32
    %c0_i32_1 = arith.constant 0 : i32
    return %arg0, %c0_i32, %c0_i32_0 : i32, i32, i32
  }
}

</mosaic_0001>

<llo_original>
// kernel: vae_forward.5
$region0: #{vae_forward.5}
  #allocation0 [shape = 'u32[]', space=smem, size = 0x4, offset = 0x4, fixed_abs, tag = 'smem constant byte address 0x4 - core index']
  #allocation1 [shape = 'u32[144,128]{1,0:T(1,128)}', space=vmem, size = 0x12000, scoped, tag = 'internal scratch']
  %s0 = inlined_call_operand.vmem [shape: f32[2,3,32], index: 0, kind: input, shape index: {}]
  %s1 = inlined_call_operand.vmem [shape: f32[64,3], index: 1, kind: input, shape index: {}]
  %s2 = inlined_call_operand.vmem [shape: f32[64,1], index: 2, kind: input, shape index: {}]
  %s3 = inlined_call_operand.vmem [shape: f32[128,64], index: 3, kind: input, shape index: {}]
  %s4 = inlined_call_operand.vmem [shape: f32[128,1], index: 4, kind: input, shape index: {}]
  %s5 = inlined_call_operand.vmem [shape: bf16[2,128,32], index: 5, kind: output, shape index: {}]
  %s6 = sld [smem:[#allocation0]]
  $region53: #{vae_forward.5} parent=0
    _
  %s8 = ssub.s32 1, %s6
  %s9 = scalar_select 0, %s8, %s6
  loop: start=0, step=1, limit=4
  $region2: #{vae_forward.5} parent=0 // loop_pre_header
    _
  $region3: #{vae_forward.5} parent=0 // loop_header
    %s11 = sphi 0, %s15
    %p12 = scmp.ge.s32.totalorder %s11, 4
    %s21 = sphi 0, %s23
    %s24 = sphi 0, %s21
    %s25 = sphi 0, %s24
    %s41 = sphi 0, %s25
    %s45 = sphi 0, %s45
    %s47 = sphi 0, %s45
    %s48 = sphi 0, %s47
    %s62 = sphi 0, %s48
    %s66 = sphi 0, %s66
    %s68 = sphi 0, %s66
    %s69 = sphi 0, %s68
    %s83 = sphi 0, %s69
    %s87 = sphi 0, %s87
    %s89 = sphi 0, %s87
    %s90 = sphi 0, %s89
    %s104 = sphi 0, %s90
    %s108 = sphi 0, %s108
    %s110 = sphi 0, %s108
    %s111 = sphi 0, %s110
    %s125 = sphi 0, %s111
    %s131 = sphi 0, %s133
    %s134 = sphi 0, %s131
    %s135 = sphi 0, %s134
    %s151 = sphi 0, %s135
  $region4: #{vae_forward.5} parent=0 // loop_header_branch
    %14 = sbr.rel (%p12) target = $region8
  $region5: #{vae_forward.5} parent=0 // loop_body
    %s16 = ssub.s32 %s11, 1
    %s17 = ssub.s32 %s11, 2
    %s18 = sadd.s32 %s11, 1
    %s19 = ssub.s32 %s11, %s18
    %p20 = scmp.eq.s32.totalorder %s19, 0
    %s22 = sadd.s32 %s21, 1
    %s23 = scalar_select %p20, %s21, %s22
    %p26 = pneg %p20
    %p27 = scmp.eq.s32.totalorder %s11, 1
    %p28 = por %p26, %p27
    %p29 = scmp.ne.s32.totalorder %s21, %s24
    %p30 = scmp.eq.s32.totalorder %s11, 0
    %p31 = por %p29, %p30
    %p32 = scmp.ne.s32.totalorder %s21, %s24
    %p33 = scmp.eq.s32.totalorder %s16, 1
    %p34 = por %p32, %p33
    %p35 = scmp.ne.s32.totalorder %s24, %s25
    %p36 = scmp.eq.s32.totalorder %s16, 0
    %p37 = por %p35, %p36
    %p38 = scmp.ne.s32.totalorder %s24, %s25
    %p39 = scmp.eq.s32.totalorder %s17, 1
    %p40 = por %p38, %p39
    %p42 = scmp.ne.s32.totalorder %s25, %s41
    %p43 = scmp.eq.s32.totalorder %s17, 0
    %p44 = por %p42, %p43
    %s46 = sadd.s32 %s45, 1
    %p49 = scmp.eq.s32.totalorder %s11, 1
    %p50 = scmp.ne.s32.totalorder %s45, %s47
    %p51 = scmp.eq.s32.totalorder %s11, 0
    %p52 = por %p50, %p51
    %p53 = scmp.ne.s32.totalorder %s45, %s47
    %p54 = scmp.eq.s32.totalorder %s16, 1
    %p55 = por %p53, %p54
    %p56 = scmp.ne.s32.totalorder %s47, %s48
    %p57 = scmp.eq.s32.totalorder %s16, 0
    %p58 = por %p56, %p57
    %p59 = scmp.ne.s32.totalorder %s47, %s48
    %p60 = scmp.eq.s32.totalorder %s17, 1
    %p61 = por %p59, %p60
    %p63 = scmp.ne.s32.totalorder %s48, %s62
    %p64 = scmp.eq.s32.totalorder %s17, 0
    %p65 = por %p63, %p64
    %s67 = sadd.s32 %s66, 1
    %p70 = scmp.eq.s32.totalorder %s11, 1
    %p71 = scmp.ne.s32.totalorder %s66, %s68
    %p72 = scmp.eq.s32.totalorder %s11, 0
    %p73 = por %p71, %p72
    %p74 = scmp.ne.s32.totalorder %s66, %s68
    %p75 = scmp.eq.s32.totalorder %s16, 1
    %p76 = por %p74, %p75
    %p77 = scmp.ne.s32.totalorder %s68, %s69
    %p78 = scmp.eq.s32.totalorder %s16, 0
    %p79 = por %p77, %p78
    %p80 = scmp.ne.s32.totalorder %s68, %s69
    %p81 = scmp.eq.s32.totalorder %s17, 1
    %p82 = por %p80, %p81
    %p84 = scmp.ne.s32.totalorder %s69, %s83
    %p85 = scmp.eq.s32.totalorder %s17, 0
    %p86 = por %p84, %p85
    %s88 = sadd.s32 %s87, 1
    %p91 = scmp.eq.s32.totalorder %s11, 1
    %p92 = scmp.ne.s32.totalorder %s87, %s89
    %p93 = scmp.eq.s32.totalorder %s11, 0
    %p94 = por %p92, %p93
    %p95 = scmp.ne.s32.totalorder %s87, %s89
    %p96 = scmp.eq.s32.totalorder %s16, 1
    %p97 = por %p95, %p96
    %p98 = scmp.ne.s32.totalorder %s89, %s90
    %p99 = scmp.eq.s32.totalorder %s16, 0
    %p100 = por %p98, %p99
    %p101 = scmp.ne.s32.totalorder %s89, %s90
    %p102 = scmp.eq.s32.totalorder %s17, 1
    %p103 = por %p101, %p102
    %p105 = scmp.ne.s32.totalorder %s90, %s104
    %p106 = scmp.eq.s32.totalorder %s17, 0
    %p107 = por %p105, %p106
    %s109 = sadd.s32 %s108, 1
    %p112 = scmp.eq.s32.totalorder %s11, 1
    %p113 = scmp.ne.s32.totalorder %s108, %s110
    %p114 = scmp.eq.s32.totalorder %s11, 0
    %p115 = por %p113, %p114
    %p116 = scmp.ne.s32.totalorder %s108, %s110
    %p117 = scmp.eq.s32.totalorder %s16, 1
    %p118 = por %p116, %p117
    %p119 = scmp.ne.s32.totalorder %s110, %s111
    %p120 = scmp.eq.s32.totalorder %s16, 0
    %p121 = por %p119, %p120
    %p122 = scmp.ne.s32.totalorder %s110, %s111
    %p123 = scmp.eq.s32.totalorder %s17, 1
    %p124 = por %p122, %p123
    %p126 = scmp.ne.s32.totalorder %s111, %s125
    %p127 = scmp.eq.s32.totalorder %s17, 0
    %p128 = por %p126, %p127
    %s129 = ssub.s32 %s11, %s18
    %p130 = scmp.eq.s32.totalorder %s129, 0
    %s132 = sadd.s32 %s131, 1
    %s133 = scalar_select %p130, %s131, %s132
    %p136 = pneg %p130
    %p137 = scmp.eq.s32.totalorder %s11, 1
    %p138 = por %p136, %p137
    %p139 = scmp.ne.s32.totalorder %s131, %s134
    %p140 = scmp.eq.s32.totalorder %s11, 0
    %p141 = por %p139, %p140
    %p142 = scmp.ne.s32.totalorder %s131, %s134
    %p143 = scmp.eq.s32.totalorder %s16, 1
    %p144 = por %p142, %p143
    %p145 = scmp.ne.s32.totalorder %s134, %s135
    %p146 = scmp.eq.s32.totalorder %s16, 0
    %p147 = por %p145, %p146
    %p148 = scmp.ne.s32.totalorder %s134, %s135
    %p149 = scmp.eq.s32.totalorder %s17, 1
    %p150 = por %p148, %p149
    %p152 = scmp.ne.s32.totalorder %s135, %s151
    %p153 = scmp.eq.s32.totalorder %s17, 0
    %p154 = por %p152, %p153
    %p155 = scmp.le.s32.totalorder 1, %s11
    %p156 = scmp.lt.s32.totalorder %s11, 3
    %p157 = pnand %p155, %p156
    %p158 = pneg %p157
    // Predicated region
    $region9: #{vae_forward.5} parent=5 // pred_check
      _
    $region10: #{vae_forward.5} parent=5 // pred_check_branch
      %160 = sbr.rel (%p157) target = $region12
    $region11: #{vae_forward.5} parent=5 // pred_region
      %s161 = ssub.s32 %s11, 1
      // Predicated region
      $region13: #{vae_forward.5} parent=11 // pred_check
        %p162 = pneg %p58
      $region14: #{vae_forward.5} parent=11 // pred_check_branch
        %164 = sbr.rel (%p162) target = $region16
      $region15: #{vae_forward.5} parent=11 // pred_region
        _
      $region16: #{vae_forward.5} parent=11 // pred_fallthru
        _
      // Predicated region
      $region17: #{vae_forward.5} parent=11 // pred_check
        %p165 = pneg %p79
      $region18: #{vae_forward.5} parent=11 // pred_check_branch
        %167 = sbr.rel (%p165) target = $region20
      $region19: #{vae_forward.5} parent=11 // pred_region
        _
      $region20: #{vae_forward.5} parent=11 // pred_fallthru
        _
      // Predicated region
      $region21: #{vae_forward.5} parent=11 // pred_check
        %p168 = pneg %p100
      $region22: #{vae_forward.5} parent=11 // pred_check_branch
        %170 = sbr.rel (%p168) target = $region24
      $region23: #{vae_forward.5} parent=11 // pred_region
        _
      $region24: #{vae_forward.5} parent=11 // pred_fallthru
        _
      // Predicated region
      $region25: #{vae_forward.5} parent=11 // pred_check
        %p171 = pneg %p121
      $region26: #{vae_forward.5} parent=11 // pred_check_branch
        %173 = sbr.rel (%p171) target = $region28
      $region27: #{vae_forward.5} parent=11 // pred_region
        _
      $region28: #{vae_forward.5} parent=11 // pred_fallthru
        _
    $region12: #{vae_forward.5} parent=5 // pred_fallthru
      _
    %p174 = scmp.lt.s32.totalorder %s11, 2
    // Predicated region
    $region29: #{vae_forward.5} parent=5 // pred_check
      %p175 = pneg %p174
    $region30: #{vae_forward.5} parent=5 // pred_check_branch
      %177 = sbr.rel (%p175) target = $region32
    $region31: #{vae_forward.5} parent=5 // pred_region
      // Predicated region
      $region33: #{vae_forward.5} parent=31 // pred_check
        %p178 = pneg %p31
      $region34: #{vae_forward.5} parent=31 // pred_check_branch
        %180 = sbr.rel (%p178) target = $region36
      $region35: #{vae_forward.5} parent=31 // pred_region
        %p181 = scmp.lt.s32.totalorder %s11, 1
        %s182 = scalar_select %p181, %s11, 1
        %s183 = smul.addr %s182, 4
        %s184 = scalar_lea.vmem %s0, %s183
      $region36: #{vae_forward.5} parent=31 // pred_fallthru
        _
    $region32: #{vae_forward.5} parent=5 // pred_fallthru
      _
    %p185 = scmp.le.s32.totalorder 1, %s11
    %p186 = scmp.lt.s32.totalorder %s11, 3
    %p187 = pnand %p185, %p186
    %p188 = pneg %p187
    // Predicated region
    $region37: #{vae_forward.5} parent=5 // pred_check
      _
    $region38: #{vae_forward.5} parent=5 // pred_check_branch
      %190 = sbr.rel (%p187) target = $region40
    $region39: #{vae_forward.5} parent=5 // pred_region
      %s191 = ssub.s32 %s11, 1
      %p192 = scmp.lt.s32.totalorder %s16, 1
      %s193 = scalar_select %p192, %s16, 1
      %s194 = smul.addr %s193, 4
      %s195 = scalar_lea.vmem %s0, %s194
      %p196 = pneg %p37
      %p197 = pneg %p34
      %p198 = pneg %p58
      %p199 = pneg %p55
      %p200 = pneg %p79
      %p201 = pneg %p76
      %p202 = pneg %p100
      %p203 = pneg %p97
      %p204 = pneg %p121
      %p205 = pneg %p118
      %p206 = pneg %p147
      %p207 = pneg %p144
      %p208 = scmp.lt.s32.totalorder %s16, 1
      %s209 = scalar_select %p208, %s16, 1
      %s210 = smul.addr %s209, 16
      %s211 = smul.addr %s210, 4
      %s212 = scalar_lea.vmem %s5, %s211
      %p213 = scmp.lt.s32.totalorder %s16, 1
      %s214 = scalar_select %p213, %s16, 1
      %s215 = smul.addr %s214, 4
      %s216 = scalar_lea.vmem %s0, %s215
      %p217 = scmp.lt.s32.totalorder %s16, 1
      %s218 = scalar_select %p217, %s16, 1
      %s219 = smul.addr %s218, 16
      %s220 = smul.addr %s219, 4
      %s221 = scalar_lea.vmem %s5, %s220
      %v222 = vld [vmem:[%s1] sm:$0xff]
      %v223 = vld [vmem:[%s1 + $0x8] sm:$0xff]
      %v224 = vld [vmem:[%s1 + $0x10] sm:$0xff]
      %v225 = vld [vmem:[%s1 + $0x18] sm:$0xff]
      %v226 = vld [vmem:[%s1 + $0x20] sm:$0xff]
      %v227 = vld [vmem:[%s1 + $0x28] sm:$0xff]
      %v228 = vld [vmem:[%s1 + $0x30] sm:$0xff]
      %v229 = vld [vmem:[%s1 + $0x38] sm:$0xff]
      %v230 = vld [vmem:[%s216] sm:$0x7]
      %v231 = vld [vmem:[%s2] sm:$0xff]
      %v232 = vld [vmem:[%s2 + $0x8] sm:$0xff]
      %v233 = vld [vmem:[%s2 + $0x10] sm:$0xff]
      %v234 = vld [vmem:[%s2 + $0x18] sm:$0xff]
      %v235 = vld [vmem:[%s2 + $0x20] sm:$0xff]
      %v236 = vld [vmem:[%s2 + $0x28] sm:$0xff]
      %v237 = vld [vmem:[%s2 + $0x30] sm:$0xff]
      %v238 = vld [vmem:[%s2 + $0x38] sm:$0xff]
      %240 = vset.pattern.permute.xlu0 0
      %241 = vperm.xlu0 %240, %v231
      %v242 = vpop.permute.xlu0 %241
      %245 = vset.pattern.permute.xlu0 0
      %246 = vperm.xlu0 %245, %v232
      %v247 = vpop.permute.xlu0 %246
      %250 = vset.pattern.permute.xlu0 0
      %251 = vperm.xlu0 %250, %v233
      %v252 = vpop.permute.xlu0 %251
      %255 = vset.pattern.permute.xlu0 0
      %256 = vperm.xlu0 %255, %v234
      %v257 = vpop.permute.xlu0 %256
      %260 = vset.pattern.permute.xlu0 0
      %261 = vperm.xlu0 %260, %v235
      %v262 = vpop.permute.xlu0 %261
      %265 = vset.pattern.permute.xlu0 0
      %266 = vperm.xlu0 %265, %v236
      %v267 = vpop.permute.xlu0 %266
      %270 = vset.pattern.permute.xlu0 0
      %271 = vperm.xlu0 %270, %v237
      %v272 = vpop.permute.xlu0 %271
      %275 = vset.pattern.permute.xlu0 0
      %276 = vperm.xlu0 %275, %v238
      %v277 = vpop.permute.xlu0 %276
      %vm279 = vcmask 23552
      %v281 = vsel %vm279, %v222, 0
      %v284 = vsel %vm279, %v223, 0
      %v287 = vsel %vm279, %v224, 0
      %v290 = vsel %vm279, %v225, 0
      %v293 = vsel %vm279, %v226, 0
      %v296 = vsel %vm279, %v227, 0
      %v299 = vsel %vm279, %v228, 0
      %v302 = vsel %vm279, %v229, 0
      %vm304 = vcmask 1042432
      %v306 = vsel %vm304, %v230, 0
      %308 = vmatprep.subr.mxu0 0.0
      %309 = vmatpush1.msra.mxu0 %v306
      %310 = vmatprep.subr.mxu0 0.0
      %311 = vmatpush1.msra.mxu0 0.0
      %312 = vmatprep.subr.mxu0 0.0
      %313 = vmatpush1.msra.mxu0 0.0
      %314 = vmatprep.subr.mxu0 0.0
      %315 = vmatpush1.msra.mxu0 0.0
      %316 = vmatprep.subr.mxu0 0.0
      %317 = vmatpush1.msra.mxu0 0.0
      %318 = vmatprep.subr.mxu0 0.0
      %319 = vmatpush1.msra.mxu0 0.0
      %320 = vmatprep.subr.mxu0 0.0
      %321 = vmatpush1.msra.mxu0 0.0
      %322 = vmatprep.subr.mxu0 0.0
      %323 = vmatpush1.msra.mxu0 0.0
      %324 = vmatprep.subr.mxu0 0.0
      %325 = vmatpush1.msra.mxu0 0.0
      %326 = vmatprep.subr.mxu0 0.0
      %327 = vmatpush1.msra.mxu0 0.0
      %328 = vmatprep.subr.mxu0 0.0
      %329 = vmatpush1.msra.mxu0 0.0
      %330 = vmatprep.subr.mxu0 0.0
      %331 = vmatpush1.msra.mxu0 0.0
      %332 = vmatprep.subr.mxu0 0.0
      %333 = vmatpush1.msra.mxu0 0.0
      %334 = vmatprep.subr.mxu0 0.0
      %335 = vmatpush1.msra.mxu0 0.0
      %336 = vmatprep.subr.mxu0 0.0
      %337 = vmatpush1.msra.mxu0 0.0
      %338 = vmatprep.subr.mxu0 0.0
      %339 = vmatpush1.msra.mxu0 0.0
      %340 = vmatprep.subr.mxu0 0.0
      %341 = vmatpush1.msra.mxu0 0.0
      %342 = vmatprep.subr.mxu0 0.0
      %343 = vmatpush1.msra.mxu0 0.0
      %344 = vmatprep.subr.mxu0 0.0
      %345 = vmatpush1.msra.mxu0 0.0
      %346 = vmatprep.subr.mxu0 0.0
      %347 = vmatpush1.msra.mxu0 0.0
      %348 = vmatprep.subr.mxu0 0.0
      %349 = vmatpush1.msra.mxu0 0.0
      %350 = vmatprep.subr.mxu0 0.0
      %351 = vmatpush1.msra.mxu0 0.0
      %352 = vmatprep.subr.mxu0 0.0
      %353 = vmatpush1.msra.mxu0 0.0
      %354 = vmatprep.subr.mxu0 0.0
      %355 = vmatpush1.msra.mxu0 0.0
      %356 = vmatprep.subr.mxu0 0.0
      %357 = vmatpush1.msra.mxu0 0.0
      %358 = vmatprep.subr.mxu0 0.0
      %359 = vmatpush1.msra.mxu0 0.0
      %360 = vmatprep.subr.mxu0 0.0
      %361 = vmatpush1.msra.mxu0 0.0
      %362 = vmatprep.subr.mxu0 0.0
      %363 = vmatpush1.msra.mxu0 0.0
      %364 = vmatprep.subr.mxu0 0.0
      %365 = vmatpush1.msra.mxu0 0.0
      %366 = vmatprep.subr.mxu0 0.0
      %367 = vmatpush1.msra.mxu0 0.0
      %368 = vmatprep.subr.mxu0 0.0
      %369 = vmatpush1.msra.mxu0 0.0
      %370 = vmatprep.subr.mxu0 0.0
      %371 = vmatpush1.msra.mxu0 0.0
      %372 = vmatprep.mubr.f32.mxu0 0.0
      %373 = vmatmul.mubr.f32.gmra.mrb[0].mxu0 %v281
      %v374 = vpop.f32.mrb[0].mxu0
      %v375 = vadd.f32 %v242, %v374
      %v376 = vpop.f32.mrb[0].mxu0
      %377 = vmatprep.mubr.f32.mxu0 0.0
      %378 = vmatmul.mubr.f32.gmra.mrb[0].mxu0 %v284
      %v379 = vpop.f32.mrb[0].mxu0
      %v380 = vadd.f32 %v247, %v379
      %v381 = vpop.f32.mrb[0].mxu0
      %382 = vmatprep.mubr.f32.mxu0 0.0
      %383 = vmatmul.mubr.f32.gmra.mrb[0].mxu0 %v287
      %v384 = vpop.f32.mrb[0].mxu0
      %v385 = vadd.f32 %v252, %v384
      %v386 = vpop.f32.mrb[0].mxu0
      %387 = vmatprep.mubr.f32.mxu0 0.0
      %388 = vmatmul.mubr.f32.gmra.mrb[0].mxu0 %v290
      %v389 = vpop.f32.mrb[0].mxu0
      %v390 = vadd.f32 %v257, %v389
      %v391 = vpop.f32.mrb[0].mxu0
      %392 = vmatprep.mubr.f32.mxu0 0.0
      %393 = vmatmul.mubr.f32.gmra.mrb[0].mxu0 %v293
      %v394 = vpop.f32.mrb[0].mxu0
      %v395 = vadd.f32 %v262, %v394
      %v396 = vpop.f32.mrb[0].mxu0
      %397 = vmatprep.mubr.f32.mxu0 0.0
      %398 = vmatmul.mubr.f32.gmra.mrb[0].mxu0 %v296
      %v399 = vpop.f32.mrb[0].mxu0
      %v400 = vadd.f32 %v267, %v399
      %v401 = vpop.f32.mrb[0].mxu0
      %402 = vmatprep.mubr.f32.mxu0 0.0
      %403 = vmatmul.mubr.f32.gmra.mrb[0].mxu0 %v299
      %v404 = vpop.f32.mrb[0].mxu0
      %v405 = vadd.f32 %v272, %v404
      %v406 = vpop.f32.mrb[0].mxu0
      %407 = vmatprep.mubr.f32.mxu0 0.0
      %408 = vmatmul.mubr.f32.gmra.mrb[0].mxu0 %v302
      %v409 = vpop.f32.mrb[0].mxu0
      %v410 = vadd.f32 %v277, %v409
      %v411 = vpop.f32.mrb[0].mxu0
      %412 = vdwg.mxu0
      %v413 = vmax.f32 %v375, 0.0
      %v414 = vmax.f32 %v380, 0.0
      %v415 = vmax.f32 %v385, 0.0
      %v416 = vmax.f32 %v390, 0.0
      %v417 = vmax.f32 %v395, 0.0
      %v418 = vmax.f32 %v400, 0.0
      %v419 = vmax.f32 %v405, 0.0
      %v420 = vmax.f32 %v410, 0.0
      %v421 = vld [vmem:[%s3] sm:$0xff]
      %v422 = vld [vmem:[%s3 + $0x8] sm:$0xff]
      %v423 = vld [vmem:[%s3 + $0x10] sm:$0xff]
      %v424 = vld [vmem:[%s3 + $0x18] sm:$0xff]
      %v425 = vld [vmem:[%s3 + $0x20] sm:$0xff]
      %v426 = vld [vmem:[%s3 + $0x28] sm:$0xff]
      %v427 = vld [vmem:[%s3 + $0x30] sm:$0xff]
      %v428 = vld [vmem:[%s3 + $0x38] sm:$0xff]
      %v429 = vld [vmem:[%s3 + $0x40] sm:$0xff]
      %v430 = vld [vmem:[%s3 + $0x48] sm:$0xff]
      %v431 = vld [vmem:[%s3 + $0x50] sm:$0xff]
      %v432 = vld [vmem:[%s3 + $0x58] sm:$0xff]
      %v433 = vld [vmem:[%s3 + $0x60] sm:$0xff]
      %v434 = vld [vmem:[%s3 + $0x68] sm:$0xff]
      %v435 = vld [vmem:[%s3 + $0x70] sm:$0xff]
      %v436 = vld [vmem:[%s3 + $0x78] sm:$0xff]
      %v437 = vld [vmem:[%s4] sm:$0xff]
      %v438 = vld [vmem:[%s4 + $0x8] sm:$0xff]
      %v439 = vld [vmem:[%s4 + $0x10] sm:$0xff]
      %v440 = vld [vmem:[%s4 + $0x18] sm:$0xff]
      %v441 = vld [vmem:[%s4 + $0x20] sm:$0xff]
      %v442 = vld [vmem:[%s4 + $0x28] sm:$0xff]
      %v443 = vld [vmem:[%s4 + $0x30] sm:$0xff]
      %v444 = vld [vmem:[%s4 + $0x38] sm:$0xff]
      %v445 = vld [vmem:[%s4 + $0x40] sm:$0xff]
      %v446 = vld [vmem:[%s4 + $0x48] sm:$0xff]
      %v447 = vld [vmem:[%s4 + $0x50] sm:$0xff]
      %v448 = vld [vmem:[%s4 + $0x58] sm:$0xff]
      %v449 = vld [vmem:[%s4 + $0x60] sm:$0xff]
      %v450 = vld [vmem:[%s4 + $0x68] sm:$0xff]
      %v451 = vld [vmem:[%s4 + $0x70] sm:$0xff]
      %v452 = vld [vmem:[%s4 + $0x78] sm:$0xff]
      %454 = vset.pattern.permute.xlu0 0
      %455 = vperm.xlu0 %454, %v437
      %v456 = vpop.permute.xlu0 %455
      %459 = vset.pattern.permute.xlu0 0
      %460 = vperm.xlu0 %459, %v438
      %v461 = vpop.permute.xlu0 %460
      %464 = vset.pattern.permute.xlu0 0
      %465 = vperm.xlu0 %464, %v439
      %v466 = vpop.permute.xlu0 %465
      %469 = vset.pattern.permute.xlu0 0
      %470 = vperm.xlu0 %469, %v440
      %v471 = vpop.permute.xlu0 %470
      %474 = vset.pattern.permute.xlu0 0
      %475 = vperm.xlu0 %474, %v441
      %v476 = vpop.permute.xlu0 %475
      %479 = vset.pattern.permute.xlu0 0
      %480 = vperm.xlu0 %479, %v442
      %v481 = vpop.permute.xlu0 %480
      %484 = vset.pattern.permute.xlu0 0
      %485 = vperm.xlu0 %484, %v443
      %v486 = vpop.permute.xlu0 %485
      %489 = vset.pattern.permute.xlu0 0
      %490 = vperm.xlu0 %489, %v444
      %v491 = vpop.permute.xlu0 %490
      %494 = vset.pattern.permute.xlu0 0
      %495 = vperm.xlu0 %494, %v445
      %v496 = vpop.permute.xlu0 %495
      %499 = vset.pattern.permute.xlu0 0
      %500 = vperm.xlu0 %499, %v446
      %v501 = vpop.permute.xlu0 %500
      %504 = vset.pattern.permute.xlu0 0
      %505 = vperm.xlu0 %504, %v447
      %v506 = vpop.permute.xlu0 %505
      %509 = vset.pattern.permute.xlu0 0
      %510 = vperm.xlu0 %509, %v448
      %v511 = vpop.permute.xlu0 %510
      %514 = vset.pattern.permute.xlu0 0
      %515 = vperm.xlu0 %514, %v449
      %v516 = vpop.permute.xlu0 %515
      %519 = vset.pattern.permute.xlu0 0
      %520 = vperm.xlu0 %519, %v450
      %v521 = vpop.permute.xlu0 %520
      %524 = vset.pattern.permute.xlu0 0
      %525 = vperm.xlu0 %524, %v451
      %v526 = vpop.permute.xlu0 %525
      %529 = vset.pattern.permute.xlu0 0
      %530 = vperm.xlu0 %529, %v452
      %v531 = vpop.permute.xlu0 %530
      %vm533 = vcmask 523264
      %v535 = vsel %vm533, %v421, 0
      %v538 = vsel %vm533, %v422, 0
      %v541 = vsel %vm533, %v423, 0
      %v544 = vsel %vm533, %v424, 0
      %v547 = vsel %vm533, %v425, 0
      %v550 = vsel %vm533, %v426, 0
      %v553 = vsel %vm533, %v427, 0
      %v556 = vsel %vm533, %v428, 0
      %v559 = vsel %vm533, %v429, 0
      %v562 = vsel %vm533, %v430, 0
      %v565 = vsel %vm533, %v431, 0
      %v568 = vsel %vm533, %v432, 0
      %v571 = vsel %vm533, %v433, 0
      %v574 = vsel %vm533, %v434, 0
      %v577 = vsel %vm533, %v435, 0
      %v580 = vsel %vm533, %v436, 0
      %582 = vmatprep.subr.mxu0 0.0
      %583 = vmatpush1.msra.mxu0 %v413
      %584 = vmatprep.subr.mxu0 0.0
      %585 = vmatpush1.msra.mxu0 %v414
      %586 = vmatprep.subr.mxu0 0.0
      %587 = vmatpush1.msra.mxu0 %v415
      %588 = vmatprep.subr.mxu0 0.0
      %589 = vmatpush1.msra.mxu0 %v416
      %590 = vmatprep.subr.mxu0 0.0
      %591 = vmatpush1.msra.mxu0 %v417
      %592 = vmatprep.subr.mxu0 0.0
      %593 = vmatpush1.msra.mxu0 %v418
      %594 = vmatprep.subr.mxu0 0.0
      %595 = vmatpush1.msra.mxu0 %v419
      %596 = vmatprep.subr.mxu0 0.0
      %597 = vmatpush1.msra.mxu0 %v420
      %598 = vmatprep.subr.mxu0 0.0
      %599 = vmatpush1.msra.mxu0 0.0
      %600 = vmatprep.subr.mxu0 0.0
      %601 = vmatpush1.msra.mxu0 0.0
      %602 = vmatprep.subr.mxu0 0.0
      %603 = vmatpush1.msra.mxu0 0.0
      %604 = vmatprep.subr.mxu0 0.0
      %605 = vmatpush1.msra.mxu0 0.0
      %606 = vmatprep.subr.mxu0 0.0
      %607 = vmatpush1.msra.mxu0 0.0
      %608 = vmatprep.subr.mxu0 0.0
      %609 = vmatpush1.msra.mxu0 0.0
      %610 = vmatprep.subr.mxu0 0.0
      %611 = vmatpush1.msra.mxu0 0.0
      %612 = vmatprep.subr.mxu0 0.0
      %613 = vmatpush1.msra.mxu0 0.0
      %614 = vmatprep.subr.mxu0 0.0
      %615 = vmatpush1.msra.mxu0 0.0
      %616 = vmatprep.subr.mxu0 0.0
      %617 = vmatpush1.msra.mxu0 0.0
      %618 = vmatprep.subr.mxu0 0.0
      %619 = vmatpush1.msra.mxu0 0.0
      %620 = vmatprep.subr.mxu0 0.0
      %621 = vmatpush1.msra.mxu0 0.0
      %622 = vmatprep.subr.mxu0 0.0
      %623 = vmatpush1.msra.mxu0 0.0
      %624 = vmatprep.subr.mxu0 0.0
      %625 = vmatpush1.msra.mxu0 0.0
      %626 = vmatprep.subr.mxu0 0.0
      %627 = vmatpush1.msra.mxu0 0.0
      %628 = vmatprep.subr.mxu0 0.0
      %629 = vmatpush1.msra.mxu0 0.0
      %630 = vmatprep.subr.mxu0 0.0
      %631 = vmatpush1.msra.mxu0 0.0
      %632 = vmatprep.subr.mxu0 0.0
      %633 = vmatpush1.msra.mxu0 0.0
      %634 = vmatprep.subr.mxu0 0.0
      %635 = vmatpush1.msra.mxu0 0.0
      %636 = vmatprep.subr.mxu0 0.0
      %637 = vmatpush1.msra.mxu0 0.0
      %638 = vmatprep.subr.mxu0 0.0
      %639 = vmatpush1.msra.mxu0 0.0
      %640 = vmatprep.subr.mxu0 0.0
      %641 = vmatpush1.msra.mxu0 0.0
      %642 = vmatprep.subr.mxu0 0.0
      %643 = vmatpush1.msra.mxu0 0.0
      %644 = vmatprep.subr.mxu0 0.0
      %645 = vmatpush1.msra.mxu0 0.0
      %646 = vmatprep.mubr.f32.mxu0 0.0
      %647 = vmatmul.mubr.f32.gmra.mrb[0].mxu0 %v535
      %v648 = vpop.f32.mrb[0].mxu0
      %v649 = vadd.f32 %v456, %v648
      %v650 = vpop.f32.mrb[0].mxu0
      %651 = vmatprep.mubr.f32.mxu0 0.0
      %652 = vmatmul.mubr.f32.gmra.mrb[0].mxu0 %v538
      %v653 = vpop.f32.mrb[0].mxu0
      %v654 = vadd.f32 %v461, %v653
      %v655 = vpop.f32.mrb[0].mxu0
      %656 = vmatprep.mubr.f32.mxu0 0.0
      %657 = vmatmul.mubr.f32.gmra.mrb[0].mxu0 %v541
      %v658 = vpop.f32.mrb[0].mxu0
      %v659 = vadd.f32 %v466, %v658
      %v660 = vpop.f32.mrb[0].mxu0
      %661 = vmatprep.mubr.f32.mxu0 0.0
      %662 = vmatmul.mubr.f32.gmra.mrb[0].mxu0 %v544
      %v663 = vpop.f32.mrb[0].mxu0
      %v664 = vadd.f32 %v471, %v663
      %v665 = vpop.f32.mrb[0].mxu0
      %666 = vmatprep.mubr.f32.mxu0 0.0
      %667 = vmatmul.mubr.f32.gmra.mrb[0].mxu0 %v547
      %v668 = vpop.f32.mrb[0].mxu0
      %v669 = vadd.f32 %v476, %v668
      %v670 = vpop.f32.mrb[0].mxu0
      %671 = vmatprep.mubr.f32.mxu0 0.0
      %672 = vmatmul.mubr.f32.gmra.mrb[0].mxu0 %v550
      %v673 = vpop.f32.mrb[0].mxu0
      %v674 = vadd.f32 %v481, %v673
      %v675 = vpop.f32.mrb[0].mxu0
      %676 = vmatprep.mubr.f32.mxu0 0.0
      %677 = vmatmul.mubr.f32.gmra.mrb[0].mxu0 %v553
      %v678 = vpop.f32.mrb[0].mxu0
      %v679 = vadd.f32 %v486, %v678
      %v680 = vpop.f32.mrb[0].mxu0
      %681 = vmatprep.mubr.f32.mxu0 0.0
      %682 = vmatmul.mubr.f32.gmra.mrb[0].mxu0 %v556
      %v683 = vpop.f32.mrb[0].mxu0
      %v684 = vadd.f32 %v491, %v683
      %v685 = vpop.f32.mrb[0].mxu0
      %686 = vmatprep.mubr.f32.mxu0 0.0
      %687 = vmatmul.mubr.f32.gmra.mrb[0].mxu0 %v559
      %v688 = vpop.f32.mrb[0].mxu0
      %v689 = vadd.f32 %v496, %v688
      %v690 = vpop.f32.mrb[0].mxu0
      %691 = vmatprep.mubr.f32.mxu0 0.0
      %692 = vmatmul.mubr.f32.gmra.mrb[0].mxu0 %v562
      %v693 = vpop.f32.mrb[0].mxu0
      %v694 = vadd.f32 %v501, %v693
      %v695 = vpop.f32.mrb[0].mxu0
      %696 = vmatprep.mubr.f32.mxu0 0.0
      %697 = vmatmul.mubr.f32.gmra.mrb[0].mxu0 %v565
      %v698 = vpop.f32.mrb[0].mxu0
      %v699 = vadd.f32 %v506, %v698
      %v700 = vpop.f32.mrb[0].mxu0
      %701 = vmatprep.mubr.f32.mxu0 0.0
      %702 = vmatmul.mubr.f32.gmra.mrb[0].mxu0 %v568
      %v703 = vpop.f32.mrb[0].mxu0
      %v704 = vadd.f32 %v511, %v703
      %v705 = vpop.f32.mrb[0].mxu0
      %706 = vmatprep.mubr.f32.mxu0 0.0
      %707 = vmatmul.mubr.f32.gmra.mrb[0].mxu0 %v571
      %v708 = vpop.f32.mrb[0].mxu0
      %v709 = vadd.f32 %v516, %v708
      %v710 = vpop.f32.mrb[0].mxu0
      %711 = vmatprep.mubr.f32.mxu0 0.0
      %712 = vmatmul.mubr.f32.gmra.mrb[0].mxu0 %v574
      %v713 = vpop.f32.mrb[0].mxu0
      %v714 = vadd.f32 %v521, %v713
      %v715 = vpop.f32.mrb[0].mxu0
      %716 = vmatprep.mubr.f32.mxu0 0.0
      %717 = vmatmul.mubr.f32.gmra.mrb[0].mxu0 %v577
      %v718 = vpop.f32.mrb[0].mxu0
      %v719 = vadd.f32 %v526, %v718
      %v720 = vpop.f32.mrb[0].mxu0
      %721 = vmatprep.mubr.f32.mxu0 0.0
      %722 = vmatmul.mubr.f32.gmra.mrb[0].mxu0 %v580
      %v723 = vpop.f32.mrb[0].mxu0
      %v724 = vadd.f32 %v531, %v723
      %v725 = vpop.f32.mrb[0].mxu0
      %726 = vdwg.mxu0
      %v727 = vmax.f32 %v649, 0.0
      %v728 = vmax.f32 %v654, 0.0
      %v729 = vmax.f32 %v659, 0.0
      %v730 = vmax.f32 %v664, 0.0
      %v731 = vmax.f32 %v669, 0.0
      %v732 = vmax.f32 %v674, 0.0
      %v733 = vmax.f32 %v679, 0.0
      %v734 = vmax.f32 %v684, 0.0
      %v735 = vmax.f32 %v689, 0.0
      %v736 = vmax.f32 %v694, 0.0
      %v737 = vmax.f32 %v699, 0.0
      %v738 = vmax.f32 %v704, 0.0
      %v739 = vmax.f32 %v709, 0.0
      %v740 = vmax.f32 %v714, 0.0
      %v741 = vmax.f32 %v719, 0.0
      %v742 = vmax.f32 %v724, 0.0
      %v743 = vpack.c.bf16 %v728, %v727
      %v744 = vpack.c.bf16 %v730, %v729
      %v745 = vpack.c.bf16 %v732, %v731
      %v746 = vpack.c.bf16 %v734, %v733
      %v747 = vpack.c.bf16 %v736, %v735
      %v748 = vpack.c.bf16 %v738, %v737
      %v749 = vpack.c.bf16 %v740, %v739
      %v750 = vpack.c.bf16 %v742, %v741
      %v759 = vunpack.c.l.b16 %v743
      %v760 = vunpack.c.h.b16 %v743
      %v761 = vunpack.c.l.b16 %v744
      %v762 = vunpack.c.h.b16 %v744
      %v763 = vunpack.c.l.b16 %v745
      %v764 = vunpack.c.h.b16 %v745
      %v765 = vunpack.c.l.b16 %v746
      %v766 = vunpack.c.h.b16 %v746
      %v767 = vunpack.c.l.b16 %v747
      %v768 = vunpack.c.h.b16 %v747
      %v769 = vunpack.c.l.b16 %v748
      %v770 = vunpack.c.h.b16 %v748
      %v771 = vunpack.c.l.b16 %v749
      %v772 = vunpack.c.h.b16 %v749
      %v773 = vunpack.c.l.b16 %v750
      %v774 = vunpack.c.h.b16 %v750
      %v775 = vpack.c.b16 %v759, %v759
      %v776 = vpack.c.b16 %v760, %v760
      %v777 = vpack.c.b16 %v761, %v761
      %v778 = vpack.c.b16 %v762, %v762
      %v779 = vpack.c.b16 %v763, %v763
      %v780 = vpack.c.b16 %v764, %v764
      %v781 = vpack.c.b16 %v765, %v765
      %v782 = vpack.c.b16 %v766, %v766
      %v783 = vpack.c.b16 %v767, %v767
      %v784 = vpack.c.b16 %v768, %v768
      %v785 = vpack.c.b16 %v769, %v769
      %v786 = vpack.c.b16 %v770, %v770
      %v787 = vpack.c.b16 %v771, %v771
      %v788 = vpack.c.b16 %v772, %v772
      %v789 = vpack.c.b16 %v773, %v773
      %v790 = vpack.c.b16 %v774, %v774
      %vm807 = vcmask 257024
      %808 = vst.msk [vmem:[%s221] sm:$0xf] %vm807, %v775
      %809 = vst.msk [vmem:[%s221 + $0x4] sm:$0xf] %vm807, %v776
      %810 = vst.msk [vmem:[%s221 + $0x8] sm:$0xf] %vm807, %v777
      %811 = vst.msk [vmem:[%s221 + $0xc] sm:$0xf] %vm807, %v778
      %812 = vst.msk [vmem:[%s221 + $0x10] sm:$0xf] %vm807, %v779
      %813 = vst.msk [vmem:[%s221 + $0x14] sm:$0xf] %vm807, %v780
      %814 = vst.msk [vmem:[%s221 + $0x18] sm:$0xf] %vm807, %v781
      %815 = vst.msk [vmem:[%s221 + $0x1c] sm:$0xf] %vm807, %v782
      %816 = vst.msk [vmem:[%s221 + $0x20] sm:$0xf] %vm807, %v783
      %817 = vst.msk [vmem:[%s221 + $0x24] sm:$0xf] %vm807, %v784
      %818 = vst.msk [vmem:[%s221 + $0x28] sm:$0xf] %vm807, %v785
      %819 = vst.msk [vmem:[%s221 + $0x2c] sm:$0xf] %vm807, %v786
      %820 = vst.msk [vmem:[%s221 + $0x30] sm:$0xf] %vm807, %v787
      %821 = vst.msk [vmem:[%s221 + $0x34] sm:$0xf] %vm807, %v788
      %822 = vst.msk [vmem:[%s221 + $0x38] sm:$0xf] %vm807, %v789
      %823 = vst.msk [vmem:[%s221 + $0x3c] sm:$0xf] %vm807, %v790
      %p824 = scmp.lt.s32.totalorder %s16, 1
      %s825 = scalar_select %p824, %s16, 1
      %s826 = smul.addr %s825, 16
      %s827 = smul.addr %s826, 4
      %s828 = scalar_lea.vmem %s5, %s827
      // Predicated region
      $region41: #{vae_forward.5} parent=39 // pred_check
        %p829 = pneg %p144
      $region42: #{vae_forward.5} parent=39 // pred_check_branch
        %831 = sbr.rel (%p829) target = $region44
      $region43: #{vae_forward.5} parent=39 // pred_region
        _
      $region44: #{vae_forward.5} parent=39 // pred_fallthru
        _
    $region40: #{vae_forward.5} parent=5 // pred_fallthru
      _
    %p832 = scmp.le.s32.totalorder 2, %s11
    // Predicated region
    $region45: #{vae_forward.5} parent=5 // pred_check
      %p833 = pneg %p832
    $region46: #{vae_forward.5} parent=5 // pred_check_branch
      %835 = sbr.rel (%p833) target = $region48
    $region47: #{vae_forward.5} parent=5 // pred_region
      %s836 = ssub.s32 %s11, 2
      // Predicated region
      $region49: #{vae_forward.5} parent=47 // pred_check
        %p837 = pneg %p150
      $region50: #{vae_forward.5} parent=47 // pred_check_branch
        %839 = sbr.rel (%p837) target = $region52
      $region51: #{vae_forward.5} parent=47 // pred_region
        %p840 = scmp.lt.s32.totalorder %s17, 1
        %s841 = scalar_select %p840, %s17, 1
        %s842 = smul.addr %s841, 16
        %s843 = smul.addr %s842, 4
        %s844 = scalar_lea.vmem %s5, %s843
      $region52: #{vae_forward.5} parent=47 // pred_fallthru
        _
    $region48: #{vae_forward.5} parent=5 // pred_fallthru
      _
  $region6: #{vae_forward.5} parent=0 // loop_footer
    %s15 = sadd.s32 1, %s11
  $region7: #{vae_forward.5} parent=0 // loop_footer_branch
    %10 = sbr.rel target = $region3
  $region8: #{vae_forward.5} parent=0 // loop_exit
    _

// kernel: vae_forward.7
$region0: #{vae_forward.7}
  #allocation0 [shape = 'u32[]', space=smem, size = 0x4, offset = 0x4, fixed_abs, tag = 'smem constant byte address 0x4 - core index']
  #allocation1 [shape = 'u32[144,128]{1,0:T(1,128)}', space=vmem, size = 0x12000, scoped, tag = 'internal scratch']
  %s0 = inlined_call_operand.vmem [shape: f32[2,256], index: 0, kind: input, shape index: {}]
  %s1 = inlined_call_operand.vmem [shape: f32[256,32], index: 1, kind: input, shape index: {}]
  %s2 = inlined_call_operand.vmem [shape: f32[1,32], index: 2, kind: input, shape index: {}]
  %s3 = inlined_call_operand.vmem [shape: f32[256,32], index: 3, kind: input, shape index: {}]
  %s4 = inlined_call_operand.vmem [shape: f32[1,32], index: 4, kind: input, shape index: {}]
  %s5 = inlined_call_operand.vmem [shape: f32[2,32], index: 5, kind: input, shape index: {}]
  %s6 = inlined_call_operand.vmem [shape: f32[32,256], index: 6, kind: input, shape index: {}]
  %s7 = inlined_call_operand.vmem [shape: f32[1,256], index: 7, kind: input, shape index: {}]
  %s8 = inlined_call_operand.hbm [shape: f32[2,32], index: 8, kind: output, shape index: {0}]
  %s9 = inlined_call_operand.vmem [shape: bf16[2,256], index: 9, kind: output, shape index: {1}]
  %10 = xla_tuple %s8, %s9
  %s11 = sld [smem:[#allocation0]]
  $region50: #{vae_forward.7} parent=0
    _
  %s13 = ssub.s32 1, %s11
  %s14 = scalar_select 0, %s13, %s11
  $region1: #{vae_forward.7} parent=0
    #allocation2 [shape = 'u8[1024]{0}', space=vmem, size = 0x400, scoped, tag = 'output window, operand 0, single buffered']
    #allocation3 [shape = 's32[1]{0}', space=sflag, size = 0x4, scoped, tag = 'scoped memory for vae_forward.7']
    %15 = vsyncpa [#allocation3], 0
    // Predicated region
    $region2: #{vae_forward.7} parent=1 // pred_check
      _
    $region3: #{vae_forward.7} parent=1 // pred_check_branch
      %17 = sbr.rel (0) target = $region5
    $region4: #{vae_forward.7} parent=1 // pred_region
      _
    $region5: #{vae_forward.7} parent=1 // pred_fallthru
      _
    // Predicated region
    $region6: #{vae_forward.7} parent=1 // pred_check
      _
    $region7: #{vae_forward.7} parent=1 // pred_check_branch
      %19 = sbr.rel (0) target = $region9
    $region8: #{vae_forward.7} parent=1 // pred_region
      _
    $region9: #{vae_forward.7} parent=1 // pred_fallthru
      _
    // Predicated region
    $region10: #{vae_forward.7} parent=1 // pred_check
      _
    $region11: #{vae_forward.7} parent=1 // pred_check_branch
      %21 = sbr.rel (0) target = $region13
    $region12: #{vae_forward.7} parent=1 // pred_region
      _
    $region13: #{vae_forward.7} parent=1 // pred_fallthru
      _
    // Predicated region
    $region14: #{vae_forward.7} parent=1 // pred_check
      _
    $region15: #{vae_forward.7} parent=1 // pred_check_branch
      %23 = sbr.rel (0) target = $region17
    $region16: #{vae_forward.7} parent=1 // pred_region
      _
    $region17: #{vae_forward.7} parent=1 // pred_fallthru
      _
    // Predicated region
    $region18: #{vae_forward.7} parent=1 // pred_check
      _
    $region19: #{vae_forward.7} parent=1 // pred_check_branch
      %25 = sbr.rel (0) target = $region21
    $region20: #{vae_forward.7} parent=1 // pred_region
      _
    $region21: #{vae_forward.7} parent=1 // pred_fallthru
      _
    // Predicated region
    $region22: #{vae_forward.7} parent=1 // pred_check
      _
    $region23: #{vae_forward.7} parent=1 // pred_check_branch
      %27 = sbr.rel (0) target = $region25
    $region24: #{vae_forward.7} parent=1 // pred_region
      _
    $region25: #{vae_forward.7} parent=1 // pred_fallthru
      _
    // Predicated region
    $region26: #{vae_forward.7} parent=1 // pred_check
      _
    $region27: #{vae_forward.7} parent=1 // pred_check_branch
      %29 = sbr.rel (0) target = $region29
    $region28: #{vae_forward.7} parent=1 // pred_region
      _
    $region29: #{vae_forward.7} parent=1 // pred_fallthru
      _
    // Predicated region
    $region30: #{vae_forward.7} parent=1 // pred_check
      _
    $region31: #{vae_forward.7} parent=1 // pred_check_branch
      %31 = sbr.rel (0) target = $region33
    $region32: #{vae_forward.7} parent=1 // pred_region
      _
    $region33: #{vae_forward.7} parent=1 // pred_fallthru
      _
    %v32 = vld [vmem:[%s0] sm:$0xf]
    %v33 = vld [vmem:[%s1] sm:$0xff]
    %v34 = vld [vmem:[%s1 + $0x8] sm:$0xff]
    %v35 = vld [vmem:[%s1 + $0x10] sm:$0xff]
    %v36 = vld [vmem:[%s1 + $0x18] sm:$0xff]
    %v37 = vld [vmem:[%s1 + $0x20] sm:$0xff]
    %v38 = vld [vmem:[%s1 + $0x28] sm:$0xff]
    %v39 = vld [vmem:[%s1 + $0x30] sm:$0xff]
    %v40 = vld [vmem:[%s1 + $0x38] sm:$0xff]
    %v41 = vld [vmem:[%s1 + $0x40] sm:$0xff]
    %v42 = vld [vmem:[%s1 + $0x48] sm:$0xff]
    %v43 = vld [vmem:[%s1 + $0x50] sm:$0xff]
    %v44 = vld [vmem:[%s1 + $0x58] sm:$0xff]
    %v45 = vld [vmem:[%s1 + $0x60] sm:$0xff]
    %v46 = vld [vmem:[%s1 + $0x68] sm:$0xff]
    %v47 = vld [vmem:[%s1 + $0x70] sm:$0xff]
    %v48 = vld [vmem:[%s1 + $0x78] sm:$0xff]
    %v49 = vld [vmem:[%s1 + $0x80] sm:$0xff]
    %v50 = vld [vmem:[%s1 + $0x88] sm:$0xff]
    %v51 = vld [vmem:[%s1 + $0x90] sm:$0xff]
    %v52 = vld [vmem:[%s1 + $0x98] sm:$0xff]
    %v53 = vld [vmem:[%s1 + $0xa0] sm:$0xff]
    %v54 = vld [vmem:[%s1 + $0xa8] sm:$0xff]
    %v55 = vld [vmem:[%s1 + $0xb0] sm:$0xff]
    %v56 = vld [vmem:[%s1 + $0xb8] sm:$0xff]
    %v57 = vld [vmem:[%s1 + $0xc0] sm:$0xff]
    %v58 = vld [vmem:[%s1 + $0xc8] sm:$0xff]
    %v59 = vld [vmem:[%s1 + $0xd0] sm:$0xff]
    %v60 = vld [vmem:[%s1 + $0xd8] sm:$0xff]
    %v61 = vld [vmem:[%s1 + $0xe0] sm:$0xff]
    %v62 = vld [vmem:[%s1 + $0xe8] sm:$0xff]
    %v63 = vld [vmem:[%s1 + $0xf0] sm:$0xff]
    %v64 = vld [vmem:[%s1 + $0xf8] sm:$0xff]
    %v65 = vld [vmem:[%s2] sm:$0x1]
    %v67 = vlaneseq
    %v68 = vshrl.u32 %v67, 7
    %v69 = vsub.s32 0, %v68
    %v70 = vrot.slane %v65, %v69
    %v74 = vunpack.c.l.s4 1983009808
    %v75 = vunpack.c.0.s8 %v74
    %v76 = vlaneseq
    %v77 = vshrl.u32 %v76, 7
    %v78 = vsub.s32 %v75, %v77
    %v79 = vrot.slane %v32, %v78
    %v80 = vcombine.high %v79, %v79
    %83 = vmatprep.subr.mxu0 0.0
    %84 = vmatpush1.msra.mxu0 %v33
    %85 = vmatprep.subr.mxu0 0.0
    %86 = vmatpush1.msra.mxu0 %v34
    %87 = vmatprep.subr.mxu0 0.0
    %88 = vmatpush1.msra.mxu0 %v35
    %89 = vmatprep.subr.mxu0 0.0
    %90 = vmatpush1.msra.mxu0 %v36
    %91 = vmatprep.subr.mxu0 0.0
    %92 = vmatpush1.msra.mxu0 %v37
    %93 = vmatprep.subr.mxu0 0.0
    %94 = vmatpush1.msra.mxu0 %v38
    %95 = vmatprep.subr.mxu0 0.0
    %96 = vmatpush1.msra.mxu0 %v39
    %97 = vmatprep.subr.mxu0 0.0
    %98 = vmatpush1.msra.mxu0 %v40
    %99 = vmatprep.subr.mxu0 0.0
    %100 = vmatpush1.msra.mxu0 %v41
    %101 = vmatprep.subr.mxu0 0.0
    %102 = vmatpush1.msra.mxu0 %v42
    %103 = vmatprep.subr.mxu0 0.0
    %104 = vmatpush1.msra.mxu0 %v43
    %105 = vmatprep.subr.mxu0 0.0
    %106 = vmatpush1.msra.mxu0 %v44
    %107 = vmatprep.subr.mxu0 0.0
    %108 = vmatpush1.msra.mxu0 %v45
    %109 = vmatprep.subr.mxu0 0.0
    %110 = vmatpush1.msra.mxu0 %v46
    %111 = vmatprep.subr.mxu0 0.0
    %112 = vmatpush1.msra.mxu0 %v47
    %113 = vmatprep.subr.mxu0 0.0
    %114 = vmatpush1.msra.mxu0 %v48
    %115 = vmatprep.subr.mxu0 0.0
    %116 = vmatpush1.msra.mxu0 %v49
    %117 = vmatprep.subr.mxu0 0.0
    %118 = vmatpush1.msra.mxu0 %v50
    %119 = vmatprep.subr.mxu0 0.0
    %120 = vmatpush1.msra.mxu0 %v51
    %121 = vmatprep.subr.mxu0 0.0
    %122 = vmatpush1.msra.mxu0 %v52
    %123 = vmatprep.subr.mxu0 0.0
    %124 = vmatpush1.msra.mxu0 %v53
    %125 = vmatprep.subr.mxu0 0.0
    %126 = vmatpush1.msra.mxu0 %v54
    %127 = vmatprep.subr.mxu0 0.0
    %128 = vmatpush1.msra.mxu0 %v55
    %129 = vmatprep.subr.mxu0 0.0
    %130 = vmatpush1.msra.mxu0 %v56
    %131 = vmatprep.subr.mxu0 0.0
    %132 = vmatpush1.msra.mxu0 %v57
    %133 = vmatprep.subr.mxu0 0.0
    %134 = vmatpush1.msra.mxu0 %v58
    %135 = vmatprep.subr.mxu0 0.0
    %136 = vmatpush1.msra.mxu0 %v59
    %137 = vmatprep.subr.mxu0 0.0
    %138 = vmatpush1.msra.mxu0 %v60
    %139 = vmatprep.subr.mxu0 0.0
    %140 = vmatpush1.msra.mxu0 %v61
    %141 = vmatprep.subr.mxu0 0.0
    %142 = vmatpush1.msra.mxu0 %v62
    %143 = vmatprep.subr.mxu0 0.0
    %144 = vmatpush1.msra.mxu0 %v63
    %145 = vmatprep.subr.mxu0 0.0
    %146 = vmatpush1.msra.mxu0 %v64
    %147 = vmatprep.mubr.f32.mxu0 %v80
    %148 = vmatmul.mubr.f32.gmra.mrb[0].mxu0 %v79
    %v149 = vpop.f32.mrb[0].mxu0
    %v150 = vadd.f32 %v70, %v149
    %v151 = vpop.f32.mrb[0].mxu0
    %152 = vdwg.mxu0
    %v153 = vld [vmem:[%s3] sm:$0xff]
    %v154 = vld [vmem:[%s3 + $0x8] sm:$0xff]
    %v155 = vld [vmem:[%s3 + $0x10] sm:$0xff]
    %v156 = vld [vmem:[%s3 + $0x18] sm:$0xff]
    %v157 = vld [vmem:[%s3 + $0x20] sm:$0xff]
    %v158 = vld [vmem:[%s3 + $0x28] sm:$0xff]
    %v159 = vld [vmem:[%s3 + $0x30] sm:$0xff]
    %v160 = vld [vmem:[%s3 + $0x38] sm:$0xff]
    %v161 = vld [vmem:[%s3 + $0x40] sm:$0xff]
    %v162 = vld [vmem:[%s3 + $0x48] sm:$0xff]
    %v163 = vld [vmem:[%s3 + $0x50] sm:$0xff]
    %v164 = vld [vmem:[%s3 + $0x58] sm:$0xff]
    %v165 = vld [vmem:[%s3 + $0x60] sm:$0xff]
    %v166 = vld [vmem:[%s3 + $0x68] sm:$0xff]
    %v167 = vld [vmem:[%s3 + $0x70] sm:$0xff]
    %v168 = vld [vmem:[%s3 + $0x78] sm:$0xff]
    %v169 = vld [vmem:[%s3 + $0x80] sm:$0xff]
    %v170 = vld [vmem:[%s3 + $0x88] sm:$0xff]
    %v171 = vld [vmem:[%s3 + $0x90] sm:$0xff]
    %v172 = vld [vmem:[%s3 + $0x98] sm:$0xff]
    %v173 = vld [vmem:[%s3 + $0xa0] sm:$0xff]
    %v174 = vld [vmem:[%s3 + $0xa8] sm:$0xff]
    %v175 = vld [vmem:[%s3 + $0xb0] sm:$0xff]
    %v176 = vld [vmem:[%s3 + $0xb8] sm:$0xff]
    %v177 = vld [vmem:[%s3 + $0xc0] sm:$0xff]
    %v178 = vld [vmem:[%s3 + $0xc8] sm:$0xff]
    %v179 = vld [vmem:[%s3 + $0xd0] sm:$0xff]
    %v180 = vld [vmem:[%s3 + $0xd8] sm:$0xff]
    %v181 = vld [vmem:[%s3 + $0xe0] sm:$0xff]
    %v182 = vld [vmem:[%s3 + $0xe8] sm:$0xff]
    %v183 = vld [vmem:[%s3 + $0xf0] sm:$0xff]
    %v184 = vld [vmem:[%s3 + $0xf8] sm:$0xff]
    %v185 = vld [vmem:[%s4] sm:$0x1]
    %v187 = vlaneseq
    %v188 = vshrl.u32 %v187, 7
    %v189 = vsub.s32 0, %v188
    %v190 = vrot.slane %v185, %v189
    %192 = vmatprep.subr.mxu0 0.0
    %193 = vmatpush1.msra.mxu0 %v153
    %194 = vmatprep.subr.mxu0 0.0
    %195 = vmatpush1.msra.mxu0 %v154
    %196 = vmatprep.subr.mxu0 0.0
    %197 = vmatpush1.msra.mxu0 %v155
    %198 = vmatprep.subr.mxu0 0.0
    %199 = vmatpush1.msra.mxu0 %v156
    %200 = vmatprep.subr.mxu0 0.0
    %201 = vmatpush1.msra.mxu0 %v157
    %202 = vmatprep.subr.mxu0 0.0
    %203 = vmatpush1.msra.mxu0 %v158
    %204 = vmatprep.subr.mxu0 0.0
    %205 = vmatpush1.msra.mxu0 %v159
    %206 = vmatprep.subr.mxu0 0.0
    %207 = vmatpush1.msra.mxu0 %v160
    %208 = vmatprep.subr.mxu0 0.0
    %209 = vmatpush1.msra.mxu0 %v161
    %210 = vmatprep.subr.mxu0 0.0
    %211 = vmatpush1.msra.mxu0 %v162
    %212 = vmatprep.subr.mxu0 0.0
    %213 = vmatpush1.msra.mxu0 %v163
    %214 = vmatprep.subr.mxu0 0.0
    %215 = vmatpush1.msra.mxu0 %v164
    %216 = vmatprep.subr.mxu0 0.0
    %217 = vmatpush1.msra.mxu0 %v165
    %218 = vmatprep.subr.mxu0 0.0
    %219 = vmatpush1.msra.mxu0 %v166
    %220 = vmatprep.subr.mxu0 0.0
    %221 = vmatpush1.msra.mxu0 %v167
    %222 = vmatprep.subr.mxu0 0.0
    %223 = vmatpush1.msra.mxu0 %v168
    %224 = vmatprep.subr.mxu0 0.0
    %225 = vmatpush1.msra.mxu0 %v169
    %226 = vmatprep.subr.mxu0 0.0
    %227 = vmatpush1.msra.mxu0 %v170
    %228 = vmatprep.subr.mxu0 0.0
    %229 = vmatpush1.msra.mxu0 %v171
    %230 = vmatprep.subr.mxu0 0.0
    %231 = vmatpush1.msra.mxu0 %v172
    %232 = vmatprep.subr.mxu0 0.0
    %233 = vmatpush1.msra.mxu0 %v173
    %234 = vmatprep.subr.mxu0 0.0
    %235 = vmatpush1.msra.mxu0 %v174
    %236 = vmatprep.subr.mxu0 0.0
    %237 = vmatpush1.msra.mxu0 %v175
    %238 = vmatprep.subr.mxu0 0.0
    %239 = vmatpush1.msra.mxu0 %v176
    %240 = vmatprep.subr.mxu0 0.0
    %241 = vmatpush1.msra.mxu0 %v177
    %242 = vmatprep.subr.mxu0 0.0
    %243 = vmatpush1.msra.mxu0 %v178
    %244 = vmatprep.subr.mxu0 0.0
    %245 = vmatpush1.msra.mxu0 %v179
    %246 = vmatprep.subr.mxu0 0.0
    %247 = vmatpush1.msra.mxu0 %v180
    %248 = vmatprep.subr.mxu0 0.0
    %249 = vmatpush1.msra.mxu0 %v181
    %250 = vmatprep.subr.mxu0 0.0
    %251 = vmatpush1.msra.mxu0 %v182
    %252 = vmatprep.subr.mxu0 0.0
    %253 = vmatpush1.msra.mxu0 %v183
    %254 = vmatprep.subr.mxu0 0.0
    %255 = vmatpush1.msra.mxu0 %v184
    %256 = vmatprep.mubr.f32.mxu0 %v80
    %257 = vmatmul.mubr.f32.gmra.mrb[0].mxu0 %v79
    %v258 = vpop.f32.mrb[0].mxu0
    %v259 = vadd.f32 %v190, %v258
    %v260 = vpop.f32.mrb[0].mxu0
    %261 = vdwg.mxu0
    %v262 = vmul.f32 %v259, 0.5
    %v263 = vmul.f32 %v262, 1.442695
    %v264 = vpow.pop %v263
    %v265 = vld [vmem:[%s5] sm:$0x3]
    %v266 = vmul.f32 %v264, %v265
    %v267 = vadd.f32 %v150, %v266
    %vm268 = vcmask 254976
    %269 = vst.msk [vmem:[#allocation2] sm:$0x3] %vm268, %v267
    %v270 = vld [vmem:[%s6] sm:$0xff]
    %v271 = vld [vmem:[%s6 + $0x8] sm:$0xff]
    %v272 = vld [vmem:[%s6 + $0x10] sm:$0xff]
    %v273 = vld [vmem:[%s6 + $0x18] sm:$0xff]
    %v274 = vld [vmem:[%s6 + $0x20] sm:$0xff]
    %v275 = vld [vmem:[%s6 + $0x28] sm:$0xff]
    %v276 = vld [vmem:[%s6 + $0x30] sm:$0xff]
    %v277 = vld [vmem:[%s6 + $0x38] sm:$0xff]
    %v278 = vld [vmem:[%s7] sm:$0x3]
    %v280 = vlaneseq
    %v281 = vshrl.u32 %v280, 7
    %v282 = vsub.s32 0, %v281
    %v283 = vrot.slane %v278, %v282
    %v284 = vlaneseq
    %v285 = vshrl.u32 %v284, 7
    %v286 = vsub.s32 1, %v285
    %v287 = vrot.slane %v278, %v286
    %vm290 = vcmask 261120
    %v292 = vsel %vm290, %v267, 0
    %294 = vmatprep.subr.mxu0 %v271
    %295 = vmatpush1.msra.mxu0 %v270
    %296 = vmatprep.subr.mxu0 %v273
    %297 = vmatpush1.msra.mxu0 %v272
    %298 = vmatprep.subr.mxu0 %v275
    %299 = vmatpush1.msra.mxu0 %v274
    %300 = vmatprep.subr.mxu0 %v277
    %301 = vmatpush1.msra.mxu0 %v276
    %302 = vmatprep.subr.mxu0 0.0
    %303 = vmatpush1.msra.mxu0 0.0
    %304 = vmatprep.subr.mxu0 0.0
    %305 = vmatpush1.msra.mxu0 0.0
    %306 = vmatprep.subr.mxu0 0.0
    %307 = vmatpush1.msra.mxu0 0.0
    %308 = vmatprep.subr.mxu0 0.0
    %309 = vmatpush1.msra.mxu0 0.0
    %310 = vmatprep.subr.mxu0 0.0
    %311 = vmatpush1.msra.mxu0 0.0
    %312 = vmatprep.subr.mxu0 0.0
    %313 = vmatpush1.msra.mxu0 0.0
    %314 = vmatprep.subr.mxu0 0.0
    %315 = vmatpush1.msra.mxu0 0.0
    %316 = vmatprep.subr.mxu0 0.0
    %317 = vmatpush1.msra.mxu0 0.0
    %318 = vmatprep.subr.mxu0 0.0
    %319 = vmatpush1.msra.mxu0 0.0
    %320 = vmatprep.subr.mxu0 0.0
    %321 = vmatpush1.msra.mxu0 0.0
    %322 = vmatprep.subr.mxu0 0.0
    %323 = vmatpush1.msra.mxu0 0.0
    %324 = vmatprep.subr.mxu0 0.0
    %325 = vmatpush1.msra.mxu0 0.0
    %326 = vmatprep.subr.mxu0 0.0
    %327 = vmatpush1.msra.mxu0 0.0
    %328 = vmatprep.subr.mxu0 0.0
    %329 = vmatpush1.msra.mxu0 0.0
    %330 = vmatprep.subr.mxu0 0.0
    %331 = vmatpush1.msra.mxu0 0.0
    %332 = vmatprep.subr.mxu0 0.0
    %333 = vmatpush1.msra.mxu0 0.0
    %334 = vmatprep.subr.mxu0 0.0
    %335 = vmatpush1.msra.mxu0 0.0
    %336 = vmatprep.subr.mxu0 0.0
    %337 = vmatpush1.msra.mxu0 0.0
    %338 = vmatprep.subr.mxu0 0.0
    %339 = vmatpush1.msra.mxu0 0.0
    %340 = vmatprep.subr.mxu0 0.0
    %341 = vmatpush1.msra.mxu0 0.0
    %342 = vmatprep.subr.mxu0 0.0
    %343 = vmatpush1.msra.mxu0 0.0
    %344 = vmatprep.subr.mxu0 0.0
    %345 = vmatpush1.msra.mxu0 0.0
    %346 = vmatprep.subr.mxu0 0.0
    %347 = vmatpush1.msra.mxu0 0.0
    %348 = vmatprep.subr.mxu0 0.0
    %349 = vmatpush1.msra.mxu0 0.0
    %350 = vmatprep.subr.mxu0 0.0
    %351 = vmatpush1.msra.mxu0 0.0
    %352 = vmatprep.subr.mxu0 0.0
    %353 = vmatpush1.msra.mxu0 0.0
    %354 = vmatprep.subr.mxu0 0.0
    %355 = vmatpush1.msra.mxu0 0.0
    %356 = vmatprep.subr.mxu0 0.0
    %357 = vmatpush1.msra.mxu0 0.0
    %358 = vmatprep.mubr.f32.mxu0 0.0
    %359 = vmatmul.mubr.f32.gmra.mrb[0].mxu0 %v292
    %v360 = vpop.f32.mrb[0].mxu0
    %v361 = vadd.f32 %v283, %v360
    %v362 = vpop.f32.mrb[0].mxu0
    %v363 = vadd.f32 %v287, %v362
    %364 = vdwg.mxu0
    %v365 = vmax.f32 %v361, 0.0
    %v366 = vmax.f32 %v363, 0.0
    %v367 = vpack.c.bf16 %v365, %v365
    %v368 = vpack.c.bf16 %v366, %v366
    %v371 = vcombine.low %v367, %v368
    %v373 = vunpack.c.l.s4 1966171168
    %v374 = vunpack.c.0.s8 %v373
    %v375 = vlaneseq
    %v376 = vshrl.u32 %v375, 7
    %v377 = vsub.s32 %v374, %v376
    %v378 = vrot.slane %v371, %v377
    %v380 = vunpack.c.l.s4 1966171168
    %v381 = vunpack.c.0.s8 %v380
    %v382 = vlaneseq
    %v383 = vshrl.u32 %v382, 7
    %v384 = vsub.s32 %v381, %v383
    %v385 = vrot.slane %v378, %v384
    %387 = vst [vmem:[%s9] sm:$0x3] %v385
    // Predicated region
    $region34: #{vae_forward.7} parent=1 // pred_check
      _
    $region35: #{vae_forward.7} parent=1 // pred_check_branch
      %389 = sbr.rel (0) target = $region37
    $region36: #{vae_forward.7} parent=1 // pred_region
      %s391 = ssub.s32 32, 32
      %392 = vsyncadd [#allocation3], %s391
      %s394 = sshll.u32 [#allocation2], 4
      %s395 = int_to_ptr.vmem [resolvable:$true] %s394
      %397 = dma.vmem_to_hbm [thread:$0]  %s395, 32, %s8, [#allocation3]
    $region37: #{vae_forward.7} parent=1 // pred_fallthru
      _
    // Predicated region
    $region38: #{vae_forward.7} parent=1 // pred_check
      _
    $region39: #{vae_forward.7} parent=1 // pred_check_branch
      %399 = sbr.rel (0) target = $region41
    $region40: #{vae_forward.7} parent=1 // pred_region
      _
    $region41: #{vae_forward.7} parent=1 // pred_fallthru
      _
    // Predicated region
    $region42: #{vae_forward.7} parent=1 // pred_check
      _
    $region43: #{vae_forward.7} parent=1 // pred_check_branch
      %401 = sbr.rel (0) target = $region45
    $region44: #{vae_forward.7} parent=1 // pred_region
      %402 = dma.done [#allocation3], 32
    $region45: #{vae_forward.7} parent=1 // pred_fallthru
      _
    // Predicated region
    $region46: #{vae_forward.7} parent=1 // pred_check
      _
    $region47: #{vae_forward.7} parent=1 // pred_check_branch
      %404 = sbr.rel (0) target = $region49
    $region48: #{vae_forward.7} parent=1 // pred_region
      _
    $region49: #{vae_forward.7} parent=1 // pred_fallthru
      _
    %405 = vsyncpa [#allocation3], 1

// kernel: vae_forward.6
$region0: #{vae_forward.6}
  #allocation0 [shape = 'u32[]', space=smem, size = 0x4, offset = 0x4, fixed_abs, tag = 'smem constant byte address 0x4 - core index']
  #allocation1 [shape = 'u32[144,128]{1,0:T(1,128)}', space=vmem, size = 0x12000, scoped, tag = 'internal scratch']
  #allocation2 [shape = 'f32[2,128]{1,0:T(2,128)}', space=vmem, size = 0x400, scoped, tag = 'scratch operand']
  %s0 = inlined_call_operand.vmem [shape: bf16[2,4096], index: 0, kind: input, shape index: {}]
  %s1 = inlined_call_operand.hbm [shape: s8[4096,256], index: 1, kind: input, shape index: {}]
  %s2 = inlined_call_operand.vmem [shape: f32[1,256], index: 2, kind: input, shape index: {}]
  %s3 = inlined_call_operand.vmem [shape: f32[1,256], index: 3, kind: input, shape index: {}]
  %s4 = inlined_call_operand.vmem [shape: f32[2,256], index: 4, kind: output, shape index: {}]
  %s5 = sld [smem:[#allocation0]]
  $region61: #{vae_forward.6} parent=0
    _
  %s7 = ssub.s32 1, %s5
  %s8 = scalar_select 0, %s7, %s5
  $region1: #{vae_forward.6} parent=0
    #allocation3 [shape = 'u8[1048576]{0}', space=vmem, size = 0x100000, scoped, tag = 'input window, operand 1']
    #allocation4 [shape = 's32[2]{0}', space=sflag, size = 0x8, scoped, tag = 'scoped memory for vae_forward.6']
    %9 = vsyncpa [#allocation4], 0
    %s10 = scalar_lea.sflag [#allocation4], 1
    %11 = vsyncpa %s10, 0
    loop: start=0, step=1, limit=4
    $region2: #{vae_forward.6} parent=1 // loop_pre_header
      _
    $region3: #{vae_forward.6} parent=1 // loop_header
      %s13 = sphi 0, %s17
      %p14 = scmp.ge.s32.totalorder %s13, 4
      %s20 = sphi 0, %s32
      %s21 = sphi 0, %s28
      %s22 = sphi 0, %s20
      %s23 = sphi 0, %s21
      %s24 = sphi 0, %s22
      %s25 = sphi 0, %s23
      %s35 = sphi 0, %s37
      %s38 = sphi 0, %s35
      %s39 = sphi 0, %s38
      %s55 = sphi 0, %s39
      %s63 = sphi 0, %s65
      %s66 = sphi 0, %s63
      %s67 = sphi 0, %s66
      %s83 = sphi 0, %s67
      %s89 = sphi 0, %s91
      %s92 = sphi 0, %s89
      %s93 = sphi 0, %s92
      %s109 = sphi 0, %s93
      %s115 = sphi 0, %s117
      %s118 = sphi 0, %s115
      %s119 = sphi 0, %s118
      %s135 = sphi 0, %s119
      %s141 = sphi 0, %s143
      %s144 = sphi 0, %s141
      %s145 = sphi 0, %s144
      %s161 = sphi 0, %s145
    $region4: #{vae_forward.6} parent=1 // loop_header_branch
      %16 = sbr.rel (%p14) target = $region8
    $region5: #{vae_forward.6} parent=1 // loop_body
      %s18 = ssub.s32 %s13, 1
      %s19 = ssub.s32 %s13, 2
      %s26 = sadd.s32 1, %s21
      %p27 = scmp.ge.s32.totalorder %s26, 1
      %s28 = scalar_select %p27, 0, %s26
      %s29 = sadd.s32 1, %s20
      %s30 = scalar_select %p27, %s29, %s20
      %p31 = scmp.ge.s32.totalorder %s30, 2
      %s32 = scalar_select %p31, 0, %s30
      %s33 = ssub.s32 %s21, %s28
      %p34 = scmp.eq.s32.totalorder %s33, 0
      %s36 = sadd.s32 %s35, 1
      %s37 = scalar_select %p34, %s35, %s36
      %p40 = pneg %p34
      %p41 = scmp.eq.s32.totalorder %s13, 1
      %p42 = por %p40, %p41
      %p43 = scmp.ne.s32.totalorder %s35, %s38
      %p44 = scmp.eq.s32.totalorder %s13, 0
      %p45 = por %p43, %p44
      %p46 = scmp.ne.s32.totalorder %s35, %s38
      %p47 = scmp.eq.s32.totalorder %s18, 1
      %p48 = por %p46, %p47
      %p49 = scmp.ne.s32.totalorder %s38, %s39
      %p50 = scmp.eq.s32.totalorder %s18, 0
      %p51 = por %p49, %p50
      %p52 = scmp.ne.s32.totalorder %s38, %s39
      %p53 = scmp.eq.s32.totalorder %s19, 1
      %p54 = por %p52, %p53
      %p56 = scmp.ne.s32.totalorder %s39, %s55
      %p57 = scmp.eq.s32.totalorder %s19, 0
      %p58 = por %p56, %p57
      %s59 = ssub.s32 %s21, %s28
      %s60 = ssub.s32 %s20, %s32
      %s61 = sor.u32 %s59, %s60
      %p62 = scmp.eq.s32.totalorder %s61, 0
      %s64 = sadd.s32 %s63, 1
      %s65 = scalar_select %p62, %s63, %s64
      %p68 = pneg %p62
      %p69 = scmp.eq.s32.totalorder %s13, 1
      %p70 = por %p68, %p69
      %p71 = scmp.ne.s32.totalorder %s63, %s66
      %p72 = scmp.eq.s32.totalorder %s13, 0
      %p73 = por %p71, %p72
      %p74 = scmp.ne.s32.totalorder %s63, %s66
      %p75 = scmp.eq.s32.totalorder %s18, 1
      %p76 = por %p74, %p75
      %p77 = scmp.ne.s32.totalorder %s66, %s67
      %p78 = scmp.eq.s32.totalorder %s18, 0
      %p79 = por %p77, %p78
      %p80 = scmp.ne.s32.totalorder %s66, %s67
      %p81 = scmp.eq.s32.totalorder %s19, 1
      %p82 = por %p80, %p81
      %p84 = scmp.ne.s32.totalorder %s67, %s83
      %p85 = scmp.eq.s32.totalorder %s19, 0
      %p86 = por %p84, %p85
      %s87 = ssub.s32 %s20, %s32
      %p88 = scmp.eq.s32.totalorder %s87, 0
      %s90 = sadd.s32 %s89, 1
      %s91 = scalar_select %p88, %s89, %s90
      %p94 = pneg %p88
      %p95 = scmp.eq.s32.totalorder %s13, 1
      %p96 = por %p94, %p95
      %p97 = scmp.ne.s32.totalorder %s89, %s92
      %p98 = scmp.eq.s32.totalorder %s13, 0
      %p99 = por %p97, %p98
      %p100 = scmp.ne.s32.totalorder %s89, %s92
      %p101 = scmp.eq.s32.totalorder %s18, 1
      %p102 = por %p100, %p101
      %p103 = scmp.ne.s32.totalorder %s92, %s93
      %p104 = scmp.eq.s32.totalorder %s18, 0
      %p105 = por %p103, %p104
      %p106 = scmp.ne.s32.totalorder %s92, %s93
      %p107 = scmp.eq.s32.totalorder %s19, 1
      %p108 = por %p106, %p107
      %p110 = scmp.ne.s32.totalorder %s93, %s109
      %p111 = scmp.eq.s32.totalorder %s19, 0
      %p112 = por %p110, %p111
      %s113 = ssub.s32 %s20, %s32
      %p114 = scmp.eq.s32.totalorder %s113, 0
      %s116 = sadd.s32 %s115, 1
      %s117 = scalar_select %p114, %s115, %s116
      %p120 = pneg %p114
      %p121 = scmp.eq.s32.totalorder %s13, 1
      %p122 = por %p120, %p121
      %p123 = scmp.ne.s32.totalorder %s115, %s118
      %p124 = scmp.eq.s32.totalorder %s13, 0
      %p125 = por %p123, %p124
      %p126 = scmp.ne.s32.totalorder %s115, %s118
      %p127 = scmp.eq.s32.totalorder %s18, 1
      %p128 = por %p126, %p127
      %p129 = scmp.ne.s32.totalorder %s118, %s119
      %p130 = scmp.eq.s32.totalorder %s18, 0
      %p131 = por %p129, %p130
      %p132 = scmp.ne.s32.totalorder %s118, %s119
      %p133 = scmp.eq.s32.totalorder %s19, 1
      %p134 = por %p132, %p133
      %p136 = scmp.ne.s32.totalorder %s119, %s135
      %p137 = scmp.eq.s32.totalorder %s19, 0
      %p138 = por %p136, %p137
      %s139 = ssub.s32 %s20, %s32
      %p140 = scmp.eq.s32.totalorder %s139, 0
      %s142 = sadd.s32 %s141, 1
      %s143 = scalar_select %p140, %s141, %s142
      %p146 = pneg %p140
      %p147 = scmp.eq.s32.totalorder %s13, 1
      %p148 = por %p146, %p147
      %p149 = scmp.ne.s32.totalorder %s141, %s144
      %p150 = scmp.eq.s32.totalorder %s13, 0
      %p151 = por %p149, %p150
      %p152 = scmp.ne.s32.totalorder %s141, %s144
      %p153 = scmp.eq.s32.totalorder %s18, 1
      %p154 = por %p152, %p153
      %p155 = scmp.ne.s32.totalorder %s144, %s145
      %p156 = scmp.eq.s32.totalorder %s18, 0
      %p157 = por %p155, %p156
      %p158 = scmp.ne.s32.totalorder %s144, %s145
      %p159 = scmp.eq.s32.totalorder %s19, 1
      %p160 = por %p158, %p159
      %p162 = scmp.ne.s32.totalorder %s145, %s161
      %p163 = scmp.eq.s32.totalorder %s19, 0
      %p164 = por %p162, %p163
      %p165 = scmp.le.s32.totalorder 1, %s13
      %p166 = scmp.lt.s32.totalorder %s13, 3
      %p167 = pnand %p165, %p166
      %p168 = pneg %p167
      // Predicated region
      $region9: #{vae_forward.6} parent=5 // pred_check
        _
      $region10: #{vae_forward.6} parent=5 // pred_check_branch
        %170 = sbr.rel (%p167) target = $region12
      $region11: #{vae_forward.6} parent=5 // pred_region
        %s171 = ssub.s32 %s13, 1
        // Predicated region
        $region13: #{vae_forward.6} parent=11 // pred_check
          %p172 = pneg %p51
        $region14: #{vae_forward.6} parent=11 // pred_check_branch
          %174 = sbr.rel (%p172) target = $region16
        $region15: #{vae_forward.6} parent=11 // pred_region
          %s175 = smul.u32 32, %s23
          %p176 = scmp.lt.s32.totalorder %s175, 31
          %s177 = scalar_select %p176, %s175, 31
          %s178 = scalar_lea.vmem %s0, %s177
          %s179 = smul.u32 32, %s23
        $region16: #{vae_forward.6} parent=11 // pred_fallthru
          _
      $region12: #{vae_forward.6} parent=5 // pred_fallthru
        _
      %p180 = scmp.lt.s32.totalorder %s13, 2
      // Predicated region
      $region17: #{vae_forward.6} parent=5 // pred_check
        %p181 = pneg %p180
      $region18: #{vae_forward.6} parent=5 // pred_check_branch
        %183 = sbr.rel (%p181) target = $region20
      $region19: #{vae_forward.6} parent=5 // pred_region
        // Predicated region
        $region21: #{vae_forward.6} parent=19 // pred_check
          %p184 = pneg %p73
        $region22: #{vae_forward.6} parent=19 // pred_check_branch
          %186 = sbr.rel (%p184) target = $region24
        $region23: #{vae_forward.6} parent=19 // pred_region
          %s187 = sand.u32 %s63, 1
          %s188 = scalar_lea.sflag [#allocation4], %s187
          %s189 = sand.u32 %s63, 1
          %s190 = smul.addr %s189, 1024
          %s191 = scalar_lea.vmem [#allocation3], %s190
          %s192 = smul.u32 128, %s21
          %s194 = ssub.s32 16384, 16384
          %195 = vsyncadd %s188, %s194
          %s196 = smul.addr %s192, 2
          %s197 = sadd.s32 %s20, %s196
          %s198 = smul.addr %s197, 128
          %s199 = scalar_lea.hbm %s1, %s198
          %s200 = sshll.u32 %s191, 4
          %s201 = int_to_ptr.vmem [resolvable:$true] %s200
          %206 = dma.hbm_to_vmem [thread:$0]  %s199, 16384, %s201, %s188, 256, 128, 8
        $region24: #{vae_forward.6} parent=19 // pred_fallthru
          _
        // Predicated region
        $region25: #{vae_forward.6} parent=19 // pred_check
          %p207 = pneg %p99
        $region26: #{vae_forward.6} parent=19 // pred_check_branch
          %209 = sbr.rel (%p207) target = $region28
        $region27: #{vae_forward.6} parent=19 // pred_region
          %p210 = scmp.lt.s32.totalorder %s20, 1
          %s211 = scalar_select %p210, %s20, 1
          %s212 = scalar_lea.vmem %s2, %s211
        $region28: #{vae_forward.6} parent=19 // pred_fallthru
          _
        // Predicated region
        $region29: #{vae_forward.6} parent=19 // pred_check
          %p213 = pneg %p125
        $region30: #{vae_forward.6} parent=19 // pred_check_branch
          %215 = sbr.rel (%p213) target = $region32
        $region31: #{vae_forward.6} parent=19 // pred_region
          %p216 = scmp.lt.s32.totalorder %s20, 1
          %s217 = scalar_select %p216, %s20, 1
          %s218 = scalar_lea.vmem %s3, %s217
        $region32: #{vae_forward.6} parent=19 // pred_fallthru
          _
      $region20: #{vae_forward.6} parent=5 // pred_fallthru
        _
      %p219 = scmp.le.s32.totalorder 1, %s13
      %p220 = scmp.lt.s32.totalorder %s13, 3
      %p221 = pnand %p219, %p220
      %p222 = pneg %p221
      // Predicated region
      $region33: #{vae_forward.6} parent=5 // pred_check
        _
      $region34: #{vae_forward.6} parent=5 // pred_check_branch
        %224 = sbr.rel (%p221) target = $region36
      $region35: #{vae_forward.6} parent=5 // pred_region
        %s225 = ssub.s32 %s13, 1
        %s226 = sand.u32 %s66, 1
        %s227 = scalar_lea.sflag [#allocation4], %s226
        %s228 = sand.u32 %s66, 1
        %s229 = smul.addr %s228, 1024
        %s230 = scalar_lea.vmem [#allocation3], %s229
        // Predicated region
        $region37: #{vae_forward.6} parent=35 // pred_check
          %p231 = pneg %p79
        $region38: #{vae_forward.6} parent=35 // pred_check_branch
          %233 = sbr.rel (%p231) target = $region40
        $region39: #{vae_forward.6} parent=35 // pred_region
          %234 = dma.done %s227, 16384
        $region40: #{vae_forward.6} parent=35 // pred_fallthru
          _
        %s235 = smul.u32 32, %s23
        %p236 = scmp.lt.s32.totalorder %s235, 31
        %s237 = scalar_select %p236, %s235, 31
        %s238 = scalar_lea.vmem %s0, %s237
        %p239 = pneg %p51
        %p240 = pneg %p48
        %s241 = sand.u32 %s66, 1
        %s242 = scalar_lea.sflag [#allocation4], %s241
        %s243 = sand.u32 %s66, 1
        %s244 = smul.addr %s243, 1024
        %s245 = scalar_lea.vmem [#allocation3], %s244
        %p246 = pneg %p79
        %p247 = pneg %p76
        %p248 = scmp.lt.s32.totalorder %s22, 1
        %s249 = scalar_select %p248, %s22, 1
        %s250 = scalar_lea.vmem %s2, %s249
        %p251 = pneg %p105
        %p252 = pneg %p102
        %p253 = scmp.lt.s32.totalorder %s22, 1
        %s254 = scalar_select %p253, %s22, 1
        %s255 = scalar_lea.vmem %s3, %s254
        %p256 = pneg %p131
        %p257 = pneg %p128
        %p258 = pneg %p157
        %p259 = pneg %p154
        %p260 = scmp.lt.s32.totalorder %s22, 1
        %s261 = scalar_select %p260, %s22, 1
        %s262 = smul.addr %s261, 2
        %s263 = scalar_lea.vmem %s4, %s262
        %s264 = smul.u32 32, %s23
        %p265 = scmp.lt.s32.totalorder %s264, 31
        %s266 = scalar_select %p265, %s264, 31
        %s267 = scalar_lea.vmem %s0, %s266
        %s268 = smul.u32 32, %s23
        %s269 = smul.u32 128, %s23
        %p270 = scmp.lt.s32.totalorder %s22, 1
        %s271 = scalar_select %p270, %s22, 1
        %s272 = scalar_lea.vmem %s2, %s271
        %p273 = scmp.lt.s32.totalorder %s22, 1
        %s274 = scalar_select %p273, %s22, 1
        %s275 = scalar_lea.vmem %s3, %s274
        %p276 = scmp.lt.s32.totalorder %s22, 1
        %s277 = scalar_select %p276, %s22, 1
        %s278 = smul.addr %s277, 2
        %s279 = scalar_lea.vmem %s4, %s278
        %p281 = scmp.eq.s32.totalorder %s23, 0
        // Predicated region
        $region41: #{vae_forward.6} parent=35 // pred_check
          %p282 = pneg %p281
        $region42: #{vae_forward.6} parent=35 // pred_check_branch
          %284 = sbr.rel (%p282) target = $region44
        $region43: #{vae_forward.6} parent=35 // pred_region
          %285 = vst [vmem:[#allocation2] sm:$0x3] 0.0
        $region44: #{vae_forward.6} parent=35 // pred_fallthru
          _
        %v286 = vld [vmem:[#allocation2] sm:$0x3]
        %v287 = vld [vmem:[%s267] sm:$0xff]
        %v288 = vld [vmem:[%s267 + $0x8] sm:$0xff]
        %v289 = vld [vmem:[%s267 + $0x10] sm:$0xff]
        %v290 = vld [vmem:[%s267 + $0x18] sm:$0xff]
        %v291 = vld [vmem:[%s230] sm:$0xff]
        %v292 = vld [vmem:[%s230 + $0x8] sm:$0xff]
        %v293 = vld [vmem:[%s230 + $0x10] sm:$0xff]
        %v294 = vld [vmem:[%s230 + $0x18] sm:$0xff]
        %v295 = vld [vmem:[%s230 + $0x20] sm:$0xff]
        %v296 = vld [vmem:[%s230 + $0x28] sm:$0xff]
        %v297 = vld [vmem:[%s230 + $0x30] sm:$0xff]
        %v298 = vld [vmem:[%s230 + $0x38] sm:$0xff]
        %v299 = vld [vmem:[%s230 + $0x40] sm:$0xff]
        %v300 = vld [vmem:[%s230 + $0x48] sm:$0xff]
        %v301 = vld [vmem:[%s230 + $0x50] sm:$0xff]
        %v302 = vld [vmem:[%s230 + $0x58] sm:$0xff]
        %v303 = vld [vmem:[%s230 + $0x60] sm:$0xff]
        %v304 = vld [vmem:[%s230 + $0x68] sm:$0xff]
        %v305 = vld [vmem:[%s230 + $0x70] sm:$0xff]
        %v306 = vld [vmem:[%s230 + $0x78] sm:$0xff]
        %v307 = vld [vmem:[%s230 + $0x80] sm:$0xff]
        %v308 = vld [vmem:[%s230 + $0x88] sm:$0xff]
        %v309 = vld [vmem:[%s230 + $0x90] sm:$0xff]
        %v310 = vld [vmem:[%s230 + $0x98] sm:$0xff]
        %v311 = vld [vmem:[%s230 + $0xa0] sm:$0xff]
        %v312 = vld [vmem:[%s230 + $0xa8] sm:$0xff]
        %v313 = vld [vmem:[%s230 + $0xb0] sm:$0xff]
        %v314 = vld [vmem:[%s230 + $0xb8] sm:$0xff]
        %v315 = vld [vmem:[%s230 + $0xc0] sm:$0xff]
        %v316 = vld [vmem:[%s230 + $0xc8] sm:$0xff]
        %v317 = vld [vmem:[%s230 + $0xd0] sm:$0xff]
        %v318 = vld [vmem:[%s230 + $0xd8] sm:$0xff]
        %v319 = vld [vmem:[%s230 + $0xe0] sm:$0xff]
        %v320 = vld [vmem:[%s230 + $0xe8] sm:$0xff]
        %v321 = vld [vmem:[%s230 + $0xf0] sm:$0xff]
        %v322 = vld [vmem:[%s230 + $0xf8] sm:$0xff]
        %v323 = vld [vmem:[%s230 + $0x100] sm:$0xff]
        %v324 = vld [vmem:[%s230 + $0x108] sm:$0xff]
        %v325 = vld [vmem:[%s230 + $0x110] sm:$0xff]
        %v326 = vld [vmem:[%s230 + $0x118] sm:$0xff]
        %v327 = vld [vmem:[%s230 + $0x120] sm:$0xff]
        %v328 = vld [vmem:[%s230 + $0x128] sm:$0xff]
        %v329 = vld [vmem:[%s230 + $0x130] sm:$0xff]
        %v330 = vld [vmem:[%s230 + $0x138] sm:$0xff]
        %v331 = vld [vmem:[%s230 + $0x140] sm:$0xff]
        %v332 = vld [vmem:[%s230 + $0x148] sm:$0xff]
        %v333 = vld [vmem:[%s230 + $0x150] sm:$0xff]
        %v334 = vld [vmem:[%s230 + $0x158] sm:$0xff]
        %v335 = vld [vmem:[%s230 + $0x160] sm:$0xff]
        %v336 = vld [vmem:[%s230 + $0x168] sm:$0xff]
        %v337 = vld [vmem:[%s230 + $0x170] sm:$0xff]
        %v338 = vld [vmem:[%s230 + $0x178] sm:$0xff]
        %v339 = vld [vmem:[%s230 + $0x180] sm:$0xff]
        %v340 = vld [vmem:[%s230 + $0x188] sm:$0xff]
        %v341 = vld [vmem:[%s230 + $0x190] sm:$0xff]
        %v342 = vld [vmem:[%s230 + $0x198] sm:$0xff]
        %v343 = vld [vmem:[%s230 + $0x1a0] sm:$0xff]
        %v344 = vld [vmem:[%s230 + $0x1a8] sm:$0xff]
        %v345 = vld [vmem:[%s230 + $0x1b0] sm:$0xff]
        %v346 = vld [vmem:[%s230 + $0x1b8] sm:$0xff]
        %v347 = vld [vmem:[%s230 + $0x1c0] sm:$0xff]
        %v348 = vld [vmem:[%s230 + $0x1c8] sm:$0xff]
        %v349 = vld [vmem:[%s230 + $0x1d0] sm:$0xff]
        %v350 = vld [vmem:[%s230 + $0x1d8] sm:$0xff]
        %v351 = vld [vmem:[%s230 + $0x1e0] sm:$0xff]
        %v352 = vld [vmem:[%s230 + $0x1e8] sm:$0xff]
        %v353 = vld [vmem:[%s230 + $0x1f0] sm:$0xff]
        %v354 = vld [vmem:[%s230 + $0x1f8] sm:$0xff]
        %v355 = vld [vmem:[%s230 + $0x200] sm:$0xff]
        %v356 = vld [vmem:[%s230 + $0x208] sm:$0xff]
        %v357 = vld [vmem:[%s230 + $0x210] sm:$0xff]
        %v358 = vld [vmem:[%s230 + $0x218] sm:$0xff]
        %v359 = vld [vmem:[%s230 + $0x220] sm:$0xff]
        %v360 = vld [vmem:[%s230 + $0x228] sm:$0xff]
        %v361 = vld [vmem:[%s230 + $0x230] sm:$0xff]
        %v362 = vld [vmem:[%s230 + $0x238] sm:$0xff]
        %v363 = vld [vmem:[%s230 + $0x240] sm:$0xff]
        %v364 = vld [vmem:[%s230 + $0x248] sm:$0xff]
        %v365 = vld [vmem:[%s230 + $0x250] sm:$0xff]
        %v366 = vld [vmem:[%s230 + $0x258] sm:$0xff]
        %v367 = vld [vmem:[%s230 + $0x260] sm:$0xff]
        %v368 = vld [vmem:[%s230 + $0x268] sm:$0xff]
        %v369 = vld [vmem:[%s230 + $0x270] sm:$0xff]
        %v370 = vld [vmem:[%s230 + $0x278] sm:$0xff]
        %v371 = vld [vmem:[%s230 + $0x280] sm:$0xff]
        %v372 = vld [vmem:[%s230 + $0x288] sm:$0xff]
        %v373 = vld [vmem:[%s230 + $0x290] sm:$0xff]
        %v374 = vld [vmem:[%s230 + $0x298] sm:$0xff]
        %v375 = vld [vmem:[%s230 + $0x2a0] sm:$0xff]
        %v376 = vld [vmem:[%s230 + $0x2a8] sm:$0xff]
        %v377 = vld [vmem:[%s230 + $0x2b0] sm:$0xff]
        %v378 = vld [vmem:[%s230 + $0x2b8] sm:$0xff]
        %v379 = vld [vmem:[%s230 + $0x2c0] sm:$0xff]
        %v380 = vld [vmem:[%s230 + $0x2c8] sm:$0xff]
        %v381 = vld [vmem:[%s230 + $0x2d0] sm:$0xff]
        %v382 = vld [vmem:[%s230 + $0x2d8] sm:$0xff]
        %v383 = vld [vmem:[%s230 + $0x2e0] sm:$0xff]
        %v384 = vld [vmem:[%s230 + $0x2e8] sm:$0xff]
        %v385 = vld [vmem:[%s230 + $0x2f0] sm:$0xff]
        %v386 = vld [vmem:[%s230 + $0x2f8] sm:$0xff]
        %v387 = vld [vmem:[%s230 + $0x300] sm:$0xff]
        %v388 = vld [vmem:[%s230 + $0x308] sm:$0xff]
        %v389 = vld [vmem:[%s230 + $0x310] sm:$0xff]
        %v390 = vld [vmem:[%s230 + $0x318] sm:$0xff]
        %v391 = vld [vmem:[%s230 + $0x320] sm:$0xff]
        %v392 = vld [vmem:[%s230 + $0x328] sm:$0xff]
        %v393 = vld [vmem:[%s230 + $0x330] sm:$0xff]
        %v394 = vld [vmem:[%s230 + $0x338] sm:$0xff]
        %v395 = vld [vmem:[%s230 + $0x340] sm:$0xff]
        %v396 = vld [vmem:[%s230 + $0x348] sm:$0xff]
        %v397 = vld [vmem:[%s230 + $0x350] sm:$0xff]
        %v398 = vld [vmem:[%s230 + $0x358] sm:$0xff]
        %v399 = vld [vmem:[%s230 + $0x360] sm:$0xff]
        %v400 = vld [vmem:[%s230 + $0x368] sm:$0xff]
        %v401 = vld [vmem:[%s230 + $0x370] sm:$0xff]
        %v402 = vld [vmem:[%s230 + $0x378] sm:$0xff]
        %v403 = vld [vmem:[%s230 + $0x380] sm:$0xff]
        %v404 = vld [vmem:[%s230 + $0x388] sm:$0xff]
        %v405 = vld [vmem:[%s230 + $0x390] sm:$0xff]
        %v406 = vld [vmem:[%s230 + $0x398] sm:$0xff]
        %v407 = vld [vmem:[%s230 + $0x3a0] sm:$0xff]
        %v408 = vld [vmem:[%s230 + $0x3a8] sm:$0xff]
        %v409 = vld [vmem:[%s230 + $0x3b0] sm:$0xff]
        %v410 = vld [vmem:[%s230 + $0x3b8] sm:$0xff]
        %v411 = vld [vmem:[%s230 + $0x3c0] sm:$0xff]
        %v412 = vld [vmem:[%s230 + $0x3c8] sm:$0xff]
        %v413 = vld [vmem:[%s230 + $0x3d0] sm:$0xff]
        %v414 = vld [vmem:[%s230 + $0x3d8] sm:$0xff]
        %v415 = vld [vmem:[%s230 + $0x3e0] sm:$0xff]
        %v416 = vld [vmem:[%s230 + $0x3e8] sm:$0xff]
        %v417 = vld [vmem:[%s230 + $0x3f0] sm:$0xff]
        %v418 = vld [vmem:[%s230 + $0x3f8] sm:$0xff]
        %v419 = vunpack.c.l.s8.bf16 %v291
        %v420 = vunpack.c.h.s8.bf16 %v291
        %v421 = vunpack.c.l.s8.bf16 %v292
        %v422 = vunpack.c.h.s8.bf16 %v292
        %v423 = vunpack.c.l.s8.bf16 %v293
        %v424 = vunpack.c.h.s8.bf16 %v293
        %v425 = vunpack.c.l.s8.bf16 %v294
        %v426 = vunpack.c.h.s8.bf16 %v294
        %v427 = vunpack.c.l.s8.bf16 %v295
        %v428 = vunpack.c.h.s8.bf16 %v295
        %v429 = vunpack.c.l.s8.bf16 %v296
        %v430 = vunpack.c.h.s8.bf16 %v296
        %v431 = vunpack.c.l.s8.bf16 %v297
        %v432 = vunpack.c.h.s8.bf16 %v297
        %v433 = vunpack.c.l.s8.bf16 %v298
        %v434 = vunpack.c.h.s8.bf16 %v298
        %v435 = vunpack.c.l.s8.bf16 %v299
        %v436 = vunpack.c.h.s8.bf16 %v299
        %v437 = vunpack.c.l.s8.bf16 %v300
        %v438 = vunpack.c.h.s8.bf16 %v300
        %v439 = vunpack.c.l.s8.bf16 %v301
        %v440 = vunpack.c.h.s8.bf16 %v301
        %v441 = vunpack.c.l.s8.bf16 %v302
        %v442 = vunpack.c.h.s8.bf16 %v302
        %v443 = vunpack.c.l.s8.bf16 %v303
        %v444 = vunpack.c.h.s8.bf16 %v303
        %v445 = vunpack.c.l.s8.bf16 %v304
        %v446 = vunpack.c.h.s8.bf16 %v304
        %v447 = vunpack.c.l.s8.bf16 %v305
        %v448 = vunpack.c.h.s8.bf16 %v305
        %v449 = vunpack.c.l.s8.bf16 %v306
        %v450 = vunpack.c.h.s8.bf16 %v306
        %v451 = vunpack.c.l.s8.bf16 %v307
        %v452 = vunpack.c.h.s8.bf16 %v307
        %v453 = vunpack.c.l.s8.bf16 %v308
        %v454 = vunpack.c.h.s8.bf16 %v308
        %v455 = vunpack.c.l.s8.bf16 %v309
        %v456 = vunpack.c.h.s8.bf16 %v309
        %v457 = vunpack.c.l.s8.bf16 %v310
        %v458 = vunpack.c.h.s8.bf16 %v310
        %v459 = vunpack.c.l.s8.bf16 %v311
        %v460 = vunpack.c.h.s8.bf16 %v311
        %v461 = vunpack.c.l.s8.bf16 %v312
        %v462 = vunpack.c.h.s8.bf16 %v312
        %v463 = vunpack.c.l.s8.bf16 %v313
        %v464 = vunpack.c.h.s8.bf16 %v313
        %v465 = vunpack.c.l.s8.bf16 %v314
        %v466 = vunpack.c.h.s8.bf16 %v314
        %v467 = vunpack.c.l.s8.bf16 %v315
        %v468 = vunpack.c.h.s8.bf16 %v315
        %v469 = vunpack.c.l.s8.bf16 %v316
        %v470 = vunpack.c.h.s8.bf16 %v316
        %v471 = vunpack.c.l.s8.bf16 %v317
        %v472 = vunpack.c.h.s8.bf16 %v317
        %v473 = vunpack.c.l.s8.bf16 %v318
        %v474 = vunpack.c.h.s8.bf16 %v318
        %v475 = vunpack.c.l.s8.bf16 %v319
        %v476 = vunpack.c.h.s8.bf16 %v319
        %v477 = vunpack.c.l.s8.bf16 %v320
        %v478 = vunpack.c.h.s8.bf16 %v320
        %v479 = vunpack.c.l.s8.bf16 %v321
        %v480 = vunpack.c.h.s8.bf16 %v321
        %v481 = vunpack.c.l.s8.bf16 %v322
        %v482 = vunpack.c.h.s8.bf16 %v322
        %v483 = vunpack.c.l.s8.bf16 %v323
        %v484 = vunpack.c.h.s8.bf16 %v323
        %v485 = vunpack.c.l.s8.bf16 %v324
        %v486 = vunpack.c.h.s8.bf16 %v324
        %v487 = vunpack.c.l.s8.bf16 %v325
        %v488 = vunpack.c.h.s8.bf16 %v325
        %v489 = vunpack.c.l.s8.bf16 %v326
        %v490 = vunpack.c.h.s8.bf16 %v326
        %v491 = vunpack.c.l.s8.bf16 %v327
        %v492 = vunpack.c.h.s8.bf16 %v327
        %v493 = vunpack.c.l.s8.bf16 %v328
        %v494 = vunpack.c.h.s8.bf16 %v328
        %v495 = vunpack.c.l.s8.bf16 %v329
        %v496 = vunpack.c.h.s8.bf16 %v329
        %v497 = vunpack.c.l.s8.bf16 %v330
        %v498 = vunpack.c.h.s8.bf16 %v330
        %v499 = vunpack.c.l.s8.bf16 %v331
        %v500 = vunpack.c.h.s8.bf16 %v331
        %v501 = vunpack.c.l.s8.bf16 %v332
        %v502 = vunpack.c.h.s8.bf16 %v332
        %v503 = vunpack.c.l.s8.bf16 %v333
        %v504 = vunpack.c.h.s8.bf16 %v333
        %v505 = vunpack.c.l.s8.bf16 %v334
        %v506 = vunpack.c.h.s8.bf16 %v334
        %v507 = vunpack.c.l.s8.bf16 %v335
        %v508 = vunpack.c.h.s8.bf16 %v335
        %v509 = vunpack.c.l.s8.bf16 %v336
        %v510 = vunpack.c.h.s8.bf16 %v336
        %v511 = vunpack.c.l.s8.bf16 %v337
        %v512 = vunpack.c.h.s8.bf16 %v337
        %v513 = vunpack.c.l.s8.bf16 %v338
        %v514 = vunpack.c.h.s8.bf16 %v338
        %v515 = vunpack.c.l.s8.bf16 %v339
        %v516 = vunpack.c.h.s8.bf16 %v339
        %v517 = vunpack.c.l.s8.bf16 %v340
        %v518 = vunpack.c.h.s8.bf16 %v340
        %v519 = vunpack.c.l.s8.bf16 %v341
        %v520 = vunpack.c.h.s8.bf16 %v341
        %v521 = vunpack.c.l.s8.bf16 %v342
        %v522 = vunpack.c.h.s8.bf16 %v342
        %v523 = vunpack.c.l.s8.bf16 %v343
        %v524 = vunpack.c.h.s8.bf16 %v343
        %v525 = vunpack.c.l.s8.bf16 %v344
        %v526 = vunpack.c.h.s8.bf16 %v344
        %v527 = vunpack.c.l.s8.bf16 %v345
        %v528 = vunpack.c.h.s8.bf16 %v345
        %v529 = vunpack.c.l.s8.bf16 %v346
        %v530 = vunpack.c.h.s8.bf16 %v346
        %v531 = vunpack.c.l.s8.bf16 %v347
        %v532 = vunpack.c.h.s8.bf16 %v347
        %v533 = vunpack.c.l.s8.bf16 %v348
        %v534 = vunpack.c.h.s8.bf16 %v348
        %v535 = vunpack.c.l.s8.bf16 %v349
        %v536 = vunpack.c.h.s8.bf16 %v349
        %v537 = vunpack.c.l.s8.bf16 %v350
        %v538 = vunpack.c.h.s8.bf16 %v350
        %v539 = vunpack.c.l.s8.bf16 %v351
        %v540 = vunpack.c.h.s8.bf16 %v351
        %v541 = vunpack.c.l.s8.bf16 %v352
        %v542 = vunpack.c.h.s8.bf16 %v352
        %v543 = vunpack.c.l.s8.bf16 %v353
        %v544 = vunpack.c.h.s8.bf16 %v353
        %v545 = vunpack.c.l.s8.bf16 %v354
        %v546 = vunpack.c.h.s8.bf16 %v354
        %v547 = vunpack.c.l.s8.bf16 %v355
        %v548 = vunpack.c.h.s8.bf16 %v355
        %v549 = vunpack.c.l.s8.bf16 %v356
        %v550 = vunpack.c.h.s8.bf16 %v356
        %v551 = vunpack.c.l.s8.bf16 %v357
        %v552 = vunpack.c.h.s8.bf16 %v357
        %v553 = vunpack.c.l.s8.bf16 %v358
        %v554 = vunpack.c.h.s8.bf16 %v358
        %v555 = vunpack.c.l.s8.bf16 %v359
        %v556 = vunpack.c.h.s8.bf16 %v359
        %v557 = vunpack.c.l.s8.bf16 %v360
        %v558 = vunpack.c.h.s8.bf16 %v360
        %v559 = vunpack.c.l.s8.bf16 %v361
        %v560 = vunpack.c.h.s8.bf16 %v361
        %v561 = vunpack.c.l.s8.bf16 %v362
        %v562 = vunpack.c.h.s8.bf16 %v362
        %v563 = vunpack.c.l.s8.bf16 %v363
        %v564 = vunpack.c.h.s8.bf16 %v363
        %v565 = vunpack.c.l.s8.bf16 %v364
        %v566 = vunpack.c.h.s8.bf16 %v364
        %v567 = vunpack.c.l.s8.bf16 %v365
        %v568 = vunpack.c.h.s8.bf16 %v365
        %v569 = vunpack.c.l.s8.bf16 %v366
        %v570 = vunpack.c.h.s8.bf16 %v366
        %v571 = vunpack.c.l.s8.bf16 %v367
        %v572 = vunpack.c.h.s8.bf16 %v367
        %v573 = vunpack.c.l.s8.bf16 %v368
        %v574 = vunpack.c.h.s8.bf16 %v368
        %v575 = vunpack.c.l.s8.bf16 %v369
        %v576 = vunpack.c.h.s8.bf16 %v369
        %v577 = vunpack.c.l.s8.bf16 %v370
        %v578 = vunpack.c.h.s8.bf16 %v370
        %v579 = vunpack.c.l.s8.bf16 %v371
        %v580 = vunpack.c.h.s8.bf16 %v371
        %v581 = vunpack.c.l.s8.bf16 %v372
        %v582 = vunpack.c.h.s8.bf16 %v372
        %v583 = vunpack.c.l.s8.bf16 %v373
        %v584 = vunpack.c.h.s8.bf16 %v373
        %v585 = vunpack.c.l.s8.bf16 %v374
        %v586 = vunpack.c.h.s8.bf16 %v374
        %v587 = vunpack.c.l.s8.bf16 %v375
        %v588 = vunpack.c.h.s8.bf16 %v375
        %v589 = vunpack.c.l.s8.bf16 %v376
        %v590 = vunpack.c.h.s8.bf16 %v376
        %v591 = vunpack.c.l.s8.bf16 %v377
        %v592 = vunpack.c.h.s8.bf16 %v377
        %v593 = vunpack.c.l.s8.bf16 %v378
        %v594 = vunpack.c.h.s8.bf16 %v378
        %v595 = vunpack.c.l.s8.bf16 %v379
        %v596 = vunpack.c.h.s8.bf16 %v379
        %v597 = vunpack.c.l.s8.bf16 %v380
        %v598 = vunpack.c.h.s8.bf16 %v380
        %v599 = vunpack.c.l.s8.bf16 %v381
        %v600 = vunpack.c.h.s8.bf16 %v381
        %v601 = vunpack.c.l.s8.bf16 %v382
        %v602 = vunpack.c.h.s8.bf16 %v382
        %v603 = vunpack.c.l.s8.bf16 %v383
        %v604 = vunpack.c.h.s8.bf16 %v383
        %v605 = vunpack.c.l.s8.bf16 %v384
        %v606 = vunpack.c.h.s8.bf16 %v384
        %v607 = vunpack.c.l.s8.bf16 %v385
        %v608 = vunpack.c.h.s8.bf16 %v385
        %v609 = vunpack.c.l.s8.bf16 %v386
        %v610 = vunpack.c.h.s8.bf16 %v386
        %v611 = vunpack.c.l.s8.bf16 %v387
        %v612 = vunpack.c.h.s8.bf16 %v387
        %v613 = vunpack.c.l.s8.bf16 %v388
        %v614 = vunpack.c.h.s8.bf16 %v388
        %v615 = vunpack.c.l.s8.bf16 %v389
        %v616 = vunpack.c.h.s8.bf16 %v389
        %v617 = vunpack.c.l.s8.bf16 %v390
        %v618 = vunpack.c.h.s8.bf16 %v390
        %v619 = vunpack.c.l.s8.bf16 %v391
        %v620 = vunpack.c.h.s8.bf16 %v391
        %v621 = vunpack.c.l.s8.bf16 %v392
        %v622 = vunpack.c.h.s8.bf16 %v392
        %v623 = vunpack.c.l.s8.bf16 %v393
        %v624 = vunpack.c.h.s8.bf16 %v393
        %v625 = vunpack.c.l.s8.bf16 %v394
        %v626 = vunpack.c.h.s8.bf16 %v394
        %v627 = vunpack.c.l.s8.bf16 %v395
        %v628 = vunpack.c.h.s8.bf16 %v395
        %v629 = vunpack.c.l.s8.bf16 %v396
        %v630 = vunpack.c.h.s8.bf16 %v396
        %v631 = vunpack.c.l.s8.bf16 %v397
        %v632 = vunpack.c.h.s8.bf16 %v397
        %v633 = vunpack.c.l.s8.bf16 %v398
        %v634 = vunpack.c.h.s8.bf16 %v398
        %v635 = vunpack.c.l.s8.bf16 %v399
        %v636 = vunpack.c.h.s8.bf16 %v399
        %v637 = vunpack.c.l.s8.bf16 %v400
        %v638 = vunpack.c.h.s8.bf16 %v400
        %v639 = vunpack.c.l.s8.bf16 %v401
        %v640 = vunpack.c.h.s8.bf16 %v401
        %v641 = vunpack.c.l.s8.bf16 %v402
        %v642 = vunpack.c.h.s8.bf16 %v402
        %v643 = vunpack.c.l.s8.bf16 %v403
        %v644 = vunpack.c.h.s8.bf16 %v403
        %v645 = vunpack.c.l.s8.bf16 %v404
        %v646 = vunpack.c.h.s8.bf16 %v404
        %v647 = vunpack.c.l.s8.bf16 %v405
        %v648 = vunpack.c.h.s8.bf16 %v405
        %v649 = vunpack.c.l.s8.bf16 %v406
        %v650 = vunpack.c.h.s8.bf16 %v406
        %v651 = vunpack.c.l.s8.bf16 %v407
        %v652 = vunpack.c.h.s8.bf16 %v407
        %v653 = vunpack.c.l.s8.bf16 %v408
        %v654 = vunpack.c.h.s8.bf16 %v408
        %v655 = vunpack.c.l.s8.bf16 %v409
        %v656 = vunpack.c.h.s8.bf16 %v409
        %v657 = vunpack.c.l.s8.bf16 %v410
        %v658 = vunpack.c.h.s8.bf16 %v410
        %v659 = vunpack.c.l.s8.bf16 %v411
        %v660 = vunpack.c.h.s8.bf16 %v411
        %v661 = vunpack.c.l.s8.bf16 %v412
        %v662 = vunpack.c.h.s8.bf16 %v412
        %v663 = vunpack.c.l.s8.bf16 %v413
        %v664 = vunpack.c.h.s8.bf16 %v413
        %v665 = vunpack.c.l.s8.bf16 %v414
        %v666 = vunpack.c.h.s8.bf16 %v414
        %v667 = vunpack.c.l.s8.bf16 %v415
        %v668 = vunpack.c.h.s8.bf16 %v415
        %v669 = vunpack.c.l.s8.bf16 %v416
        %v670 = vunpack.c.h.s8.bf16 %v416
        %v671 = vunpack.c.l.s8.bf16 %v417
        %v672 = vunpack.c.h.s8.bf16 %v417
        %v673 = vunpack.c.l.s8.bf16 %v418
        %v674 = vunpack.c.h.s8.bf16 %v418
        %v679 = vcombine.high %v287, %v287
        %v681 = vunpack.c.l.s4 1966171168
        %v682 = vunpack.c.0.s8 %v681
        %v683 = vlaneseq
        %v684 = vshrl.u32 %v683, 7
        %v685 = vsub.s32 %v682, %v684
        %v686 = vrot.slane %v287, %v685
        %v688 = vunpack.c.l.s4 1966171168
        %v689 = vunpack.c.0.s8 %v688
        %v690 = vlaneseq
        %v691 = vshrl.u32 %v690, 7
        %v692 = vsub.s32 %v689, %v691
        %v693 = vrot.slane %v679, %v692
        %v694 = vcombine.high %v686, %v686
        %v695 = vcombine.high %v693, %v693
        %v697 = vunpack.c.l.s4 1966171168
        %v698 = vunpack.c.0.s8 %v697
        %v699 = vlaneseq
        %v700 = vshrl.u32 %v699, 7
        %v701 = vsub.s32 %v698, %v700
        %v702 = vrot.slane %v686, %v701
        %v704 = vunpack.c.l.s4 1966171168
        %v705 = vunpack.c.0.s8 %v704
        %v706 = vlaneseq
        %v707 = vshrl.u32 %v706, 7
        %v708 = vsub.s32 %v705, %v707
        %v709 = vrot.slane %v693, %v708
        %v711 = vunpack.c.l.s4 1966171168
        %v712 = vunpack.c.0.s8 %v711
        %v713 = vlaneseq
        %v714 = vshrl.u32 %v713, 7
        %v715 = vsub.s32 %v712, %v714
        %v716 = vrot.slane %v694, %v715
        %v718 = vunpack.c.l.s4 1966171168
        %v719 = vunpack.c.0.s8 %v718
        %v720 = vlaneseq
        %v721 = vshrl.u32 %v720, 7
        %v722 = vsub.s32 %v719, %v721
        %v723 = vrot.slane %v695, %v722
        %v724 = vcombine.high %v702, %v702
        %v725 = vcombine.high %v709, %v709
        %v726 = vcombine.high %v716, %v716
        %v727 = vcombine.high %v723, %v723
        %v728 = vcombine.high %v288, %v288
        %v730 = vunpack.c.l.s4 1966171168
        %v731 = vunpack.c.0.s8 %v730
        %v732 = vlaneseq
        %v733 = vshrl.u32 %v732, 7
        %v734 = vsub.s32 %v731, %v733
        %v735 = vrot.slane %v288, %v734
        %v737 = vunpack.c.l.s4 1966171168
        %v738 = vunpack.c.0.s8 %v737
        %v739 = vlaneseq
        %v740 = vshrl.u32 %v739, 7
        %v741 = vsub.s32 %v738, %v740
        %v742 = vrot.slane %v728, %v741
        %v743 = vcombine.high %v735, %v735
        %v744 = vcombine.high %v742, %v742
        %v746 = vunpack.c.l.s4 1966171168
        %v747 = vunpack.c.0.s8 %v746
        %v748 = vlaneseq
        %v749 = vshrl.u32 %v748, 7
        %v750 = vsub.s32 %v747, %v749
        %v751 = vrot.slane %v735, %v750
        %v753 = vunpack.c.l.s4 1966171168
        %v754 = vunpack.c.0.s8 %v753
        %v755 = vlaneseq
        %v756 = vshrl.u32 %v755, 7
        %v757 = vsub.s32 %v754, %v756
        %v758 = vrot.slane %v742, %v757
        %v760 = vunpack.c.l.s4 1966171168
        %v761 = vunpack.c.0.s8 %v760
        %v762 = vlaneseq
        %v763 = vshrl.u32 %v762, 7
        %v764 = vsub.s32 %v761, %v763
        %v765 = vrot.slane %v743, %v764
        %v767 = vunpack.c.l.s4 1966171168
        %v768 = vunpack.c.0.s8 %v767
        %v769 = vlaneseq
        %v770 = vshrl.u32 %v769, 7
        %v771 = vsub.s32 %v768, %v770
        %v772 = vrot.slane %v744, %v771
        %v773 = vcombine.high %v751, %v751
        %v774 = vcombine.high %v758, %v758
        %v775 = vcombine.high %v765, %v765
        %v776 = vcombine.high %v772, %v772
        %v777 = vcombine.high %v289, %v289
        %v779 = vunpack.c.l.s4 1966171168
        %v780 = vunpack.c.0.s8 %v779
        %v781 = vlaneseq
        %v782 = vshrl.u32 %v781, 7
        %v783 = vsub.s32 %v780, %v782
        %v784 = vrot.slane %v289, %v783
        %v786 = vunpack.c.l.s4 1966171168
        %v787 = vunpack.c.0.s8 %v786
        %v788 = vlaneseq
        %v789 = vshrl.u32 %v788, 7
        %v790 = vsub.s32 %v787, %v789
        %v791 = vrot.slane %v777, %v790
        %v792 = vcombine.high %v784, %v784
        %v793 = vcombine.high %v791, %v791
        %v795 = vunpack.c.l.s4 1966171168
        %v796 = vunpack.c.0.s8 %v795
        %v797 = vlaneseq
        %v798 = vshrl.u32 %v797, 7
        %v799 = vsub.s32 %v796, %v798
        %v800 = vrot.slane %v784, %v799
        %v802 = vunpack.c.l.s4 1966171168
        %v803 = vunpack.c.0.s8 %v802
        %v804 = vlaneseq
        %v805 = vshrl.u32 %v804, 7
        %v806 = vsub.s32 %v803, %v805
        %v807 = vrot.slane %v791, %v806
        %v809 = vunpack.c.l.s4 1966171168
        %v810 = vunpack.c.0.s8 %v809
        %v811 = vlaneseq
        %v812 = vshrl.u32 %v811, 7
        %v813 = vsub.s32 %v810, %v812
        %v814 = vrot.slane %v792, %v813
        %v816 = vunpack.c.l.s4 1966171168
        %v817 = vunpack.c.0.s8 %v816
        %v818 = vlaneseq
        %v819 = vshrl.u32 %v818, 7
        %v820 = vsub.s32 %v817, %v819
        %v821 = vrot.slane %v793, %v820
        %v822 = vcombine.high %v800, %v800
        %v823 = vcombine.high %v807, %v807
        %v824 = vcombine.high %v814, %v814
        %v825 = vcombine.high %v821, %v821
        %v826 = vcombine.high %v290, %v290
        %v828 = vunpack.c.l.s4 1966171168
        %v829 = vunpack.c.0.s8 %v828
        %v830 = vlaneseq
        %v831 = vshrl.u32 %v830, 7
        %v832 = vsub.s32 %v829, %v831
        %v833 = vrot.slane %v290, %v832
        %v835 = vunpack.c.l.s4 1966171168
        %v836 = vunpack.c.0.s8 %v835
        %v837 = vlaneseq
        %v838 = vshrl.u32 %v837, 7
        %v839 = vsub.s32 %v836, %v838
        %v840 = vrot.slane %v826, %v839
        %v841 = vcombine.high %v833, %v833
        %v842 = vcombine.high %v840, %v840
        %v844 = vunpack.c.l.s4 1966171168
        %v845 = vunpack.c.0.s8 %v844
        %v846 = vlaneseq
        %v847 = vshrl.u32 %v846, 7
        %v848 = vsub.s32 %v845, %v847
        %v849 = vrot.slane %v833, %v848
        %v851 = vunpack.c.l.s4 1966171168
        %v852 = vunpack.c.0.s8 %v851
        %v853 = vlaneseq
        %v854 = vshrl.u32 %v853, 7
        %v855 = vsub.s32 %v852, %v854
        %v856 = vrot.slane %v840, %v855
        %v858 = vunpack.c.l.s4 1966171168
        %v859 = vunpack.c.0.s8 %v858
        %v860 = vlaneseq
        %v861 = vshrl.u32 %v860, 7
        %v862 = vsub.s32 %v859, %v861
        %v863 = vrot.slane %v841, %v862
        %v865 = vunpack.c.l.s4 1966171168
        %v866 = vunpack.c.0.s8 %v865
        %v867 = vlaneseq
        %v868 = vshrl.u32 %v867, 7
        %v869 = vsub.s32 %v866, %v868
        %v870 = vrot.slane %v842, %v869
        %v871 = vcombine.high %v849, %v849
        %v872 = vcombine.high %v856, %v856
        %v873 = vcombine.high %v863, %v863
        %v874 = vcombine.high %v870, %v870
        %907 = vmatprep.subr.bf16.mxu0 0
        %908 = vmatpush1.bf16.msra.mxu0 %v419
        %909 = vmatprep.subr.bf16.mxu0 0
        %910 = vmatpush1.bf16.msra.mxu0 %v420
        %911 = vmatprep.subr.bf16.mxu0 0
        %912 = vmatpush1.bf16.msra.mxu0 %v421
        %913 = vmatprep.subr.bf16.mxu0 0
        %914 = vmatpush1.bf16.msra.mxu0 %v422
        %915 = vmatprep.subr.bf16.mxu0 0
        %916 = vmatpush1.bf16.msra.mxu0 %v423
        %917 = vmatprep.subr.bf16.mxu0 0
        %918 = vmatpush1.bf16.msra.mxu0 %v424
        %919 = vmatprep.subr.bf16.mxu0 0
        %920 = vmatpush1.bf16.msra.mxu0 %v425
        %921 = vmatprep.subr.bf16.mxu0 0
        %922 = vmatpush1.bf16.msra.mxu0 %v426
        %923 = vmatprep.subr.bf16.mxu0 0
        %924 = vmatpush1.bf16.msra.mxu0 %v427
        %925 = vmatprep.subr.bf16.mxu0 0
        %926 = vmatpush1.bf16.msra.mxu0 %v428
        %927 = vmatprep.subr.bf16.mxu0 0
        %928 = vmatpush1.bf16.msra.mxu0 %v429
        %929 = vmatprep.subr.bf16.mxu0 0
        %930 = vmatpush1.bf16.msra.mxu0 %v430
        %931 = vmatprep.subr.bf16.mxu0 0
        %932 = vmatpush1.bf16.msra.mxu0 %v431
        %933 = vmatprep.subr.bf16.mxu0 0
        %934 = vmatpush1.bf16.msra.mxu0 %v432
        %935 = vmatprep.subr.bf16.mxu0 0
        %936 = vmatpush1.bf16.msra.mxu0 %v433
        %937 = vmatprep.subr.bf16.mxu0 0
        %938 = vmatpush1.bf16.msra.mxu0 %v434
        %939 = vmatprep.mubr.bf16.mxu0 %v716
        %940 = vmatmul.mubr.bf16.gmra.mrb[0].mxu0 %v702
        %v941 = vpop.f32.mrb[0].mxu0
        %v942 = vadd.f32 0.0, %v941
        %v943 = vpop.f32.mrb[0].mxu0
        %v944 = vpop.f32.mrb[0].mxu0
        %v945 = vpop.f32.mrb[0].mxu0
        %946 = vdwg.mxu0
        %947 = vmatprep.subr.bf16.mxu0 0
        %948 = vmatpush1.bf16.msra.mxu0 %v435
        %949 = vmatprep.subr.bf16.mxu0 0
        %950 = vmatpush1.bf16.msra.mxu0 %v436
        %951 = vmatprep.subr.bf16.mxu0 0
        %952 = vmatpush1.bf16.msra.mxu0 %v437
        %953 = vmatprep.subr.bf16.mxu0 0
        %954 = vmatpush1.bf16.msra.mxu0 %v438
        %955 = vmatprep.subr.bf16.mxu0 0
        %956 = vmatpush1.bf16.msra.mxu0 %v439
        %957 = vmatprep.subr.bf16.mxu0 0
        %958 = vmatpush1.bf16.msra.mxu0 %v440
        %959 = vmatprep.subr.bf16.mxu0 0
        %960 = vmatpush1.bf16.msra.mxu0 %v441
        %961 = vmatprep.subr.bf16.mxu0 0
        %962 = vmatpush1.bf16.msra.mxu0 %v442
        %963 = vmatprep.subr.bf16.mxu0 0
        %964 = vmatpush1.bf16.msra.mxu0 %v443
        %965 = vmatprep.subr.bf16.mxu0 0
        %966 = vmatpush1.bf16.msra.mxu0 %v444
        %967 = vmatprep.subr.bf16.mxu0 0
        %968 = vmatpush1.bf16.msra.mxu0 %v445
        %969 = vmatprep.subr.bf16.mxu0 0
        %970 = vmatpush1.bf16.msra.mxu0 %v446
        %971 = vmatprep.subr.bf16.mxu0 0
        %972 = vmatpush1.bf16.msra.mxu0 %v447
        %973 = vmatprep.subr.bf16.mxu0 0
        %974 = vmatpush1.bf16.msra.mxu0 %v448
        %975 = vmatprep.subr.bf16.mxu0 0
        %976 = vmatpush1.bf16.msra.mxu0 %v449
        %977 = vmatprep.subr.bf16.mxu0 0
        %978 = vmatpush1.bf16.msra.mxu0 %v450
        %979 = vmatprep.mubr.bf16.mxu0 %v726
        %980 = vmatmul.mubr.bf16.gmra.mrb[0].mxu0 %v724
        %v981 = vpop.f32.mrb[0].mxu0
        %v982 = vadd.f32 %v942, %v981
        %v983 = vpop.f32.mrb[0].mxu0
        %v984 = vpop.f32.mrb[0].mxu0
        %v985 = vpop.f32.mrb[0].mxu0
        %986 = vdwg.mxu0
        %987 = vmatprep.subr.bf16.mxu0 0
        %988 = vmatpush1.bf16.msra.mxu0 %v451
        %989 = vmatprep.subr.bf16.mxu0 0
        %990 = vmatpush1.bf16.msra.mxu0 %v452
        %991 = vmatprep.subr.bf16.mxu0 0
        %992 = vmatpush1.bf16.msra.mxu0 %v453
        %993 = vmatprep.subr.bf16.mxu0 0
        %994 = vmatpush1.bf16.msra.mxu0 %v454
        %995 = vmatprep.subr.bf16.mxu0 0
        %996 = vmatpush1.bf16.msra.mxu0 %v455
        %997 = vmatprep.subr.bf16.mxu0 0
        %998 = vmatpush1.bf16.msra.mxu0 %v456
        %999 = vmatprep.subr.bf16.mxu0 0
        %1000 = vmatpush1.bf16.msra.mxu0 %v457
        %1001 = vmatprep.subr.bf16.mxu0 0
        %1002 = vmatpush1.bf16.msra.mxu0 %v458
        %1003 = vmatprep.subr.bf16.mxu0 0
        %1004 = vmatpush1.bf16.msra.mxu0 %v459
        %1005 = vmatprep.subr.bf16.mxu0 0
        %1006 = vmatpush1.bf16.msra.mxu0 %v460
        %1007 = vmatprep.subr.bf16.mxu0 0
        %1008 = vmatpush1.bf16.msra.mxu0 %v461
        %1009 = vmatprep.subr.bf16.mxu0 0
        %1010 = vmatpush1.bf16.msra.mxu0 %v462
        %1011 = vmatprep.subr.bf16.mxu0 0
        %1012 = vmatpush1.bf16.msra.mxu0 %v463
        %1013 = vmatprep.subr.bf16.mxu0 0
        %1014 = vmatpush1.bf16.msra.mxu0 %v464
        %1015 = vmatprep.subr.bf16.mxu0 0
        %1016 = vmatpush1.bf16.msra.mxu0 %v465
        %1017 = vmatprep.subr.bf16.mxu0 0
        %1018 = vmatpush1.bf16.msra.mxu0 %v466
        %1019 = vmatprep.mubr.bf16.mxu0 %v723
        %1020 = vmatmul.mubr.bf16.gmra.mrb[0].mxu0 %v709
        %v1021 = vpop.f32.mrb[0].mxu0
        %v1022 = vadd.f32 %v982, %v1021
        %v1023 = vpop.f32.mrb[0].mxu0
        %v1024 = vpop.f32.mrb[0].mxu0
        %v1025 = vpop.f32.mrb[0].mxu0
        %1026 = vdwg.mxu0
        %1027 = vmatprep.subr.bf16.mxu0 0
        %1028 = vmatpush1.bf16.msra.mxu0 %v467
        %1029 = vmatprep.subr.bf16.mxu0 0
        %1030 = vmatpush1.bf16.msra.mxu0 %v468
        %1031 = vmatprep.subr.bf16.mxu0 0
        %1032 = vmatpush1.bf16.msra.mxu0 %v469
        %1033 = vmatprep.subr.bf16.mxu0 0
        %1034 = vmatpush1.bf16.msra.mxu0 %v470
        %1035 = vmatprep.subr.bf16.mxu0 0
        %1036 = vmatpush1.bf16.msra.mxu0 %v471
        %1037 = vmatprep.subr.bf16.mxu0 0
        %1038 = vmatpush1.bf16.msra.mxu0 %v472
        %1039 = vmatprep.subr.bf16.mxu0 0
        %1040 = vmatpush1.bf16.msra.mxu0 %v473
        %1041 = vmatprep.subr.bf16.mxu0 0
        %1042 = vmatpush1.bf16.msra.mxu0 %v474
        %1043 = vmatprep.subr.bf16.mxu0 0
        %1044 = vmatpush1.bf16.msra.mxu0 %v475
        %1045 = vmatprep.subr.bf16.mxu0 0
        %1046 = vmatpush1.bf16.msra.mxu0 %v476
        %1047 = vmatprep.subr.bf16.mxu0 0
        %1048 = vmatpush1.bf16.msra.mxu0 %v477
        %1049 = vmatprep.subr.bf16.mxu0 0
        %1050 = vmatpush1.bf16.msra.mxu0 %v478
        %1051 = vmatprep.subr.bf16.mxu0 0
        %1052 = vmatpush1.bf16.msra.mxu0 %v479
        %1053 = vmatprep.subr.bf16.mxu0 0
        %1054 = vmatpush1.bf16.msra.mxu0 %v480
        %1055 = vmatprep.subr.bf16.mxu0 0
        %1056 = vmatpush1.bf16.msra.mxu0 %v481
        %1057 = vmatprep.subr.bf16.mxu0 0
        %1058 = vmatpush1.bf16.msra.mxu0 %v482
        %1059 = vmatprep.mubr.bf16.mxu0 %v727
        %1060 = vmatmul.mubr.bf16.gmra.mrb[0].mxu0 %v725
        %v1061 = vpop.f32.mrb[0].mxu0
        %v1062 = vadd.f32 %v1022, %v1061
        %v1063 = vpop.f32.mrb[0].mxu0
        %v1064 = vpop.f32.mrb[0].mxu0
        %v1065 = vpop.f32.mrb[0].mxu0
        %1066 = vdwg.mxu0
        %1067 = vmatprep.subr.bf16.mxu0 0
        %1068 = vmatpush1.bf16.msra.mxu0 %v483
        %1069 = vmatprep.subr.bf16.mxu0 0
        %1070 = vmatpush1.bf16.msra.mxu0 %v484
        %1071 = vmatprep.subr.bf16.mxu0 0
        %1072 = vmatpush1.bf16.msra.mxu0 %v485
        %1073 = vmatprep.subr.bf16.mxu0 0
        %1074 = vmatpush1.bf16.msra.mxu0 %v486
        %1075 = vmatprep.subr.bf16.mxu0 0
        %1076 = vmatpush1.bf16.msra.mxu0 %v487
        %1077 = vmatprep.subr.bf16.mxu0 0
        %1078 = vmatpush1.bf16.msra.mxu0 %v488
        %1079 = vmatprep.subr.bf16.mxu0 0
        %1080 = vmatpush1.bf16.msra.mxu0 %v489
        %1081 = vmatprep.subr.bf16.mxu0 0
        %1082 = vmatpush1.bf16.msra.mxu0 %v490
        %1083 = vmatprep.subr.bf16.mxu0 0
        %1084 = vmatpush1.bf16.msra.mxu0 %v491
        %1085 = vmatprep.subr.bf16.mxu0 0
        %1086 = vmatpush1.bf16.msra.mxu0 %v492
        %1087 = vmatprep.subr.bf16.mxu0 0
        %1088 = vmatpush1.bf16.msra.mxu0 %v493
        %1089 = vmatprep.subr.bf16.mxu0 0
        %1090 = vmatpush1.bf16.msra.mxu0 %v494
        %1091 = vmatprep.subr.bf16.mxu0 0
        %1092 = vmatpush1.bf16.msra.mxu0 %v495
        %1093 = vmatprep.subr.bf16.mxu0 0
        %1094 = vmatpush1.bf16.msra.mxu0 %v496
        %1095 = vmatprep.subr.bf16.mxu0 0
        %1096 = vmatpush1.bf16.msra.mxu0 %v497
        %1097 = vmatprep.subr.bf16.mxu0 0
        %1098 = vmatpush1.bf16.msra.mxu0 %v498
        %1099 = vmatprep.mubr.bf16.mxu0 %v765
        %1100 = vmatmul.mubr.bf16.gmra.mrb[0].mxu0 %v751
        %v1101 = vpop.f32.mrb[0].mxu0
        %v1102 = vadd.f32 %v1062, %v1101
        %v1103 = vpop.f32.mrb[0].mxu0
        %v1104 = vpop.f32.mrb[0].mxu0
        %v1105 = vpop.f32.mrb[0].mxu0
        %1106 = vdwg.mxu0
        %1107 = vmatprep.subr.bf16.mxu0 0
        %1108 = vmatpush1.bf16.msra.mxu0 %v499
        %1109 = vmatprep.subr.bf16.mxu0 0
        %1110 = vmatpush1.bf16.msra.mxu0 %v500
        %1111 = vmatprep.subr.bf16.mxu0 0
        %1112 = vmatpush1.bf16.msra.mxu0 %v501
        %1113 = vmatprep.subr.bf16.mxu0 0
        %1114 = vmatpush1.bf16.msra.mxu0 %v502
        %1115 = vmatprep.subr.bf16.mxu0 0
        %1116 = vmatpush1.bf16.msra.mxu0 %v503
        %1117 = vmatprep.subr.bf16.mxu0 0
        %1118 = vmatpush1.bf16.msra.mxu0 %v504
        %1119 = vmatprep.subr.bf16.mxu0 0
        %1120 = vmatpush1.bf16.msra.mxu0 %v505
        %1121 = vmatprep.subr.bf16.mxu0 0
        %1122 = vmatpush1.bf16.msra.mxu0 %v506
        %1123 = vmatprep.subr.bf16.mxu0 0
        %1124 = vmatpush1.bf16.msra.mxu0 %v507
        %1125 = vmatprep.subr.bf16.mxu0 0
        %1126 = vmatpush1.bf16.msra.mxu0 %v508
        %1127 = vmatprep.subr.bf16.mxu0 0
        %1128 = vmatpush1.bf16.msra.mxu0 %v509
        %1129 = vmatprep.subr.bf16.mxu0 0
        %1130 = vmatpush1.bf16.msra.mxu0 %v510
        %1131 = vmatprep.subr.bf16.mxu0 0
        %1132 = vmatpush1.bf16.msra.mxu0 %v511
        %1133 = vmatprep.subr.bf16.mxu0 0
        %1134 = vmatpush1.bf16.msra.mxu0 %v512
        %1135 = vmatprep.subr.bf16.mxu0 0
        %1136 = vmatpush1.bf16.msra.mxu0 %v513
        %1137 = vmatprep.subr.bf16.mxu0 0
        %1138 = vmatpush1.bf16.msra.mxu0 %v514
        %1139 = vmatprep.mubr.bf16.mxu0 %v775
        %1140 = vmatmul.mubr.bf16.gmra.mrb[0].mxu0 %v773
        %v1141 = vpop.f32.mrb[0].mxu0
        %v1142 = vadd.f32 %v1102, %v1141
        %v1143 = vpop.f32.mrb[0].mxu0
        %v1144 = vpop.f32.mrb[0].mxu0
        %v1145 = vpop.f32.mrb[0].mxu0
        %1146 = vdwg.mxu0
        %1147 = vmatprep.subr.bf16.mxu0 0
        %1148 = vmatpush1.bf16.msra.mxu0 %v515
        %1149 = vmatprep.subr.bf16.mxu0 0
        %1150 = vmatpush1.bf16.msra.mxu0 %v516
        %1151 = vmatprep.subr.bf16.mxu0 0
        %1152 = vmatpush1.bf16.msra.mxu0 %v517
        %1153 = vmatprep.subr.bf16.mxu0 0
        %1154 = vmatpush1.bf16.msra.mxu0 %v518
        %1155 = vmatprep.subr.bf16.mxu0 0
        %1156 = vmatpush1.bf16.msra.mxu0 %v519
        %1157 = vmatprep.subr.bf16.mxu0 0
        %1158 = vmatpush1.bf16.msra.mxu0 %v520
        %1159 = vmatprep.subr.bf16.mxu0 0
        %1160 = vmatpush1.bf16.msra.mxu0 %v521
        %1161 = vmatprep.subr.bf16.mxu0 0
        %1162 = vmatpush1.bf16.msra.mxu0 %v522
        %1163 = vmatprep.subr.bf16.mxu0 0
        %1164 = vmatpush1.bf16.msra.mxu0 %v523
        %1165 = vmatprep.subr.bf16.mxu0 0
        %1166 = vmatpush1.bf16.msra.mxu0 %v524
        %1167 = vmatprep.subr.bf16.mxu0 0
        %1168 = vmatpush1.bf16.msra.mxu0 %v525
        %1169 = vmatprep.subr.bf16.mxu0 0
        %1170 = vmatpush1.bf16.msra.mxu0 %v526
        %1171 = vmatprep.subr.bf16.mxu0 0
        %1172 = vmatpush1.bf16.msra.mxu0 %v527
        %1173 = vmatprep.subr.bf16.mxu0 0
        %1174 = vmatpush1.bf16.msra.mxu0 %v528
        %1175 = vmatprep.subr.bf16.mxu0 0
        %1176 = vmatpush1.bf16.msra.mxu0 %v529
        %1177 = vmatprep.subr.bf16.mxu0 0
        %1178 = vmatpush1.bf16.msra.mxu0 %v530
        %1179 = vmatprep.mubr.bf16.mxu0 %v772
        %1180 = vmatmul.mubr.bf16.gmra.mrb[0].mxu0 %v758
        %v1181 = vpop.f32.mrb[0].mxu0
        %v1182 = vadd.f32 %v1142, %v1181
        %v1183 = vpop.f32.mrb[0].mxu0
        %v1184 = vpop.f32.mrb[0].mxu0
        %v1185 = vpop.f32.mrb[0].mxu0
        %1186 = vdwg.mxu0
        %1187 = vmatprep.subr.bf16.mxu0 0
        %1188 = vmatpush1.bf16.msra.mxu0 %v531
        %1189 = vmatprep.subr.bf16.mxu0 0
        %1190 = vmatpush1.bf16.msra.mxu0 %v532
        %1191 = vmatprep.subr.bf16.mxu0 0
        %1192 = vmatpush1.bf16.msra.mxu0 %v533
        %1193 = vmatprep.subr.bf16.mxu0 0
        %1194 = vmatpush1.bf16.msra.mxu0 %v534
        %1195 = vmatprep.subr.bf16.mxu0 0
        %1196 = vmatpush1.bf16.msra.mxu0 %v535
        %1197 = vmatprep.subr.bf16.mxu0 0
        %1198 = vmatpush1.bf16.msra.mxu0 %v536
        %1199 = vmatprep.subr.bf16.mxu0 0
        %1200 = vmatpush1.bf16.msra.mxu0 %v537
        %1201 = vmatprep.subr.bf16.mxu0 0
        %1202 = vmatpush1.bf16.msra.mxu0 %v538
        %1203 = vmatprep.subr.bf16.mxu0 0
        %1204 = vmatpush1.bf16.msra.mxu0 %v539
        %1205 = vmatprep.subr.bf16.mxu0 0
        %1206 = vmatpush1.bf16.msra.mxu0 %v540
        %1207 = vmatprep.subr.bf16.mxu0 0
        %1208 = vmatpush1.bf16.msra.mxu0 %v541
        %1209 = vmatprep.subr.bf16.mxu0 0
        %1210 = vmatpush1.bf16.msra.mxu0 %v542
        %1211 = vmatprep.subr.bf16.mxu0 0
        %1212 = vmatpush1.bf16.msra.mxu0 %v543
        %1213 = vmatprep.subr.bf16.mxu0 0
        %1214 = vmatpush1.bf16.msra.mxu0 %v544
        %1215 = vmatprep.subr.bf16.mxu0 0
        %1216 = vmatpush1.bf16.msra.mxu0 %v545
        %1217 = vmatprep.subr.bf16.mxu0 0
        %1218 = vmatpush1.bf16.msra.mxu0 %v546
        %1219 = vmatprep.mubr.bf16.mxu0 %v776
        %1220 = vmatmul.mubr.bf16.gmra.mrb[0].mxu0 %v774
        %v1221 = vpop.f32.mrb[0].mxu0
        %v1222 = vadd.f32 %v1182, %v1221
        %v1223 = vpop.f32.mrb[0].mxu0
        %v1224 = vpop.f32.mrb[0].mxu0
        %v1225 = vpop.f32.mrb[0].mxu0
        %1226 = vdwg.mxu0
        %1227 = vmatprep.subr.bf16.mxu0 0
        %1228 = vmatpush1.bf16.msra.mxu0 %v547
        %1229 = vmatprep.subr.bf16.mxu0 0
        %1230 = vmatpush1.bf16.msra.mxu0 %v548
        %1231 = vmatprep.subr.bf16.mxu0 0
        %1232 = vmatpush1.bf16.msra.mxu0 %v549
        %1233 = vmatprep.subr.bf16.mxu0 0
        %1234 = vmatpush1.bf16.msra.mxu0 %v550
        %1235 = vmatprep.subr.bf16.mxu0 0
        %1236 = vmatpush1.bf16.msra.mxu0 %v551
        %1237 = vmatprep.subr.bf16.mxu0 0
        %1238 = vmatpush1.bf16.msra.mxu0 %v552
        %1239 = vmatprep.subr.bf16.mxu0 0
        %1240 = vmatpush1.bf16.msra.mxu0 %v553
        %1241 = vmatprep.subr.bf16.mxu0 0
        %1242 = vmatpush1.bf16.msra.mxu0 %v554
        %1243 = vmatprep.subr.bf16.mxu0 0
        %1244 = vmatpush1.bf16.msra.mxu0 %v555
        %1245 = vmatprep.subr.bf16.mxu0 0
        %1246 = vmatpush1.bf16.msra.mxu0 %v556
        %1247 = vmatprep.subr.bf16.mxu0 0
        %1248 = vmatpush1.bf16.msra.mxu0 %v557
        %1249 = vmatprep.subr.bf16.mxu0 0
        %1250 = vmatpush1.bf16.msra.mxu0 %v558
        %1251 = vmatprep.subr.bf16.mxu0 0
        %1252 = vmatpush1.bf16.msra.mxu0 %v559
        %1253 = vmatprep.subr.bf16.mxu0 0
        %1254 = vmatpush1.bf16.msra.mxu0 %v560
        %1255 = vmatprep.subr.bf16.mxu0 0
        %1256 = vmatpush1.bf16.msra.mxu0 %v561
        %1257 = vmatprep.subr.bf16.mxu0 0
        %1258 = vmatpush1.bf16.msra.mxu0 %v562
        %1259 = vmatprep.mubr.bf16.mxu0 %v814
        %1260 = vmatmul.mubr.bf16.gmra.mrb[0].mxu0 %v800
        %v1261 = vpop.f32.mrb[0].mxu0
        %v1262 = vadd.f32 %v1222, %v1261
        %v1263 = vpop.f32.mrb[0].mxu0
        %v1264 = vpop.f32.mrb[0].mxu0
        %v1265 = vpop.f32.mrb[0].mxu0
        %1266 = vdwg.mxu0
        %1267 = vmatprep.subr.bf16.mxu0 0
        %1268 = vmatpush1.bf16.msra.mxu0 %v563
        %1269 = vmatprep.subr.bf16.mxu0 0
        %1270 = vmatpush1.bf16.msra.mxu0 %v564
        %1271 = vmatprep.subr.bf16.mxu0 0
        %1272 = vmatpush1.bf16.msra.mxu0 %v565
        %1273 = vmatprep.subr.bf16.mxu0 0
        %1274 = vmatpush1.bf16.msra.mxu0 %v566
        %1275 = vmatprep.subr.bf16.mxu0 0
        %1276 = vmatpush1.bf16.msra.mxu0 %v567
        %1277 = vmatprep.subr.bf16.mxu0 0
        %1278 = vmatpush1.bf16.msra.mxu0 %v568
        %1279 = vmatprep.subr.bf16.mxu0 0
        %1280 = vmatpush1.bf16.msra.mxu0 %v569
        %1281 = vmatprep.subr.bf16.mxu0 0
        %1282 = vmatpush1.bf16.msra.mxu0 %v570
        %1283 = vmatprep.subr.bf16.mxu0 0
        %1284 = vmatpush1.bf16.msra.mxu0 %v571
        %1285 = vmatprep.subr.bf16.mxu0 0
        %1286 = vmatpush1.bf16.msra.mxu0 %v572
        %1287 = vmatprep.subr.bf16.mxu0 0
        %1288 = vmatpush1.bf16.msra.mxu0 %v573
        %1289 = vmatprep.subr.bf16.mxu0 0
        %1290 = vmatpush1.bf16.msra.mxu0 %v574
        %1291 = vmatprep.subr.bf16.mxu0 0
        %1292 = vmatpush1.bf16.msra.mxu0 %v575
        %1293 = vmatprep.subr.bf16.mxu0 0
        %1294 = vmatpush1.bf16.msra.mxu0 %v576
        %1295 = vmatprep.subr.bf16.mxu0 0
        %1296 = vmatpush1.bf16.msra.mxu0 %v577
        %1297 = vmatprep.subr.bf16.mxu0 0
        %1298 = vmatpush1.bf16.msra.mxu0 %v578
        %1299 = vmatprep.mubr.bf16.mxu0 %v824
        %1300 = vmatmul.mubr.bf16.gmra.mrb[0].mxu0 %v822
        %v1301 = vpop.f32.mrb[0].mxu0
        %v1302 = vadd.f32 %v1262, %v1301
        %v1303 = vpop.f32.mrb[0].mxu0
        %v1304 = vpop.f32.mrb[0].mxu0
        %v1305 = vpop.f32.mrb[0].mxu0
        %1306 = vdwg.mxu0
        %1307 = vmatprep.subr.bf16.mxu0 0
        %1308 = vmatpush1.bf16.msra.mxu0 %v579
        %1309 = vmatprep.subr.bf16.mxu0 0
        %1310 = vmatpush1.bf16.msra.mxu0 %v580
        %1311 = vmatprep.subr.bf16.mxu0 0
        %1312 = vmatpush1.bf16.msra.mxu0 %v581
        %1313 = vmatprep.subr.bf16.mxu0 0
        %1314 = vmatpush1.bf16.msra.mxu0 %v582
        %1315 = vmatprep.subr.bf16.mxu0 0
        %1316 = vmatpush1.bf16.msra.mxu0 %v583
        %1317 = vmatprep.subr.bf16.mxu0 0
        %1318 = vmatpush1.bf16.msra.mxu0 %v584
        %1319 = vmatprep.subr.bf16.mxu0 0
        %1320 = vmatpush1.bf16.msra.mxu0 %v585
        %1321 = vmatprep.subr.bf16.mxu0 0
        %1322 = vmatpush1.bf16.msra.mxu0 %v586
        %1323 = vmatprep.subr.bf16.mxu0 0
        %1324 = vmatpush1.bf16.msra.mxu0 %v587
        %1325 = vmatprep.subr.bf16.mxu0 0
        %1326 = vmatpush1.bf16.msra.mxu0 %v588
        %1327 = vmatprep.subr.bf16.mxu0 0
        %1328 = vmatpush1.bf16.msra.mxu0 %v589
        %1329 = vmatprep.subr.bf16.mxu0 0
        %1330 = vmatpush1.bf16.msra.mxu0 %v590
        %1331 = vmatprep.subr.bf16.mxu0 0
        %1332 = vmatpush1.bf16.msra.mxu0 %v591
        %1333 = vmatprep.subr.bf16.mxu0 0
        %1334 = vmatpush1.bf16.msra.mxu0 %v592
        %1335 = vmatprep.subr.bf16.mxu0 0
        %1336 = vmatpush1.bf16.msra.mxu0 %v593
        %1337 = vmatprep.subr.bf16.mxu0 0
        %1338 = vmatpush1.bf16.msra.mxu0 %v594
        %1339 = vmatprep.mubr.bf16.mxu0 %v821
        %1340 = vmatmul.mubr.bf16.gmra.mrb[0].mxu0 %v807
        %v1341 = vpop.f32.mrb[0].mxu0
        %v1342 = vadd.f32 %v1302, %v1341
        %v1343 = vpop.f32.mrb[0].mxu0
        %v1344 = vpop.f32.mrb[0].mxu0
        %v1345 = vpop.f32.mrb[0].mxu0
        %1346 = vdwg.mxu0
        %1347 = vmatprep.subr.bf16.mxu0 0
        %1348 = vmatpush1.bf16.msra.mxu0 %v595
        %1349 = vmatprep.subr.bf16.mxu0 0
        %1350 = vmatpush1.bf16.msra.mxu0 %v596
        %1351 = vmatprep.subr.bf16.mxu0 0
        %1352 = vmatpush1.bf16.msra.mxu0 %v597
        %1353 = vmatprep.subr.bf16.mxu0 0
        %1354 = vmatpush1.bf16.msra.mxu0 %v598
        %1355 = vmatprep.subr.bf16.mxu0 0
        %1356 = vmatpush1.bf16.msra.mxu0 %v599
        %1357 = vmatprep.subr.bf16.mxu0 0
        %1358 = vmatpush1.bf16.msra.mxu0 %v600
        %1359 = vmatprep.subr.bf16.mxu0 0
        %1360 = vmatpush1.bf16.msra.mxu0 %v601
        %1361 = vmatprep.subr.bf16.mxu0 0
        %1362 = vmatpush1.bf16.msra.mxu0 %v602
        %1363 = vmatprep.subr.bf16.mxu0 0
        %1364 = vmatpush1.bf16.msra.mxu0 %v603
        %1365 = vmatprep.subr.bf16.mxu0 0
        %1366 = vmatpush1.bf16.msra.mxu0 %v604
        %1367 = vmatprep.subr.bf16.mxu0 0
        %1368 = vmatpush1.bf16.msra.mxu0 %v605
        %1369 = vmatprep.subr.bf16.mxu0 0
        %1370 = vmatpush1.bf16.msra.mxu0 %v606
        %1371 = vmatprep.subr.bf16.mxu0 0
        %1372 = vmatpush1.bf16.msra.mxu0 %v607
        %1373 = vmatprep.subr.bf16.mxu0 0
        %1374 = vmatpush1.bf16.msra.mxu0 %v608
        %1375 = vmatprep.subr.bf16.mxu0 0
        %1376 = vmatpush1.bf16.msra.mxu0 %v609
        %1377 = vmatprep.subr.bf16.mxu0 0
        %1378 = vmatpush1.bf16.msra.mxu0 %v610
        %1379 = vmatprep.mubr.bf16.mxu0 %v825
        %1380 = vmatmul.mubr.bf16.gmra.mrb[0].mxu0 %v823
        %v1381 = vpop.f32.mrb[0].mxu0
        %v1382 = vadd.f32 %v1342, %v1381
        %v1383 = vpop.f32.mrb[0].mxu0
        %v1384 = vpop.f32.mrb[0].mxu0
        %v1385 = vpop.f32.mrb[0].mxu0
        %1386 = vdwg.mxu0
        %1387 = vmatprep.subr.bf16.mxu0 0
        %1388 = vmatpush1.bf16.msra.mxu0 %v611
        %1389 = vmatprep.subr.bf16.mxu0 0
        %1390 = vmatpush1.bf16.msra.mxu0 %v612
        %1391 = vmatprep.subr.bf16.mxu0 0
        %1392 = vmatpush1.bf16.msra.mxu0 %v613
        %1393 = vmatprep.subr.bf16.mxu0 0
        %1394 = vmatpush1.bf16.msra.mxu0 %v614
        %1395 = vmatprep.subr.bf16.mxu0 0
        %1396 = vmatpush1.bf16.msra.mxu0 %v615
        %1397 = vmatprep.subr.bf16.mxu0 0
        %1398 = vmatpush1.bf16.msra.mxu0 %v616
        %1399 = vmatprep.subr.bf16.mxu0 0
        %1400 = vmatpush1.bf16.msra.mxu0 %v617
        %1401 = vmatprep.subr.bf16.mxu0 0
        %1402 = vmatpush1.bf16.msra.mxu0 %v618
        %1403 = vmatprep.subr.bf16.mxu0 0
        %1404 = vmatpush1.bf16.msra.mxu0 %v619
        %1405 = vmatprep.subr.bf16.mxu0 0
        %1406 = vmatpush1.bf16.msra.mxu0 %v620
        %1407 = vmatprep.subr.bf16.mxu0 0
        %1408 = vmatpush1.bf16.msra.mxu0 %v621
        %1409 = vmatprep.subr.bf16.mxu0 0
        %1410 = vmatpush1.bf16.msra.mxu0 %v622
        %1411 = vmatprep.subr.bf16.mxu0 0
        %1412 = vmatpush1.bf16.msra.mxu0 %v623
        %1413 = vmatprep.subr.bf16.mxu0 0
        %1414 = vmatpush1.bf16.msra.mxu0 %v624
        %1415 = vmatprep.subr.bf16.mxu0 0
        %1416 = vmatpush1.bf16.msra.mxu0 %v625
        %1417 = vmatprep.subr.bf16.mxu0 0
        %1418 = vmatpush1.bf16.msra.mxu0 %v626
        %1419 = vmatprep.mubr.bf16.mxu0 %v863
        %1420 = vmatmul.mubr.bf16.gmra.mrb[0].mxu0 %v849
        %v1421 = vpop.f32.mrb[0].mxu0
        %v1422 = vadd.f32 %v1382, %v1421
        %v1423 = vpop.f32.mrb[0].mxu0
        %v1424 = vpop.f32.mrb[0].mxu0
        %v1425 = vpop.f32.mrb[0].mxu0
        %1426 = vdwg.mxu0
        %1427 = vmatprep.subr.bf16.mxu0 0
        %1428 = vmatpush1.bf16.msra.mxu0 %v627
        %1429 = vmatprep.subr.bf16.mxu0 0
        %1430 = vmatpush1.bf16.msra.mxu0 %v628
        %1431 = vmatprep.subr.bf16.mxu0 0
        %1432 = vmatpush1.bf16.msra.mxu0 %v629
        %1433 = vmatprep.subr.bf16.mxu0 0
        %1434 = vmatpush1.bf16.msra.mxu0 %v630
        %1435 = vmatprep.subr.bf16.mxu0 0
        %1436 = vmatpush1.bf16.msra.mxu0 %v631
        %1437 = vmatprep.subr.bf16.mxu0 0
        %1438 = vmatpush1.bf16.msra.mxu0 %v632
        %1439 = vmatprep.subr.bf16.mxu0 0
        %1440 = vmatpush1.bf16.msra.mxu0 %v633
        %1441 = vmatprep.subr.bf16.mxu0 0
        %1442 = vmatpush1.bf16.msra.mxu0 %v634
        %1443 = vmatprep.subr.bf16.mxu0 0
        %1444 = vmatpush1.bf16.msra.mxu0 %v635
        %1445 = vmatprep.subr.bf16.mxu0 0
        %1446 = vmatpush1.bf16.msra.mxu0 %v636
        %1447 = vmatprep.subr.bf16.mxu0 0
        %1448 = vmatpush1.bf16.msra.mxu0 %v637
        %1449 = vmatprep.subr.bf16.mxu0 0
        %1450 = vmatpush1.bf16.msra.mxu0 %v638
        %1451 = vmatprep.subr.bf16.mxu0 0
        %1452 = vmatpush1.bf16.msra.mxu0 %v639
        %1453 = vmatprep.subr.bf16.mxu0 0
        %1454 = vmatpush1.bf16.msra.mxu0 %v640
        %1455 = vmatprep.subr.bf16.mxu0 0
        %1456 = vmatpush1.bf16.msra.mxu0 %v641
        %1457 = vmatprep.subr.bf16.mxu0 0
        %1458 = vmatpush1.bf16.msra.mxu0 %v642
        %1459 = vmatprep.mubr.bf16.mxu0 %v873
        %1460 = vmatmul.mubr.bf16.gmra.mrb[0].mxu0 %v871
        %v1461 = vpop.f32.mrb[0].mxu0
        %v1462 = vadd.f32 %v1422, %v1461
        %v1463 = vpop.f32.mrb[0].mxu0
        %v1464 = vpop.f32.mrb[0].mxu0
        %v1465 = vpop.f32.mrb[0].mxu0
        %1466 = vdwg.mxu0
        %1467 = vmatprep.subr.bf16.mxu0 0
        %1468 = vmatpush1.bf16.msra.mxu0 %v643
        %1469 = vmatprep.subr.bf16.mxu0 0
        %1470 = vmatpush1.bf16.msra.mxu0 %v644
        %1471 = vmatprep.subr.bf16.mxu0 0
        %1472 = vmatpush1.bf16.msra.mxu0 %v645
        %1473 = vmatprep.subr.bf16.mxu0 0
        %1474 = vmatpush1.bf16.msra.mxu0 %v646
        %1475 = vmatprep.subr.bf16.mxu0 0
        %1476 = vmatpush1.bf16.msra.mxu0 %v647
        %1477 = vmatprep.subr.bf16.mxu0 0
        %1478 = vmatpush1.bf16.msra.mxu0 %v648
        %1479 = vmatprep.subr.bf16.mxu0 0
        %1480 = vmatpush1.bf16.msra.mxu0 %v649
        %1481 = vmatprep.subr.bf16.mxu0 0
        %1482 = vmatpush1.bf16.msra.mxu0 %v650
        %1483 = vmatprep.subr.bf16.mxu0 0
        %1484 = vmatpush1.bf16.msra.mxu0 %v651
        %1485 = vmatprep.subr.bf16.mxu0 0
        %1486 = vmatpush1.bf16.msra.mxu0 %v652
        %1487 = vmatprep.subr.bf16.mxu0 0
        %1488 = vmatpush1.bf16.msra.mxu0 %v653
        %1489 = vmatprep.subr.bf16.mxu0 0
        %1490 = vmatpush1.bf16.msra.mxu0 %v654
        %1491 = vmatprep.subr.bf16.mxu0 0
        %1492 = vmatpush1.bf16.msra.mxu0 %v655
        %1493 = vmatprep.subr.bf16.mxu0 0
        %1494 = vmatpush1.bf16.msra.mxu0 %v656
        %1495 = vmatprep.subr.bf16.mxu0 0
        %1496 = vmatpush1.bf16.msra.mxu0 %v657
        %1497 = vmatprep.subr.bf16.mxu0 0
        %1498 = vmatpush1.bf16.msra.mxu0 %v658
        %1499 = vmatprep.mubr.bf16.mxu0 %v870
        %1500 = vmatmul.mubr.bf16.gmra.mrb[0].mxu0 %v856
        %v1501 = vpop.f32.mrb[0].mxu0
        %v1502 = vadd.f32 %v1462, %v1501
        %v1503 = vpop.f32.mrb[0].mxu0
        %v1504 = vpop.f32.mrb[0].mxu0
        %v1505 = vpop.f32.mrb[0].mxu0
        %1506 = vdwg.mxu0
        %1507 = vmatprep.subr.bf16.mxu0 0
        %1508 = vmatpush1.bf16.msra.mxu0 %v659
        %1509 = vmatprep.subr.bf16.mxu0 0
        %1510 = vmatpush1.bf16.msra.mxu0 %v660
        %1511 = vmatprep.subr.bf16.mxu0 0
        %1512 = vmatpush1.bf16.msra.mxu0 %v661
        %1513 = vmatprep.subr.bf16.mxu0 0
        %1514 = vmatpush1.bf16.msra.mxu0 %v662
        %1515 = vmatprep.subr.bf16.mxu0 0
        %1516 = vmatpush1.bf16.msra.mxu0 %v663
        %1517 = vmatprep.subr.bf16.mxu0 0
        %1518 = vmatpush1.bf16.msra.mxu0 %v664
        %1519 = vmatprep.subr.bf16.mxu0 0
        %1520 = vmatpush1.bf16.msra.mxu0 %v665
        %1521 = vmatprep.subr.bf16.mxu0 0
        %1522 = vmatpush1.bf16.msra.mxu0 %v666
        %1523 = vmatprep.subr.bf16.mxu0 0
        %1524 = vmatpush1.bf16.msra.mxu0 %v667
        %1525 = vmatprep.subr.bf16.mxu0 0
        %1526 = vmatpush1.bf16.msra.mxu0 %v668
        %1527 = vmatprep.subr.bf16.mxu0 0
        %1528 = vmatpush1.bf16.msra.mxu0 %v669
        %1529 = vmatprep.subr.bf16.mxu0 0
        %1530 = vmatpush1.bf16.msra.mxu0 %v670
        %1531 = vmatprep.subr.bf16.mxu0 0
        %1532 = vmatpush1.bf16.msra.mxu0 %v671
        %1533 = vmatprep.subr.bf16.mxu0 0
        %1534 = vmatpush1.bf16.msra.mxu0 %v672
        %1535 = vmatprep.subr.bf16.mxu0 0
        %1536 = vmatpush1.bf16.msra.mxu0 %v673
        %1537 = vmatprep.subr.bf16.mxu0 0
        %1538 = vmatpush1.bf16.msra.mxu0 %v674
        %1539 = vmatprep.mubr.bf16.mxu0 %v874
        %1540 = vmatmul.mubr.bf16.gmra.mrb[0].mxu0 %v872
        %v1541 = vpop.f32.mrb[0].mxu0
        %v1542 = vadd.f32 %v1502, %v1541
        %v1543 = vpop.f32.mrb[0].mxu0
        %v1544 = vpop.f32.mrb[0].mxu0
        %v1545 = vpop.f32.mrb[0].mxu0
        %1546 = vdwg.mxu0
        %v1547 = vadd.f32 %v286, %v1542
        %1548 = vst [vmem:[#allocation2] sm:$0x3] %v1547
        // Predicated region
        $region45: #{vae_forward.6} parent=35 // pred_check
          %p1549 = pneg %p281
        $region46: #{vae_forward.6} parent=35 // pred_check_branch
          %1551 = sbr.rel (%p1549) target = $region48
        $region47: #{vae_forward.6} parent=35 // pred_region
          %v1552 = vld [vmem:[#allocation2] sm:$0x3]
          %v1553 = vld [vmem:[%s272] sm:$0x1]
          %v1555 = vlaneseq
          %v1556 = vshrl.u32 %v1555, 7
          %v1557 = vsub.s32 0, %v1556
          %v1558 = vrot.slane %v1553, %v1557
          %v1560 = vmul.f32 %v1552, %v1558
          %v1561 = vld [vmem:[%s275] sm:$0x1]
          %v1563 = vlaneseq
          %v1564 = vshrl.u32 %v1563, 7
          %v1565 = vsub.s32 0, %v1564
          %v1566 = vrot.slane %v1561, %v1565
          %v1568 = vadd.f32 %v1560, %v1566
          %v1569 = vmax.f32 %v1568, 0.0
          %1570 = vst [vmem:[%s279] sm:$0x3] %v1569
        $region48: #{vae_forward.6} parent=35 // pred_fallthru
          _
        %p1571 = scmp.lt.s32.totalorder %s22, 1
        %s1572 = scalar_select %p1571, %s22, 1
        %s1573 = smul.addr %s1572, 2
        %s1574 = scalar_lea.vmem %s4, %s1573
        // Predicated region
        $region49: #{vae_forward.6} parent=35 // pred_check
          %p1575 = pneg %p154
        $region50: #{vae_forward.6} parent=35 // pred_check_branch
          %1577 = sbr.rel (%p1575) target = $region52
        $region51: #{vae_forward.6} parent=35 // pred_region
          _
        $region52: #{vae_forward.6} parent=35 // pred_fallthru
          _
      $region36: #{vae_forward.6} parent=5 // pred_fallthru
        _
      %p1578 = scmp.le.s32.totalorder 2, %s13
      // Predicated region
      $region53: #{vae_forward.6} parent=5 // pred_check
        %p1579 = pneg %p1578
      $region54: #{vae_forward.6} parent=5 // pred_check_branch
        %1581 = sbr.rel (%p1579) target = $region56
      $region55: #{vae_forward.6} parent=5 // pred_region
        %s1582 = ssub.s32 %s13, 2
        // Predicated region
        $region57: #{vae_forward.6} parent=55 // pred_check
          %p1583 = pneg %p160
        $region58: #{vae_forward.6} parent=55 // pred_check_branch
          %1585 = sbr.rel (%p1583) target = $region60
        $region59: #{vae_forward.6} parent=55 // pred_region
          %p1586 = scmp.lt.s32.totalorder %s24, 1
          %s1587 = scalar_select %p1586, %s24, 1
          %s1588 = smul.addr %s1587, 2
          %s1589 = scalar_lea.vmem %s4, %s1588
        $region60: #{vae_forward.6} parent=55 // pred_fallthru
          _
      $region56: #{vae_forward.6} parent=5 // pred_fallthru
        _
    $region6: #{vae_forward.6} parent=1 // loop_footer
      %s17 = sadd.s32 1, %s13
    $region7: #{vae_forward.6} parent=1 // loop_footer_branch
      %12 = sbr.rel target = $region3
    $region8: #{vae_forward.6} parent=1 // loop_exit
      _
    %1590 = vsyncpa [#allocation4], 1
    %s1591 = scalar_lea.sflag [#allocation4], 1
    %1592 = vsyncpa %s1591, 1

// kernel: vae_forward.8
$region0: #{vae_forward.8}
  #allocation0 [shape = 'u32[]', space=smem, size = 0x4, offset = 0x4, fixed_abs, tag = 'smem constant byte address 0x4 - core index']
  #allocation1 [shape = 'u32[144,128]{1,0:T(1,128)}', space=vmem, size = 0x12000, scoped, tag = 'internal scratch']
  %s0 = inlined_call_operand.vmem [shape: bf16[2,256], index: 0, kind: input, shape index: {}]
  %s1 = inlined_call_operand.vmem [shape: s8[256,4096], index: 1, kind: input, shape index: {}]
  %s2 = inlined_call_operand.vmem [shape: f32[1,4096], index: 2, kind: input, shape index: {}]
  %s3 = inlined_call_operand.vmem [shape: f32[1,4096], index: 3, kind: input, shape index: {}]
  %s4 = inlined_call_operand.vmem [shape: bf16[2,4096], index: 4, kind: output, shape index: {}]
  %s5 = sld [smem:[#allocation0]]
  $region26: #{vae_forward.8} parent=0
    _
  %s7 = ssub.s32 1, %s5
  %s8 = scalar_select 0, %s7, %s5
  // Predicated region
  $region2: #{vae_forward.8} parent=0 // pred_check
    _
  $region3: #{vae_forward.8} parent=0 // pred_check_branch
    %10 = sbr.rel (0) target = $region5
  $region4: #{vae_forward.8} parent=0 // pred_region
    _
  $region5: #{vae_forward.8} parent=0 // pred_fallthru
    _
  // Predicated region
  $region6: #{vae_forward.8} parent=0 // pred_check
    _
  $region7: #{vae_forward.8} parent=0 // pred_check_branch
    %12 = sbr.rel (0) target = $region9
  $region8: #{vae_forward.8} parent=0 // pred_region
    _
  $region9: #{vae_forward.8} parent=0 // pred_fallthru
    _
  // Predicated region
  $region10: #{vae_forward.8} parent=0 // pred_check
    _
  $region11: #{vae_forward.8} parent=0 // pred_check_branch
    %14 = sbr.rel (0) target = $region13
  $region12: #{vae_forward.8} parent=0 // pred_region
    _
  $region13: #{vae_forward.8} parent=0 // pred_fallthru
    _
  // Predicated region
  $region14: #{vae_forward.8} parent=0 // pred_check
    _
  $region15: #{vae_forward.8} parent=0 // pred_check_branch
    %16 = sbr.rel (0) target = $region17
  $region16: #{vae_forward.8} parent=0 // pred_region
    _
  $region17: #{vae_forward.8} parent=0 // pred_fallthru
    _
  %v17 = vld [vmem:[%s0] sm:$0x3]
  %v18 = vld [vmem:[%s1] sm:$0xff]
  %v19 = vld [vmem:[%s1 + $0x8] sm:$0xff]
  %v20 = vld [vmem:[%s1 + $0x10] sm:$0xff]
  %v21 = vld [vmem:[%s1 + $0x18] sm:$0xff]
  %v22 = vld [vmem:[%s1 + $0x20] sm:$0xff]
  %v23 = vld [vmem:[%s1 + $0x28] sm:$0xff]
  %v24 = vld [vmem:[%s1 + $0x30] sm:$0xff]
  %v25 = vld [vmem:[%s1 + $0x38] sm:$0xff]
  %v26 = vld [vmem:[%s1 + $0x40] sm:$0xff]
  %v27 = vld [vmem:[%s1 + $0x48] sm:$0xff]
  %v28 = vld [vmem:[%s1 + $0x50] sm:$0xff]
  %v29 = vld [vmem:[%s1 + $0x58] sm:$0xff]
  %v30 = vld [vmem:[%s1 + $0x60] sm:$0xff]
  %v31 = vld [vmem:[%s1 + $0x68] sm:$0xff]
  %v32 = vld [vmem:[%s1 + $0x70] sm:$0xff]
  %v33 = vld [vmem:[%s1 + $0x78] sm:$0xff]
  %v34 = vld [vmem:[%s1 + $0x80] sm:$0xff]
  %v35 = vld [vmem:[%s1 + $0x88] sm:$0xff]
  %v36 = vld [vmem:[%s1 + $0x90] sm:$0xff]
  %v37 = vld [vmem:[%s1 + $0x98] sm:$0xff]
  %v38 = vld [vmem:[%s1 + $0xa0] sm:$0xff]
  %v39 = vld [vmem:[%s1 + $0xa8] sm:$0xff]
  %v40 = vld [vmem:[%s1 + $0xb0] sm:$0xff]
  %v41 = vld [vmem:[%s1 + $0xb8] sm:$0xff]
  %v42 = vld [vmem:[%s1 + $0xc0] sm:$0xff]
  %v43 = vld [vmem:[%s1 + $0xc8] sm:$0xff]
  %v44 = vld [vmem:[%s1 + $0xd0] sm:$0xff]
  %v45 = vld [vmem:[%s1 + $0xd8] sm:$0xff]
  %v46 = vld [vmem:[%s1 + $0xe0] sm:$0xff]
  %v47 = vld [vmem:[%s1 + $0xe8] sm:$0xff]
  %v48 = vld [vmem:[%s1 + $0xf0] sm:$0xff]
  %v49 = vld [vmem:[%s1 + $0xf8] sm:$0xff]
  %v50 = vld [vmem:[%s1 + $0x100] sm:$0xff]
  %v51 = vld [vmem:[%s1 + $0x108] sm:$0xff]
  %v52 = vld [vmem:[%s1 + $0x110] sm:$0xff]
  %v53 = vld [vmem:[%s1 + $0x118] sm:$0xff]
  %v54 = vld [vmem:[%s1 + $0x120] sm:$0xff]
  %v55 = vld [vmem:[%s1 + $0x128] sm:$0xff]
  %v56 = vld [vmem:[%s1 + $0x130] sm:$0xff]
  %v57 = vld [vmem:[%s1 + $0x138] sm:$0xff]
  %v58 = vld [vmem:[%s1 + $0x140] sm:$0xff]
  %v59 = vld [vmem:[%s1 + $0x148] sm:$0xff]
  %v60 = vld [vmem:[%s1 + $0x150] sm:$0xff]
  %v61 = vld [vmem:[%s1 + $0x158] sm:$0xff]
  %v62 = vld [vmem:[%s1 + $0x160] sm:$0xff]
  %v63 = vld [vmem:[%s1 + $0x168] sm:$0xff]
  %v64 = vld [vmem:[%s1 + $0x170] sm:$0xff]
  %v65 = vld [vmem:[%s1 + $0x178] sm:$0xff]
  %v66 = vld [vmem:[%s1 + $0x180] sm:$0xff]
  %v67 = vld [vmem:[%s1 + $0x188] sm:$0xff]
  %v68 = vld [vmem:[%s1 + $0x190] sm:$0xff]
  %v69 = vld [vmem:[%s1 + $0x198] sm:$0xff]
  %v70 = vld [vmem:[%s1 + $0x1a0] sm:$0xff]
  %v71 = vld [vmem:[%s1 + $0x1a8] sm:$0xff]
  %v72 = vld [vmem:[%s1 + $0x1b0] sm:$0xff]
  %v73 = vld [vmem:[%s1 + $0x1b8] sm:$0xff]
  %v74 = vld [vmem:[%s1 + $0x1c0] sm:$0xff]
  %v75 = vld [vmem:[%s1 + $0x1c8] sm:$0xff]
  %v76 = vld [vmem:[%s1 + $0x1d0] sm:$0xff]
  %v77 = vld [vmem:[%s1 + $0x1d8] sm:$0xff]
  %v78 = vld [vmem:[%s1 + $0x1e0] sm:$0xff]
  %v79 = vld [vmem:[%s1 + $0x1e8] sm:$0xff]
  %v80 = vld [vmem:[%s1 + $0x1f0] sm:$0xff]
  %v81 = vld [vmem:[%s1 + $0x1f8] sm:$0xff]
  %v82 = vld [vmem:[%s1 + $0x200] sm:$0xff]
  %v83 = vld [vmem:[%s1 + $0x208] sm:$0xff]
  %v84 = vld [vmem:[%s1 + $0x210] sm:$0xff]
  %v85 = vld [vmem:[%s1 + $0x218] sm:$0xff]
  %v86 = vld [vmem:[%s1 + $0x220] sm:$0xff]
  %v87 = vld [vmem:[%s1 + $0x228] sm:$0xff]
  %v88 = vld [vmem:[%s1 + $0x230] sm:$0xff]
  %v89 = vld [vmem:[%s1 + $0x238] sm:$0xff]
  %v90 = vld [vmem:[%s1 + $0x240] sm:$0xff]
  %v91 = vld [vmem:[%s1 + $0x248] sm:$0xff]
  %v92 = vld [vmem:[%s1 + $0x250] sm:$0xff]
  %v93 = vld [vmem:[%s1 + $0x258] sm:$0xff]
  %v94 = vld [vmem:[%s1 + $0x260] sm:$0xff]
  %v95 = vld [vmem:[%s1 + $0x268] sm:$0xff]
  %v96 = vld [vmem:[%s1 + $0x270] sm:$0xff]
  %v97 = vld [vmem:[%s1 + $0x278] sm:$0xff]
  %v98 = vld [vmem:[%s1 + $0x280] sm:$0xff]
  %v99 = vld [vmem:[%s1 + $0x288] sm:$0xff]
  %v100 = vld [vmem:[%s1 + $0x290] sm:$0xff]
  %v101 = vld [vmem:[%s1 + $0x298] sm:$0xff]
  %v102 = vld [vmem:[%s1 + $0x2a0] sm:$0xff]
  %v103 = vld [vmem:[%s1 + $0x2a8] sm:$0xff]
  %v104 = vld [vmem:[%s1 + $0x2b0] sm:$0xff]
  %v105 = vld [vmem:[%s1 + $0x2b8] sm:$0xff]
  %v106 = vld [vmem:[%s1 + $0x2c0] sm:$0xff]
  %v107 = vld [vmem:[%s1 + $0x2c8] sm:$0xff]
  %v108 = vld [vmem:[%s1 + $0x2d0] sm:$0xff]
  %v109 = vld [vmem:[%s1 + $0x2d8] sm:$0xff]
  %v110 = vld [vmem:[%s1 + $0x2e0] sm:$0xff]
  %v111 = vld [vmem:[%s1 + $0x2e8] sm:$0xff]
  %v112 = vld [vmem:[%s1 + $0x2f0] sm:$0xff]
  %v113 = vld [vmem:[%s1 + $0x2f8] sm:$0xff]
  %v114 = vld [vmem:[%s1 + $0x300] sm:$0xff]
  %v115 = vld [vmem:[%s1 + $0x308] sm:$0xff]
  %v116 = vld [vmem:[%s1 + $0x310] sm:$0xff]
  %v117 = vld [vmem:[%s1 + $0x318] sm:$0xff]
  %v118 = vld [vmem:[%s1 + $0x320] sm:$0xff]
  %v119 = vld [vmem:[%s1 + $0x328] sm:$0xff]
  %v120 = vld [vmem:[%s1 + $0x330] sm:$0xff]
  %v121 = vld [vmem:[%s1 + $0x338] sm:$0xff]
  %v122 = vld [vmem:[%s1 + $0x340] sm:$0xff]
  %v123 = vld [vmem:[%s1 + $0x348] sm:$0xff]
  %v124 = vld [vmem:[%s1 + $0x350] sm:$0xff]
  %v125 = vld [vmem:[%s1 + $0x358] sm:$0xff]
  %v126 = vld [vmem:[%s1 + $0x360] sm:$0xff]
  %v127 = vld [vmem:[%s1 + $0x368] sm:$0xff]
  %v128 = vld [vmem:[%s1 + $0x370] sm:$0xff]
  %v129 = vld [vmem:[%s1 + $0x378] sm:$0xff]
  %v130 = vld [vmem:[%s1 + $0x380] sm:$0xff]
  %v131 = vld [vmem:[%s1 + $0x388] sm:$0xff]
  %v132 = vld [vmem:[%s1 + $0x390] sm:$0xff]
  %v133 = vld [vmem:[%s1 + $0x398] sm:$0xff]
  %v134 = vld [vmem:[%s1 + $0x3a0] sm:$0xff]
  %v135 = vld [vmem:[%s1 + $0x3a8] sm:$0xff]
  %v136 = vld [vmem:[%s1 + $0x3b0] sm:$0xff]
  %v137 = vld [vmem:[%s1 + $0x3b8] sm:$0xff]
  %v138 = vld [vmem:[%s1 + $0x3c0] sm:$0xff]
  %v139 = vld [vmem:[%s1 + $0x3c8] sm:$0xff]
  %v140 = vld [vmem:[%s1 + $0x3d0] sm:$0xff]
  %v141 = vld [vmem:[%s1 + $0x3d8] sm:$0xff]
  %v142 = vld [vmem:[%s1 + $0x3e0] sm:$0xff]
  %v143 = vld [vmem:[%s1 + $0x3e8] sm:$0xff]
  %v144 = vld [vmem:[%s1 + $0x3f0] sm:$0xff]
  %v145 = vld [vmem:[%s1 + $0x3f8] sm:$0xff]
  %v146 = vld [vmem:[%s1 + $0x400] sm:$0xff]
  %v147 = vld [vmem:[%s1 + $0x408] sm:$0xff]
  %v148 = vld [vmem:[%s1 + $0x410] sm:$0xff]
  %v149 = vld [vmem:[%s1 + $0x418] sm:$0xff]
  %v150 = vld [vmem:[%s1 + $0x420] sm:$0xff]
  %v151 = vld [vmem:[%s1 + $0x428] sm:$0xff]
  %v152 = vld [vmem:[%s1 + $0x430] sm:$0xff]
  %v153 = vld [vmem:[%s1 + $0x438] sm:$0xff]
  %v154 = vld [vmem:[%s1 + $0x440] sm:$0xff]
  %v155 = vld [vmem:[%s1 + $0x448] sm:$0xff]
  %v156 = vld [vmem:[%s1 + $0x450] sm:$0xff]
  %v157 = vld [vmem:[%s1 + $0x458] sm:$0xff]
  %v158 = vld [vmem:[%s1 + $0x460] sm:$0xff]
  %v159 = vld [vmem:[%s1 + $0x468] sm:$0xff]
  %v160 = vld [vmem:[%s1 + $0x470] sm:$0xff]
  %v161 = vld [vmem:[%s1 + $0x478] sm:$0xff]
  %v162 = vld [vmem:[%s1 + $0x480] sm:$0xff]
  %v163 = vld [vmem:[%s1 + $0x488] sm:$0xff]
  %v164 = vld [vmem:[%s1 + $0x490] sm:$0xff]
  %v165 = vld [vmem:[%s1 + $0x498] sm:$0xff]
  %v166 = vld [vmem:[%s1 + $0x4a0] sm:$0xff]
  %v167 = vld [vmem:[%s1 + $0x4a8] sm:$0xff]
  %v168 = vld [vmem:[%s1 + $0x4b0] sm:$0xff]
  %v169 = vld [vmem:[%s1 + $0x4b8] sm:$0xff]
  %v170 = vld [vmem:[%s1 + $0x4c0] sm:$0xff]
  %v171 = vld [vmem:[%s1 + $0x4c8] sm:$0xff]
  %v172 = vld [vmem:[%s1 + $0x4d0] sm:$0xff]
  %v173 = vld [vmem:[%s1 + $0x4d8] sm:$0xff]
  %v174 = vld [vmem:[%s1 + $0x4e0] sm:$0xff]
  %v175 = vld [vmem:[%s1 + $0x4e8] sm:$0xff]
  %v176 = vld [vmem:[%s1 + $0x4f0] sm:$0xff]
  %v177 = vld [vmem:[%s1 + $0x4f8] sm:$0xff]
  %v178 = vld [vmem:[%s1 + $0x500] sm:$0xff]
  %v179 = vld [vmem:[%s1 + $0x508] sm:$0xff]
  %v180 = vld [vmem:[%s1 + $0x510] sm:$0xff]
  %v181 = vld [vmem:[%s1 + $0x518] sm:$0xff]
  %v182 = vld [vmem:[%s1 + $0x520] sm:$0xff]
  %v183 = vld [vmem:[%s1 + $0x528] sm:$0xff]
  %v184 = vld [vmem:[%s1 + $0x530] sm:$0xff]
  %v185 = vld [vmem:[%s1 + $0x538] sm:$0xff]
  %v186 = vld [vmem:[%s1 + $0x540] sm:$0xff]
  %v187 = vld [vmem:[%s1 + $0x548] sm:$0xff]
  %v188 = vld [vmem:[%s1 + $0x550] sm:$0xff]
  %v189 = vld [vmem:[%s1 + $0x558] sm:$0xff]
  %v190 = vld [vmem:[%s1 + $0x560] sm:$0xff]
  %v191 = vld [vmem:[%s1 + $0x568] sm:$0xff]
  %v192 = vld [vmem:[%s1 + $0x570] sm:$0xff]
  %v193 = vld [vmem:[%s1 + $0x578] sm:$0xff]
  %v194 = vld [vmem:[%s1 + $0x580] sm:$0xff]
  %v195 = vld [vmem:[%s1 + $0x588] sm:$0xff]
  %v196 = vld [vmem:[%s1 + $0x590] sm:$0xff]
  %v197 = vld [vmem:[%s1 + $0x598] sm:$0xff]
  %v198 = vld [vmem:[%s1 + $0x5a0] sm:$0xff]
  %v199 = vld [vmem:[%s1 + $0x5a8] sm:$0xff]
  %v200 = vld [vmem:[%s1 + $0x5b0] sm:$0xff]
  %v201 = vld [vmem:[%s1 + $0x5b8] sm:$0xff]
  %v202 = vld [vmem:[%s1 + $0x5c0] sm:$0xff]
  %v203 = vld [vmem:[%s1 + $0x5c8] sm:$0xff]
  %v204 = vld [vmem:[%s1 + $0x5d0] sm:$0xff]
  %v205 = vld [vmem:[%s1 + $0x5d8] sm:$0xff]
  %v206 = vld [vmem:[%s1 + $0x5e0] sm:$0xff]
  %v207 = vld [vmem:[%s1 + $0x5e8] sm:$0xff]
  %v208 = vld [vmem:[%s1 + $0x5f0] sm:$0xff]
  %v209 = vld [vmem:[%s1 + $0x5f8] sm:$0xff]
  %v210 = vld [vmem:[%s1 + $0x600] sm:$0xff]
  %v211 = vld [vmem:[%s1 + $0x608] sm:$0xff]
  %v212 = vld [vmem:[%s1 + $0x610] sm:$0xff]
  %v213 = vld [vmem:[%s1 + $0x618] sm:$0xff]
  %v214 = vld [vmem:[%s1 + $0x620] sm:$0xff]
  %v215 = vld [vmem:[%s1 + $0x628] sm:$0xff]
  %v216 = vld [vmem:[%s1 + $0x630] sm:$0xff]
  %v217 = vld [vmem:[%s1 + $0x638] sm:$0xff]
  %v218 = vld [vmem:[%s1 + $0x640] sm:$0xff]
  %v219 = vld [vmem:[%s1 + $0x648] sm:$0xff]
  %v220 = vld [vmem:[%s1 + $0x650] sm:$0xff]
  %v221 = vld [vmem:[%s1 + $0x658] sm:$0xff]
  %v222 = vld [vmem:[%s1 + $0x660] sm:$0xff]
  %v223 = vld [vmem:[%s1 + $0x668] sm:$0xff]
  %v224 = vld [vmem:[%s1 + $0x670] sm:$0xff]
  %v225 = vld [vmem:[%s1 + $0x678] sm:$0xff]
  %v226 = vld [vmem:[%s1 + $0x680] sm:$0xff]
  %v227 = vld [vmem:[%s1 + $0x688] sm:$0xff]
  %v228 = vld [vmem:[%s1 + $0x690] sm:$0xff]
  %v229 = vld [vmem:[%s1 + $0x698] sm:$0xff]
  %v230 = vld [vmem:[%s1 + $0x6a0] sm:$0xff]
  %v231 = vld [vmem:[%s1 + $0x6a8] sm:$0xff]
  %v232 = vld [vmem:[%s1 + $0x6b0] sm:$0xff]
  %v233 = vld [vmem:[%s1 + $0x6b8] sm:$0xff]
  %v234 = vld [vmem:[%s1 + $0x6c0] sm:$0xff]
  %v235 = vld [vmem:[%s1 + $0x6c8] sm:$0xff]
  %v236 = vld [vmem:[%s1 + $0x6d0] sm:$0xff]
  %v237 = vld [vmem:[%s1 + $0x6d8] sm:$0xff]
  %v238 = vld [vmem:[%s1 + $0x6e0] sm:$0xff]
  %v239 = vld [vmem:[%s1 + $0x6e8] sm:$0xff]
  %v240 = vld [vmem:[%s1 + $0x6f0] sm:$0xff]
  %v241 = vld [vmem:[%s1 + $0x6f8] sm:$0xff]
  %v242 = vld [vmem:[%s1 + $0x700] sm:$0xff]
  %v243 = vld [vmem:[%s1 + $0x708] sm:$0xff]
  %v244 = vld [vmem:[%s1 + $0x710] sm:$0xff]
  %v245 = vld [vmem:[%s1 + $0x718] sm:$0xff]
  %v246 = vld [vmem:[%s1 + $0x720] sm:$0xff]
  %v247 = vld [vmem:[%s1 + $0x728] sm:$0xff]
  %v248 = vld [vmem:[%s1 + $0x730] sm:$0xff]
  %v249 = vld [vmem:[%s1 + $0x738] sm:$0xff]
  %v250 = vld [vmem:[%s1 + $0x740] sm:$0xff]
  %v251 = vld [vmem:[%s1 + $0x748] sm:$0xff]
  %v252 = vld [vmem:[%s1 + $0x750] sm:$0xff]
  %v253 = vld [vmem:[%s1 + $0x758] sm:$0xff]
  %v254 = vld [vmem:[%s1 + $0x760] sm:$0xff]
  %v255 = vld [vmem:[%s1 + $0x768] sm:$0xff]
  %v256 = vld [vmem:[%s1 + $0x770] sm:$0xff]
  %v257 = vld [vmem:[%s1 + $0x778] sm:$0xff]
  %v258 = vld [vmem:[%s1 + $0x780] sm:$0xff]
  %v259 = vld [vmem:[%s1 + $0x788] sm:$0xff]
  %v260 = vld [vmem:[%s1 + $0x790] sm:$0xff]
  %v261 = vld [vmem:[%s1 + $0x798] sm:$0xff]
  %v262 = vld [vmem:[%s1 + $0x7a0] sm:$0xff]
  %v263 = vld [vmem:[%s1 + $0x7a8] sm:$0xff]
  %v264 = vld [vmem:[%s1 + $0x7b0] sm:$0xff]
  %v265 = vld [vmem:[%s1 + $0x7b8] sm:$0xff]
  %v266 = vld [vmem:[%s1 + $0x7c0] sm:$0xff]
  %v267 = vld [vmem:[%s1 + $0x7c8] sm:$0xff]
  %v268 = vld [vmem:[%s1 + $0x7d0] sm:$0xff]
  %v269 = vld [vmem:[%s1 + $0x7d8] sm:$0xff]
  %v270 = vld [vmem:[%s1 + $0x7e0] sm:$0xff]
  %v271 = vld [vmem:[%s1 + $0x7e8] sm:$0xff]
  %v272 = vld [vmem:[%s1 + $0x7f0] sm:$0xff]
  %v273 = vld [vmem:[%s1 + $0x7f8] sm:$0xff]
  %v274 = vunpack.c.l.s8.bf16 %v18
  %v275 = vunpack.c.l.s8.bf16 %v19
  %v276 = vunpack.c.l.s8.bf16 %v20
  %v277 = vunpack.c.l.s8.bf16 %v21
  %v278 = vunpack.c.l.s8.bf16 %v22
  %v279 = vunpack.c.l.s8.bf16 %v23
  %v280 = vunpack.c.l.s8.bf16 %v24
  %v281 = vunpack.c.l.s8.bf16 %v25
  %v282 = vunpack.c.l.s8.bf16 %v26
  %v283 = vunpack.c.l.s8.bf16 %v27
  %v284 = vunpack.c.l.s8.bf16 %v28
  %v285 = vunpack.c.l.s8.bf16 %v29
  %v286 = vunpack.c.l.s8.bf16 %v30
  %v287 = vunpack.c.l.s8.bf16 %v31
  %v288 = vunpack.c.l.s8.bf16 %v32
  %v289 = vunpack.c.l.s8.bf16 %v33
  %v290 = vunpack.c.l.s8.bf16 %v34
  %v291 = vunpack.c.l.s8.bf16 %v35
  %v292 = vunpack.c.l.s8.bf16 %v36
  %v293 = vunpack.c.l.s8.bf16 %v37
  %v294 = vunpack.c.l.s8.bf16 %v38
  %v295 = vunpack.c.l.s8.bf16 %v39
  %v296 = vunpack.c.l.s8.bf16 %v40
  %v297 = vunpack.c.l.s8.bf16 %v41
  %v298 = vunpack.c.l.s8.bf16 %v42
  %v299 = vunpack.c.l.s8.bf16 %v43
  %v300 = vunpack.c.l.s8.bf16 %v44
  %v301 = vunpack.c.l.s8.bf16 %v45
  %v302 = vunpack.c.l.s8.bf16 %v46
  %v303 = vunpack.c.l.s8.bf16 %v47
  %v304 = vunpack.c.l.s8.bf16 %v48
  %v305 = vunpack.c.l.s8.bf16 %v49
  %v306 = vunpack.c.h.s8.bf16 %v18
  %v307 = vunpack.c.h.s8.bf16 %v19
  %v308 = vunpack.c.h.s8.bf16 %v20
  %v309 = vunpack.c.h.s8.bf16 %v21
  %v310 = vunpack.c.h.s8.bf16 %v22
  %v311 = vunpack.c.h.s8.bf16 %v23
  %v312 = vunpack.c.h.s8.bf16 %v24
  %v313 = vunpack.c.h.s8.bf16 %v25
  %v314 = vunpack.c.h.s8.bf16 %v26
  %v315 = vunpack.c.h.s8.bf16 %v27
  %v316 = vunpack.c.h.s8.bf16 %v28
  %v317 = vunpack.c.h.s8.bf16 %v29
  %v318 = vunpack.c.h.s8.bf16 %v30
  %v319 = vunpack.c.h.s8.bf16 %v31
  %v320 = vunpack.c.h.s8.bf16 %v32
  %v321 = vunpack.c.h.s8.bf16 %v33
  %v322 = vunpack.c.h.s8.bf16 %v34
  %v323 = vunpack.c.h.s8.bf16 %v35
  %v324 = vunpack.c.h.s8.bf16 %v36
  %v325 = vunpack.c.h.s8.bf16 %v37
  %v326 = vunpack.c.h.s8.bf16 %v38
  %v327 = vunpack.c.h.s8.bf16 %v39
  %v328 = vunpack.c.h.s8.bf16 %v40
  %v329 = vunpack.c.h.s8.bf16 %v41
  %v330 = vunpack.c.h.s8.bf16 %v42
  %v331 = vunpack.c.h.s8.bf16 %v43
  %v332 = vunpack.c.h.s8.bf16 %v44
  %v333 = vunpack.c.h.s8.bf16 %v45
  %v334 = vunpack.c.h.s8.bf16 %v46
  %v335 = vunpack.c.h.s8.bf16 %v47
  %v336 = vunpack.c.h.s8.bf16 %v48
  %v337 = vunpack.c.h.s8.bf16 %v49
  %v338 = vunpack.c.l.s8.bf16 %v50
  %v339 = vunpack.c.l.s8.bf16 %v51
  %v340 = vunpack.c.l.s8.bf16 %v52
  %v341 = vunpack.c.l.s8.bf16 %v53
  %v342 = vunpack.c.l.s8.bf16 %v54
  %v343 = vunpack.c.l.s8.bf16 %v55
  %v344 = vunpack.c.l.s8.bf16 %v56
  %v345 = vunpack.c.l.s8.bf16 %v57
  %v346 = vunpack.c.l.s8.bf16 %v58
  %v347 = vunpack.c.l.s8.bf16 %v59
  %v348 = vunpack.c.l.s8.bf16 %v60
  %v349 = vunpack.c.l.s8.bf16 %v61
  %v350 = vunpack.c.l.s8.bf16 %v62
  %v351 = vunpack.c.l.s8.bf16 %v63
  %v352 = vunpack.c.l.s8.bf16 %v64
  %v353 = vunpack.c.l.s8.bf16 %v65
  %v354 = vunpack.c.l.s8.bf16 %v66
  %v355 = vunpack.c.l.s8.bf16 %v67
  %v356 = vunpack.c.l.s8.bf16 %v68
  %v357 = vunpack.c.l.s8.bf16 %v69
  %v358 = vunpack.c.l.s8.bf16 %v70
  %v359 = vunpack.c.l.s8.bf16 %v71
  %v360 = vunpack.c.l.s8.bf16 %v72
  %v361 = vunpack.c.l.s8.bf16 %v73
  %v362 = vunpack.c.l.s8.bf16 %v74
  %v363 = vunpack.c.l.s8.bf16 %v75
  %v364 = vunpack.c.l.s8.bf16 %v76
  %v365 = vunpack.c.l.s8.bf16 %v77
  %v366 = vunpack.c.l.s8.bf16 %v78
  %v367 = vunpack.c.l.s8.bf16 %v79
  %v368 = vunpack.c.l.s8.bf16 %v80
  %v369 = vunpack.c.l.s8.bf16 %v81
  %v370 = vunpack.c.h.s8.bf16 %v50
  %v371 = vunpack.c.h.s8.bf16 %v51
  %v372 = vunpack.c.h.s8.bf16 %v52
  %v373 = vunpack.c.h.s8.bf16 %v53
  %v374 = vunpack.c.h.s8.bf16 %v54
  %v375 = vunpack.c.h.s8.bf16 %v55
  %v376 = vunpack.c.h.s8.bf16 %v56
  %v377 = vunpack.c.h.s8.bf16 %v57
  %v378 = vunpack.c.h.s8.bf16 %v58
  %v379 = vunpack.c.h.s8.bf16 %v59
  %v380 = vunpack.c.h.s8.bf16 %v60
  %v381 = vunpack.c.h.s8.bf16 %v61
  %v382 = vunpack.c.h.s8.bf16 %v62
  %v383 = vunpack.c.h.s8.bf16 %v63
  %v384 = vunpack.c.h.s8.bf16 %v64
  %v385 = vunpack.c.h.s8.bf16 %v65
  %v386 = vunpack.c.h.s8.bf16 %v66
  %v387 = vunpack.c.h.s8.bf16 %v67
  %v388 = vunpack.c.h.s8.bf16 %v68
  %v389 = vunpack.c.h.s8.bf16 %v69
  %v390 = vunpack.c.h.s8.bf16 %v70
  %v391 = vunpack.c.h.s8.bf16 %v71
  %v392 = vunpack.c.h.s8.bf16 %v72
  %v393 = vunpack.c.h.s8.bf16 %v73
  %v394 = vunpack.c.h.s8.bf16 %v74
  %v395 = vunpack.c.h.s8.bf16 %v75
  %v396 = vunpack.c.h.s8.bf16 %v76
  %v397 = vunpack.c.h.s8.bf16 %v77
  %v398 = vunpack.c.h.s8.bf16 %v78
  %v399 = vunpack.c.h.s8.bf16 %v79
  %v400 = vunpack.c.h.s8.bf16 %v80
  %v401 = vunpack.c.h.s8.bf16 %v81
  %v402 = vunpack.c.l.s8.bf16 %v82
  %v403 = vunpack.c.l.s8.bf16 %v83
  %v404 = vunpack.c.l.s8.bf16 %v84
  %v405 = vunpack.c.l.s8.bf16 %v85
  %v406 = vunpack.c.l.s8.bf16 %v86
  %v407 = vunpack.c.l.s8.bf16 %v87
  %v408 = vunpack.c.l.s8.bf16 %v88
  %v409 = vunpack.c.l.s8.bf16 %v89
  %v410 = vunpack.c.l.s8.bf16 %v90
  %v411 = vunpack.c.l.s8.bf16 %v91
  %v412 = vunpack.c.l.s8.bf16 %v92
  %v413 = vunpack.c.l.s8.bf16 %v93
  %v414 = vunpack.c.l.s8.bf16 %v94
  %v415 = vunpack.c.l.s8.bf16 %v95
  %v416 = vunpack.c.l.s8.bf16 %v96
  %v417 = vunpack.c.l.s8.bf16 %v97
  %v418 = vunpack.c.l.s8.bf16 %v98
  %v419 = vunpack.c.l.s8.bf16 %v99
  %v420 = vunpack.c.l.s8.bf16 %v100
  %v421 = vunpack.c.l.s8.bf16 %v101
  %v422 = vunpack.c.l.s8.bf16 %v102
  %v423 = vunpack.c.l.s8.bf16 %v103
  %v424 = vunpack.c.l.s8.bf16 %v104
  %v425 = vunpack.c.l.s8.bf16 %v105
  %v426 = vunpack.c.l.s8.bf16 %v106
  %v427 = vunpack.c.l.s8.bf16 %v107
  %v428 = vunpack.c.l.s8.bf16 %v108
  %v429 = vunpack.c.l.s8.bf16 %v109
  %v430 = vunpack.c.l.s8.bf16 %v110
  %v431 = vunpack.c.l.s8.bf16 %v111
  %v432 = vunpack.c.l.s8.bf16 %v112
  %v433 = vunpack.c.l.s8.bf16 %v113
  %v434 = vunpack.c.h.s8.bf16 %v82
  %v435 = vunpack.c.h.s8.bf16 %v83
  %v436 = vunpack.c.h.s8.bf16 %v84
  %v437 = vunpack.c.h.s8.bf16 %v85
  %v438 = vunpack.c.h.s8.bf16 %v86
  %v439 = vunpack.c.h.s8.bf16 %v87
  %v440 = vunpack.c.h.s8.bf16 %v88
  %v441 = vunpack.c.h.s8.bf16 %v89
  %v442 = vunpack.c.h.s8.bf16 %v90
  %v443 = vunpack.c.h.s8.bf16 %v91
  %v444 = vunpack.c.h.s8.bf16 %v92
  %v445 = vunpack.c.h.s8.bf16 %v93
  %v446 = vunpack.c.h.s8.bf16 %v94
  %v447 = vunpack.c.h.s8.bf16 %v95
  %v448 = vunpack.c.h.s8.bf16 %v96
  %v449 = vunpack.c.h.s8.bf16 %v97
  %v450 = vunpack.c.h.s8.bf16 %v98
  %v451 = vunpack.c.h.s8.bf16 %v99
  %v452 = vunpack.c.h.s8.bf16 %v100
  %v453 = vunpack.c.h.s8.bf16 %v101
  %v454 = vunpack.c.h.s8.bf16 %v102
  %v455 = vunpack.c.h.s8.bf16 %v103
  %v456 = vunpack.c.h.s8.bf16 %v104
  %v457 = vunpack.c.h.s8.bf16 %v105
  %v458 = vunpack.c.h.s8.bf16 %v106
  %v459 = vunpack.c.h.s8.bf16 %v107
  %v460 = vunpack.c.h.s8.bf16 %v108
  %v461 = vunpack.c.h.s8.bf16 %v109
  %v462 = vunpack.c.h.s8.bf16 %v110
  %v463 = vunpack.c.h.s8.bf16 %v111
  %v464 = vunpack.c.h.s8.bf16 %v112
  %v465 = vunpack.c.h.s8.bf16 %v113
  %v466 = vunpack.c.l.s8.bf16 %v114
  %v467 = vunpack.c.l.s8.bf16 %v115
  %v468 = vunpack.c.l.s8.bf16 %v116
  %v469 = vunpack.c.l.s8.bf16 %v117
  %v470 = vunpack.c.l.s8.bf16 %v118
  %v471 = vunpack.c.l.s8.bf16 %v119
  %v472 = vunpack.c.l.s8.bf16 %v120
  %v473 = vunpack.c.l.s8.bf16 %v121
  %v474 = vunpack.c.l.s8.bf16 %v122
  %v475 = vunpack.c.l.s8.bf16 %v123
  %v476 = vunpack.c.l.s8.bf16 %v124
  %v477 = vunpack.c.l.s8.bf16 %v125
  %v478 = vunpack.c.l.s8.bf16 %v126
  %v479 = vunpack.c.l.s8.bf16 %v127
  %v480 = vunpack.c.l.s8.bf16 %v128
  %v481 = vunpack.c.l.s8.bf16 %v129
  %v482 = vunpack.c.l.s8.bf16 %v130
  %v483 = vunpack.c.l.s8.bf16 %v131
  %v484 = vunpack.c.l.s8.bf16 %v132
  %v485 = vunpack.c.l.s8.bf16 %v133
  %v486 = vunpack.c.l.s8.bf16 %v134
  %v487 = vunpack.c.l.s8.bf16 %v135
  %v488 = vunpack.c.l.s8.bf16 %v136
  %v489 = vunpack.c.l.s8.bf16 %v137
  %v490 = vunpack.c.l.s8.bf16 %v138
  %v491 = vunpack.c.l.s8.bf16 %v139
  %v492 = vunpack.c.l.s8.bf16 %v140
  %v493 = vunpack.c.l.s8.bf16 %v141
  %v494 = vunpack.c.l.s8.bf16 %v142
  %v495 = vunpack.c.l.s8.bf16 %v143
  %v496 = vunpack.c.l.s8.bf16 %v144
  %v497 = vunpack.c.l.s8.bf16 %v145
  %v498 = vunpack.c.h.s8.bf16 %v114
  %v499 = vunpack.c.h.s8.bf16 %v115
  %v500 = vunpack.c.h.s8.bf16 %v116
  %v501 = vunpack.c.h.s8.bf16 %v117
  %v502 = vunpack.c.h.s8.bf16 %v118
  %v503 = vunpack.c.h.s8.bf16 %v119
  %v504 = vunpack.c.h.s8.bf16 %v120
  %v505 = vunpack.c.h.s8.bf16 %v121
  %v506 = vunpack.c.h.s8.bf16 %v122
  %v507 = vunpack.c.h.s8.bf16 %v123
  %v508 = vunpack.c.h.s8.bf16 %v124
  %v509 = vunpack.c.h.s8.bf16 %v125
  %v510 = vunpack.c.h.s8.bf16 %v126
  %v511 = vunpack.c.h.s8.bf16 %v127
  %v512 = vunpack.c.h.s8.bf16 %v128
  %v513 = vunpack.c.h.s8.bf16 %v129
  %v514 = vunpack.c.h.s8.bf16 %v130
  %v515 = vunpack.c.h.s8.bf16 %v131
  %v516 = vunpack.c.h.s8.bf16 %v132
  %v517 = vunpack.c.h.s8.bf16 %v133
  %v518 = vunpack.c.h.s8.bf16 %v134
  %v519 = vunpack.c.h.s8.bf16 %v135
  %v520 = vunpack.c.h.s8.bf16 %v136
  %v521 = vunpack.c.h.s8.bf16 %v137
  %v522 = vunpack.c.h.s8.bf16 %v138
  %v523 = vunpack.c.h.s8.bf16 %v139
  %v524 = vunpack.c.h.s8.bf16 %v140
  %v525 = vunpack.c.h.s8.bf16 %v141
  %v526 = vunpack.c.h.s8.bf16 %v142
  %v527 = vunpack.c.h.s8.bf16 %v143
  %v528 = vunpack.c.h.s8.bf16 %v144
  %v529 = vunpack.c.h.s8.bf16 %v145
  %v530 = vunpack.c.l.s8.bf16 %v146
  %v531 = vunpack.c.l.s8.bf16 %v147
  %v532 = vunpack.c.l.s8.bf16 %v148
  %v533 = vunpack.c.l.s8.bf16 %v149
  %v534 = vunpack.c.l.s8.bf16 %v150
  %v535 = vunpack.c.l.s8.bf16 %v151
  %v536 = vunpack.c.l.s8.bf16 %v152
  %v537 = vunpack.c.l.s8.bf16 %v153
  %v538 = vunpack.c.l.s8.bf16 %v154
  %v539 = vunpack.c.l.s8.bf16 %v155
  %v540 = vunpack.c.l.s8.bf16 %v156
  %v541 = vunpack.c.l.s8.bf16 %v157
  %v542 = vunpack.c.l.s8.bf16 %v158
  %v543 = vunpack.c.l.s8.bf16 %v159
  %v544 = vunpack.c.l.s8.bf16 %v160
  %v545 = vunpack.c.l.s8.bf16 %v161
  %v546 = vunpack.c.l.s8.bf16 %v162
  %v547 = vunpack.c.l.s8.bf16 %v163
  %v548 = vunpack.c.l.s8.bf16 %v164
  %v549 = vunpack.c.l.s8.bf16 %v165
  %v550 = vunpack.c.l.s8.bf16 %v166
  %v551 = vunpack.c.l.s8.bf16 %v167
  %v552 = vunpack.c.l.s8.bf16 %v168
  %v553 = vunpack.c.l.s8.bf16 %v169
  %v554 = vunpack.c.l.s8.bf16 %v170
  %v555 = vunpack.c.l.s8.bf16 %v171
  %v556 = vunpack.c.l.s8.bf16 %v172
  %v557 = vunpack.c.l.s8.bf16 %v173
  %v558 = vunpack.c.l.s8.bf16 %v174
  %v559 = vunpack.c.l.s8.bf16 %v175
  %v560 = vunpack.c.l.s8.bf16 %v176
  %v561 = vunpack.c.l.s8.bf16 %v177
  %v562 = vunpack.c.h.s8.bf16 %v146
  %v563 = vunpack.c.h.s8.bf16 %v147
  %v564 = vunpack.c.h.s8.bf16 %v148
  %v565 = vunpack.c.h.s8.bf16 %v149
  %v566 = vunpack.c.h.s8.bf16 %v150
  %v567 = vunpack.c.h.s8.bf16 %v151
  %v568 = vunpack.c.h.s8.bf16 %v152
  %v569 = vunpack.c.h.s8.bf16 %v153
  %v570 = vunpack.c.h.s8.bf16 %v154
  %v571 = vunpack.c.h.s8.bf16 %v155
  %v572 = vunpack.c.h.s8.bf16 %v156
  %v573 = vunpack.c.h.s8.bf16 %v157
  %v574 = vunpack.c.h.s8.bf16 %v158
  %v575 = vunpack.c.h.s8.bf16 %v159
  %v576 = vunpack.c.h.s8.bf16 %v160
  %v577 = vunpack.c.h.s8.bf16 %v161
  %v578 = vunpack.c.h.s8.bf16 %v162
  %v579 = vunpack.c.h.s8.bf16 %v163
  %v580 = vunpack.c.h.s8.bf16 %v164
  %v581 = vunpack.c.h.s8.bf16 %v165
  %v582 = vunpack.c.h.s8.bf16 %v166
  %v583 = vunpack.c.h.s8.bf16 %v167
  %v584 = vunpack.c.h.s8.bf16 %v168
  %v585 = vunpack.c.h.s8.bf16 %v169
  %v586 = vunpack.c.h.s8.bf16 %v170
  %v587 = vunpack.c.h.s8.bf16 %v171
  %v588 = vunpack.c.h.s8.bf16 %v172
  %v589 = vunpack.c.h.s8.bf16 %v173
  %v590 = vunpack.c.h.s8.bf16 %v174
  %v591 = vunpack.c.h.s8.bf16 %v175
  %v592 = vunpack.c.h.s8.bf16 %v176
  %v593 = vunpack.c.h.s8.bf16 %v177
  %v594 = vunpack.c.l.s8.bf16 %v178
  %v595 = vunpack.c.l.s8.bf16 %v179
  %v596 = vunpack.c.l.s8.bf16 %v180
  %v597 = vunpack.c.l.s8.bf16 %v181
  %v598 = vunpack.c.l.s8.bf16 %v182
  %v599 = vunpack.c.l.s8.bf16 %v183
  %v600 = vunpack.c.l.s8.bf16 %v184
  %v601 = vunpack.c.l.s8.bf16 %v185
  %v602 = vunpack.c.l.s8.bf16 %v186
  %v603 = vunpack.c.l.s8.bf16 %v187
  %v604 = vunpack.c.l.s8.bf16 %v188
  %v605 = vunpack.c.l.s8.bf16 %v189
  %v606 = vunpack.c.l.s8.bf16 %v190
  %v607 = vunpack.c.l.s8.bf16 %v191
  %v608 = vunpack.c.l.s8.bf16 %v192
  %v609 = vunpack.c.l.s8.bf16 %v193
  %v610 = vunpack.c.l.s8.bf16 %v194
  %v611 = vunpack.c.l.s8.bf16 %v195
  %v612 = vunpack.c.l.s8.bf16 %v196
  %v613 = vunpack.c.l.s8.bf16 %v197
  %v614 = vunpack.c.l.s8.bf16 %v198
  %v615 = vunpack.c.l.s8.bf16 %v199
  %v616 = vunpack.c.l.s8.bf16 %v200
  %v617 = vunpack.c.l.s8.bf16 %v201
  %v618 = vunpack.c.l.s8.bf16 %v202
  %v619 = vunpack.c.l.s8.bf16 %v203
  %v620 = vunpack.c.l.s8.bf16 %v204
  %v621 = vunpack.c.l.s8.bf16 %v205
  %v622 = vunpack.c.l.s8.bf16 %v206
  %v623 = vunpack.c.l.s8.bf16 %v207
  %v624 = vunpack.c.l.s8.bf16 %v208
  %v625 = vunpack.c.l.s8.bf16 %v209
  %v626 = vunpack.c.h.s8.bf16 %v178
  %v627 = vunpack.c.h.s8.bf16 %v179
  %v628 = vunpack.c.h.s8.bf16 %v180
  %v629 = vunpack.c.h.s8.bf16 %v181
  %v630 = vunpack.c.h.s8.bf16 %v182
  %v631 = vunpack.c.h.s8.bf16 %v183
  %v632 = vunpack.c.h.s8.bf16 %v184
  %v633 = vunpack.c.h.s8.bf16 %v185
  %v634 = vunpack.c.h.s8.bf16 %v186
  %v635 = vunpack.c.h.s8.bf16 %v187
  %v636 = vunpack.c.h.s8.bf16 %v188
  %v637 = vunpack.c.h.s8.bf16 %v189
  %v638 = vunpack.c.h.s8.bf16 %v190
  %v639 = vunpack.c.h.s8.bf16 %v191
  %v640 = vunpack.c.h.s8.bf16 %v192
  %v641 = vunpack.c.h.s8.bf16 %v193
  %v642 = vunpack.c.h.s8.bf16 %v194
  %v643 = vunpack.c.h.s8.bf16 %v195
  %v644 = vunpack.c.h.s8.bf16 %v196
  %v645 = vunpack.c.h.s8.bf16 %v197
  %v646 = vunpack.c.h.s8.bf16 %v198
  %v647 = vunpack.c.h.s8.bf16 %v199
  %v648 = vunpack.c.h.s8.bf16 %v200
  %v649 = vunpack.c.h.s8.bf16 %v201
  %v650 = vunpack.c.h.s8.bf16 %v202
  %v651 = vunpack.c.h.s8.bf16 %v203
  %v652 = vunpack.c.h.s8.bf16 %v204
  %v653 = vunpack.c.h.s8.bf16 %v205
  %v654 = vunpack.c.h.s8.bf16 %v206
  %v655 = vunpack.c.h.s8.bf16 %v207
  %v656 = vunpack.c.h.s8.bf16 %v208
  %v657 = vunpack.c.h.s8.bf16 %v209
  %v658 = vunpack.c.l.s8.bf16 %v210
  %v659 = vunpack.c.l.s8.bf16 %v211
  %v660 = vunpack.c.l.s8.bf16 %v212
  %v661 = vunpack.c.l.s8.bf16 %v213
  %v662 = vunpack.c.l.s8.bf16 %v214
  %v663 = vunpack.c.l.s8.bf16 %v215
  %v664 = vunpack.c.l.s8.bf16 %v216
  %v665 = vunpack.c.l.s8.bf16 %v217
  %v666 = vunpack.c.l.s8.bf16 %v218
  %v667 = vunpack.c.l.s8.bf16 %v219
  %v668 = vunpack.c.l.s8.bf16 %v220
  %v669 = vunpack.c.l.s8.bf16 %v221
  %v670 = vunpack.c.l.s8.bf16 %v222
  %v671 = vunpack.c.l.s8.bf16 %v223
  %v672 = vunpack.c.l.s8.bf16 %v224
  %v673 = vunpack.c.l.s8.bf16 %v225
  %v674 = vunpack.c.l.s8.bf16 %v226
  %v675 = vunpack.c.l.s8.bf16 %v227
  %v676 = vunpack.c.l.s8.bf16 %v228
  %v677 = vunpack.c.l.s8.bf16 %v229
  %v678 = vunpack.c.l.s8.bf16 %v230
  %v679 = vunpack.c.l.s8.bf16 %v231
  %v680 = vunpack.c.l.s8.bf16 %v232
  %v681 = vunpack.c.l.s8.bf16 %v233
  %v682 = vunpack.c.l.s8.bf16 %v234
  %v683 = vunpack.c.l.s8.bf16 %v235
  %v684 = vunpack.c.l.s8.bf16 %v236
  %v685 = vunpack.c.l.s8.bf16 %v237
  %v686 = vunpack.c.l.s8.bf16 %v238
  %v687 = vunpack.c.l.s8.bf16 %v239
  %v688 = vunpack.c.l.s8.bf16 %v240
  %v689 = vunpack.c.l.s8.bf16 %v241
  %v690 = vunpack.c.h.s8.bf16 %v210
  %v691 = vunpack.c.h.s8.bf16 %v211
  %v692 = vunpack.c.h.s8.bf16 %v212
  %v693 = vunpack.c.h.s8.bf16 %v213
  %v694 = vunpack.c.h.s8.bf16 %v214
  %v695 = vunpack.c.h.s8.bf16 %v215
  %v696 = vunpack.c.h.s8.bf16 %v216
  %v697 = vunpack.c.h.s8.bf16 %v217
  %v698 = vunpack.c.h.s8.bf16 %v218
  %v699 = vunpack.c.h.s8.bf16 %v219
  %v700 = vunpack.c.h.s8.bf16 %v220
  %v701 = vunpack.c.h.s8.bf16 %v221
  %v702 = vunpack.c.h.s8.bf16 %v222
  %v703 = vunpack.c.h.s8.bf16 %v223
  %v704 = vunpack.c.h.s8.bf16 %v224
  %v705 = vunpack.c.h.s8.bf16 %v225
  %v706 = vunpack.c.h.s8.bf16 %v226
  %v707 = vunpack.c.h.s8.bf16 %v227
  %v708 = vunpack.c.h.s8.bf16 %v228
  %v709 = vunpack.c.h.s8.bf16 %v229
  %v710 = vunpack.c.h.s8.bf16 %v230
  %v711 = vunpack.c.h.s8.bf16 %v231
  %v712 = vunpack.c.h.s8.bf16 %v232
  %v713 = vunpack.c.h.s8.bf16 %v233
  %v714 = vunpack.c.h.s8.bf16 %v234
  %v715 = vunpack.c.h.s8.bf16 %v235
  %v716 = vunpack.c.h.s8.bf16 %v236
  %v717 = vunpack.c.h.s8.bf16 %v237
  %v718 = vunpack.c.h.s8.bf16 %v238
  %v719 = vunpack.c.h.s8.bf16 %v239
  %v720 = vunpack.c.h.s8.bf16 %v240
  %v721 = vunpack.c.h.s8.bf16 %v241
  %v722 = vunpack.c.l.s8.bf16 %v242
  %v723 = vunpack.c.l.s8.bf16 %v243
  %v724 = vunpack.c.l.s8.bf16 %v244
  %v725 = vunpack.c.l.s8.bf16 %v245
  %v726 = vunpack.c.l.s8.bf16 %v246
  %v727 = vunpack.c.l.s8.bf16 %v247
  %v728 = vunpack.c.l.s8.bf16 %v248
  %v729 = vunpack.c.l.s8.bf16 %v249
  %v730 = vunpack.c.l.s8.bf16 %v250
  %v731 = vunpack.c.l.s8.bf16 %v251
  %v732 = vunpack.c.l.s8.bf16 %v252
  %v733 = vunpack.c.l.s8.bf16 %v253
  %v734 = vunpack.c.l.s8.bf16 %v254
  %v735 = vunpack.c.l.s8.bf16 %v255
  %v736 = vunpack.c.l.s8.bf16 %v256
  %v737 = vunpack.c.l.s8.bf16 %v257
  %v738 = vunpack.c.l.s8.bf16 %v258
  %v739 = vunpack.c.l.s8.bf16 %v259
  %v740 = vunpack.c.l.s8.bf16 %v260
  %v741 = vunpack.c.l.s8.bf16 %v261
  %v742 = vunpack.c.l.s8.bf16 %v262
  %v743 = vunpack.c.l.s8.bf16 %v263
  %v744 = vunpack.c.l.s8.bf16 %v264
  %v745 = vunpack.c.l.s8.bf16 %v265
  %v746 = vunpack.c.l.s8.bf16 %v266
  %v747 = vunpack.c.l.s8.bf16 %v267
  %v748 = vunpack.c.l.s8.bf16 %v268
  %v749 = vunpack.c.l.s8.bf16 %v269
  %v750 = vunpack.c.l.s8.bf16 %v270
  %v751 = vunpack.c.l.s8.bf16 %v271
  %v752 = vunpack.c.l.s8.bf16 %v272
  %v753 = vunpack.c.l.s8.bf16 %v273
  %v754 = vunpack.c.h.s8.bf16 %v242
  %v755 = vunpack.c.h.s8.bf16 %v243
  %v756 = vunpack.c.h.s8.bf16 %v244
  %v757 = vunpack.c.h.s8.bf16 %v245
  %v758 = vunpack.c.h.s8.bf16 %v246
  %v759 = vunpack.c.h.s8.bf16 %v247
  %v760 = vunpack.c.h.s8.bf16 %v248
  %v761 = vunpack.c.h.s8.bf16 %v249
  %v762 = vunpack.c.h.s8.bf16 %v250
  %v763 = vunpack.c.h.s8.bf16 %v251
  %v764 = vunpack.c.h.s8.bf16 %v252
  %v765 = vunpack.c.h.s8.bf16 %v253
  %v766 = vunpack.c.h.s8.bf16 %v254
  %v767 = vunpack.c.h.s8.bf16 %v255
  %v768 = vunpack.c.h.s8.bf16 %v256
  %v769 = vunpack.c.h.s8.bf16 %v257
  %v770 = vunpack.c.h.s8.bf16 %v258
  %v771 = vunpack.c.h.s8.bf16 %v259
  %v772 = vunpack.c.h.s8.bf16 %v260
  %v773 = vunpack.c.h.s8.bf16 %v261
  %v774 = vunpack.c.h.s8.bf16 %v262
  %v775 = vunpack.c.h.s8.bf16 %v263
  %v776 = vunpack.c.h.s8.bf16 %v264
  %v777 = vunpack.c.h.s8.bf16 %v265
  %v778 = vunpack.c.h.s8.bf16 %v266
  %v779 = vunpack.c.h.s8.bf16 %v267
  %v780 = vunpack.c.h.s8.bf16 %v268
  %v781 = vunpack.c.h.s8.bf16 %v269
  %v782 = vunpack.c.h.s8.bf16 %v270
  %v783 = vunpack.c.h.s8.bf16 %v271
  %v784 = vunpack.c.h.s8.bf16 %v272
  %v785 = vunpack.c.h.s8.bf16 %v273
  %v788 = vunpack.c.l.s4 1966171168
  %v789 = vunpack.c.0.s8 %v788
  %v790 = vlaneseq
  %v791 = vshrl.u32 %v790, 7
  %v792 = vsub.s32 %v789, %v791
  %v793 = vrot.slane %v17, %v792
  %v794 = vcombine.high %v793, %v793
  %v796 = vunpack.c.l.s4 1966171168
  %v797 = vunpack.c.0.s8 %v796
  %v798 = vlaneseq
  %v799 = vshrl.u32 %v798, 7
  %v800 = vsub.s32 %v797, %v799
  %v801 = vrot.slane %v793, %v800
  %v803 = vunpack.c.l.s4 1966171168
  %v804 = vunpack.c.0.s8 %v803
  %v805 = vlaneseq
  %v806 = vshrl.u32 %v805, 7
  %v807 = vsub.s32 %v804, %v806
  %v808 = vrot.slane %v794, %v807
  %811 = vmatprep.subr.bf16.mxu0 %v275
  %812 = vmatpush1.bf16.msra.mxu0 %v274
  %813 = vmatprep.subr.bf16.mxu0 %v307
  %814 = vmatpush1.bf16.msra.mxu0 %v306
  %815 = vmatprep.subr.bf16.mxu0 %v339
  %816 = vmatpush1.bf16.msra.mxu0 %v338
  %817 = vmatprep.subr.bf16.mxu0 %v371
  %818 = vmatpush1.bf16.msra.mxu0 %v370
  %819 = vmatprep.subr.bf16.mxu0 %v403
  %820 = vmatpush1.bf16.msra.mxu0 %v402
  %821 = vmatprep.subr.bf16.mxu0 %v435
  %822 = vmatpush1.bf16.msra.mxu0 %v434
  %823 = vmatprep.subr.bf16.mxu0 %v467
  %824 = vmatpush1.bf16.msra.mxu0 %v466
  %825 = vmatprep.subr.bf16.mxu0 %v499
  %826 = vmatpush1.bf16.msra.mxu0 %v498
  %827 = vmatprep.subr.bf16.mxu0 %v531
  %828 = vmatpush1.bf16.msra.mxu0 %v530
  %829 = vmatprep.subr.bf16.mxu0 %v563
  %830 = vmatpush1.bf16.msra.mxu0 %v562
  %831 = vmatprep.subr.bf16.mxu0 %v595
  %832 = vmatpush1.bf16.msra.mxu0 %v594
  %833 = vmatprep.subr.bf16.mxu0 %v627
  %834 = vmatpush1.bf16.msra.mxu0 %v626
  %835 = vmatprep.subr.bf16.mxu0 %v659
  %836 = vmatpush1.bf16.msra.mxu0 %v658
  %837 = vmatprep.subr.bf16.mxu0 %v691
  %838 = vmatpush1.bf16.msra.mxu0 %v690
  %839 = vmatprep.subr.bf16.mxu0 %v723
  %840 = vmatpush1.bf16.msra.mxu0 %v722
  %841 = vmatprep.subr.bf16.mxu0 %v755
  %842 = vmatpush1.bf16.msra.mxu0 %v754
  %843 = vmatprep.mubr.bf16.mxu0 %v808
  %844 = vmatmul.mubr.bf16.gmra.mrb[0].mxu0 %v801
  %v845 = vpop.f32.mrb[0].mxu0
  %v846 = vadd.f32 0.0, %v845
  %v847 = vpop.f32.mrb[0].mxu0
  %v848 = vadd.f32 0.0, %v847
  %v849 = vpop.f32.mrb[0].mxu0
  %v850 = vpop.f32.mrb[0].mxu0
  %851 = vdwg.mxu0
  %852 = vmatprep.subr.bf16.mxu0 %v277
  %853 = vmatpush1.bf16.msra.mxu0 %v276
  %854 = vmatprep.subr.bf16.mxu0 %v309
  %855 = vmatpush1.bf16.msra.mxu0 %v308
  %856 = vmatprep.subr.bf16.mxu0 %v341
  %857 = vmatpush1.bf16.msra.mxu0 %v340
  %858 = vmatprep.subr.bf16.mxu0 %v373
  %859 = vmatpush1.bf16.msra.mxu0 %v372
  %860 = vmatprep.subr.bf16.mxu0 %v405
  %861 = vmatpush1.bf16.msra.mxu0 %v404
  %862 = vmatprep.subr.bf16.mxu0 %v437
  %863 = vmatpush1.bf16.msra.mxu0 %v436
  %864 = vmatprep.subr.bf16.mxu0 %v469
  %865 = vmatpush1.bf16.msra.mxu0 %v468
  %866 = vmatprep.subr.bf16.mxu0 %v501
  %867 = vmatpush1.bf16.msra.mxu0 %v500
  %868 = vmatprep.subr.bf16.mxu0 %v533
  %869 = vmatpush1.bf16.msra.mxu0 %v532
  %870 = vmatprep.subr.bf16.mxu0 %v565
  %871 = vmatpush1.bf16.msra.mxu0 %v564
  %872 = vmatprep.subr.bf16.mxu0 %v597
  %873 = vmatpush1.bf16.msra.mxu0 %v596
  %874 = vmatprep.subr.bf16.mxu0 %v629
  %875 = vmatpush1.bf16.msra.mxu0 %v628
  %876 = vmatprep.subr.bf16.mxu0 %v661
  %877 = vmatpush1.bf16.msra.mxu0 %v660
  %878 = vmatprep.subr.bf16.mxu0 %v693
  %879 = vmatpush1.bf16.msra.mxu0 %v692
  %880 = vmatprep.subr.bf16.mxu0 %v725
  %881 = vmatpush1.bf16.msra.mxu0 %v724
  %882 = vmatprep.subr.bf16.mxu0 %v757
  %883 = vmatpush1.bf16.msra.mxu0 %v756
  %884 = vmatprep.mubr.bf16.mxu0 %v808
  %885 = vmatmul.mubr.bf16.gmra.mrb[0].mxu0 %v801
  %v886 = vpop.f32.mrb[0].mxu0
  %v887 = vadd.f32 0.0, %v886
  %v888 = vpop.f32.mrb[0].mxu0
  %v889 = vadd.f32 0.0, %v888
  %v890 = vpop.f32.mrb[0].mxu0
  %v891 = vpop.f32.mrb[0].mxu0
  %892 = vdwg.mxu0
  %893 = vmatprep.subr.bf16.mxu0 %v279
  %894 = vmatpush1.bf16.msra.mxu0 %v278
  %895 = vmatprep.subr.bf16.mxu0 %v311
  %896 = vmatpush1.bf16.msra.mxu0 %v310
  %897 = vmatprep.subr.bf16.mxu0 %v343
  %898 = vmatpush1.bf16.msra.mxu0 %v342
  %899 = vmatprep.subr.bf16.mxu0 %v375
  %900 = vmatpush1.bf16.msra.mxu0 %v374
  %901 = vmatprep.subr.bf16.mxu0 %v407
  %902 = vmatpush1.bf16.msra.mxu0 %v406
  %903 = vmatprep.subr.bf16.mxu0 %v439
  %904 = vmatpush1.bf16.msra.mxu0 %v438
  %905 = vmatprep.subr.bf16.mxu0 %v471
  %906 = vmatpush1.bf16.msra.mxu0 %v470
  %907 = vmatprep.subr.bf16.mxu0 %v503
  %908 = vmatpush1.bf16.msra.mxu0 %v502
  %909 = vmatprep.subr.bf16.mxu0 %v535
  %910 = vmatpush1.bf16.msra.mxu0 %v534
  %911 = vmatprep.subr.bf16.mxu0 %v567
  %912 = vmatpush1.bf16.msra.mxu0 %v566
  %913 = vmatprep.subr.bf16.mxu0 %v599
  %914 = vmatpush1.bf16.msra.mxu0 %v598
  %915 = vmatprep.subr.bf16.mxu0 %v631
  %916 = vmatpush1.bf16.msra.mxu0 %v630
  %917 = vmatprep.subr.bf16.mxu0 %v663
  %918 = vmatpush1.bf16.msra.mxu0 %v662
  %919 = vmatprep.subr.bf16.mxu0 %v695
  %920 = vmatpush1.bf16.msra.mxu0 %v694
  %921 = vmatprep.subr.bf16.mxu0 %v727
  %922 = vmatpush1.bf16.msra.mxu0 %v726
  %923 = vmatprep.subr.bf16.mxu0 %v759
  %924 = vmatpush1.bf16.msra.mxu0 %v758
  %925 = vmatprep.mubr.bf16.mxu0 %v808
  %926 = vmatmul.mubr.bf16.gmra.mrb[0].mxu0 %v801
  %v927 = vpop.f32.mrb[0].mxu0
  %v928 = vadd.f32 0.0, %v927
  %v929 = vpop.f32.mrb[0].mxu0
  %v930 = vadd.f32 0.0, %v929
  %v931 = vpop.f32.mrb[0].mxu0
  %v932 = vpop.f32.mrb[0].mxu0
  %933 = vdwg.mxu0
  %934 = vmatprep.subr.bf16.mxu0 %v281
  %935 = vmatpush1.bf16.msra.mxu0 %v280
  %936 = vmatprep.subr.bf16.mxu0 %v313
  %937 = vmatpush1.bf16.msra.mxu0 %v312
  %938 = vmatprep.subr.bf16.mxu0 %v345
  %939 = vmatpush1.bf16.msra.mxu0 %v344
  %940 = vmatprep.subr.bf16.mxu0 %v377
  %941 = vmatpush1.bf16.msra.mxu0 %v376
  %942 = vmatprep.subr.bf16.mxu0 %v409
  %943 = vmatpush1.bf16.msra.mxu0 %v408
  %944 = vmatprep.subr.bf16.mxu0 %v441
  %945 = vmatpush1.bf16.msra.mxu0 %v440
  %946 = vmatprep.subr.bf16.mxu0 %v473
  %947 = vmatpush1.bf16.msra.mxu0 %v472
  %948 = vmatprep.subr.bf16.mxu0 %v505
  %949 = vmatpush1.bf16.msra.mxu0 %v504
  %950 = vmatprep.subr.bf16.mxu0 %v537
  %951 = vmatpush1.bf16.msra.mxu0 %v536
  %952 = vmatprep.subr.bf16.mxu0 %v569
  %953 = vmatpush1.bf16.msra.mxu0 %v568
  %954 = vmatprep.subr.bf16.mxu0 %v601
  %955 = vmatpush1.bf16.msra.mxu0 %v600
  %956 = vmatprep.subr.bf16.mxu0 %v633
  %957 = vmatpush1.bf16.msra.mxu0 %v632
  %958 = vmatprep.subr.bf16.mxu0 %v665
  %959 = vmatpush1.bf16.msra.mxu0 %v664
  %960 = vmatprep.subr.bf16.mxu0 %v697
  %961 = vmatpush1.bf16.msra.mxu0 %v696
  %962 = vmatprep.subr.bf16.mxu0 %v729
  %963 = vmatpush1.bf16.msra.mxu0 %v728
  %964 = vmatprep.subr.bf16.mxu0 %v761
  %965 = vmatpush1.bf16.msra.mxu0 %v760
  %966 = vmatprep.mubr.bf16.mxu0 %v808
  %967 = vmatmul.mubr.bf16.gmra.mrb[0].mxu0 %v801
  %v968 = vpop.f32.mrb[0].mxu0
  %v969 = vadd.f32 0.0, %v968
  %v970 = vpop.f32.mrb[0].mxu0
  %v971 = vadd.f32 0.0, %v970
  %v972 = vpop.f32.mrb[0].mxu0
  %v973 = vpop.f32.mrb[0].mxu0
  %974 = vdwg.mxu0
  %975 = vmatprep.subr.bf16.mxu0 %v283
  %976 = vmatpush1.bf16.msra.mxu0 %v282
  %977 = vmatprep.subr.bf16.mxu0 %v315
  %978 = vmatpush1.bf16.msra.mxu0 %v314
  %979 = vmatprep.subr.bf16.mxu0 %v347
  %980 = vmatpush1.bf16.msra.mxu0 %v346
  %981 = vmatprep.subr.bf16.mxu0 %v379
  %982 = vmatpush1.bf16.msra.mxu0 %v378
  %983 = vmatprep.subr.bf16.mxu0 %v411
  %984 = vmatpush1.bf16.msra.mxu0 %v410
  %985 = vmatprep.subr.bf16.mxu0 %v443
  %986 = vmatpush1.bf16.msra.mxu0 %v442
  %987 = vmatprep.subr.bf16.mxu0 %v475
  %988 = vmatpush1.bf16.msra.mxu0 %v474
  %989 = vmatprep.subr.bf16.mxu0 %v507
  %990 = vmatpush1.bf16.msra.mxu0 %v506
  %991 = vmatprep.subr.bf16.mxu0 %v539
  %992 = vmatpush1.bf16.msra.mxu0 %v538
  %993 = vmatprep.subr.bf16.mxu0 %v571
  %994 = vmatpush1.bf16.msra.mxu0 %v570
  %995 = vmatprep.subr.bf16.mxu0 %v603
  %996 = vmatpush1.bf16.msra.mxu0 %v602
  %997 = vmatprep.subr.bf16.mxu0 %v635
  %998 = vmatpush1.bf16.msra.mxu0 %v634
  %999 = vmatprep.subr.bf16.mxu0 %v667
  %1000 = vmatpush1.bf16.msra.mxu0 %v666
  %1001 = vmatprep.subr.bf16.mxu0 %v699
  %1002 = vmatpush1.bf16.msra.mxu0 %v698
  %1003 = vmatprep.subr.bf16.mxu0 %v731
  %1004 = vmatpush1.bf16.msra.mxu0 %v730
  %1005 = vmatprep.subr.bf16.mxu0 %v763
  %1006 = vmatpush1.bf16.msra.mxu0 %v762
  %1007 = vmatprep.mubr.bf16.mxu0 %v808
  %1008 = vmatmul.mubr.bf16.gmra.mrb[0].mxu0 %v801
  %v1009 = vpop.f32.mrb[0].mxu0
  %v1010 = vadd.f32 0.0, %v1009
  %v1011 = vpop.f32.mrb[0].mxu0
  %v1012 = vadd.f32 0.0, %v1011
  %v1013 = vpop.f32.mrb[0].mxu0
  %v1014 = vpop.f32.mrb[0].mxu0
  %1015 = vdwg.mxu0
  %1016 = vmatprep.subr.bf16.mxu0 %v285
  %1017 = vmatpush1.bf16.msra.mxu0 %v284
  %1018 = vmatprep.subr.bf16.mxu0 %v317
  %1019 = vmatpush1.bf16.msra.mxu0 %v316
  %1020 = vmatprep.subr.bf16.mxu0 %v349
  %1021 = vmatpush1.bf16.msra.mxu0 %v348
  %1022 = vmatprep.subr.bf16.mxu0 %v381
  %1023 = vmatpush1.bf16.msra.mxu0 %v380
  %1024 = vmatprep.subr.bf16.mxu0 %v413
  %1025 = vmatpush1.bf16.msra.mxu0 %v412
  %1026 = vmatprep.subr.bf16.mxu0 %v445
  %1027 = vmatpush1.bf16.msra.mxu0 %v444
  %1028 = vmatprep.subr.bf16.mxu0 %v477
  %1029 = vmatpush1.bf16.msra.mxu0 %v476
  %1030 = vmatprep.subr.bf16.mxu0 %v509
  %1031 = vmatpush1.bf16.msra.mxu0 %v508
  %1032 = vmatprep.subr.bf16.mxu0 %v541
  %1033 = vmatpush1.bf16.msra.mxu0 %v540
  %1034 = vmatprep.subr.bf16.mxu0 %v573
  %1035 = vmatpush1.bf16.msra.mxu0 %v572
  %1036 = vmatprep.subr.bf16.mxu0 %v605
  %1037 = vmatpush1.bf16.msra.mxu0 %v604
  %1038 = vmatprep.subr.bf16.mxu0 %v637
  %1039 = vmatpush1.bf16.msra.mxu0 %v636
  %1040 = vmatprep.subr.bf16.mxu0 %v669
  %1041 = vmatpush1.bf16.msra.mxu0 %v668
  %1042 = vmatprep.subr.bf16.mxu0 %v701
  %1043 = vmatpush1.bf16.msra.mxu0 %v700
  %1044 = vmatprep.subr.bf16.mxu0 %v733
  %1045 = vmatpush1.bf16.msra.mxu0 %v732
  %1046 = vmatprep.subr.bf16.mxu0 %v765
  %1047 = vmatpush1.bf16.msra.mxu0 %v764
  %1048 = vmatprep.mubr.bf16.mxu0 %v808
  %1049 = vmatmul.mubr.bf16.gmra.mrb[0].mxu0 %v801
  %v1050 = vpop.f32.mrb[0].mxu0
  %v1051 = vadd.f32 0.0, %v1050
  %v1052 = vpop.f32.mrb[0].mxu0
  %v1053 = vadd.f32 0.0, %v1052
  %v1054 = vpop.f32.mrb[0].mxu0
  %v1055 = vpop.f32.mrb[0].mxu0
  %1056 = vdwg.mxu0
  %1057 = vmatprep.subr.bf16.mxu0 %v287
  %1058 = vmatpush1.bf16.msra.mxu0 %v286
  %1059 = vmatprep.subr.bf16.mxu0 %v319
  %1060 = vmatpush1.bf16.msra.mxu0 %v318
  %1061 = vmatprep.subr.bf16.mxu0 %v351
  %1062 = vmatpush1.bf16.msra.mxu0 %v350
  %1063 = vmatprep.subr.bf16.mxu0 %v383
  %1064 = vmatpush1.bf16.msra.mxu0 %v382
  %1065 = vmatprep.subr.bf16.mxu0 %v415
  %1066 = vmatpush1.bf16.msra.mxu0 %v414
  %1067 = vmatprep.subr.bf16.mxu0 %v447
  %1068 = vmatpush1.bf16.msra.mxu0 %v446
  %1069 = vmatprep.subr.bf16.mxu0 %v479
  %1070 = vmatpush1.bf16.msra.mxu0 %v478
  %1071 = vmatprep.subr.bf16.mxu0 %v511
  %1072 = vmatpush1.bf16.msra.mxu0 %v510
  %1073 = vmatprep.subr.bf16.mxu0 %v543
  %1074 = vmatpush1.bf16.msra.mxu0 %v542
  %1075 = vmatprep.subr.bf16.mxu0 %v575
  %1076 = vmatpush1.bf16.msra.mxu0 %v574
  %1077 = vmatprep.subr.bf16.mxu0 %v607
  %1078 = vmatpush1.bf16.msra.mxu0 %v606
  %1079 = vmatprep.subr.bf16.mxu0 %v639
  %1080 = vmatpush1.bf16.msra.mxu0 %v638
  %1081 = vmatprep.subr.bf16.mxu0 %v671
  %1082 = vmatpush1.bf16.msra.mxu0 %v670
  %1083 = vmatprep.subr.bf16.mxu0 %v703
  %1084 = vmatpush1.bf16.msra.mxu0 %v702
  %1085 = vmatprep.subr.bf16.mxu0 %v735
  %1086 = vmatpush1.bf16.msra.mxu0 %v734
  %1087 = vmatprep.subr.bf16.mxu0 %v767
  %1088 = vmatpush1.bf16.msra.mxu0 %v766
  %1089 = vmatprep.mubr.bf16.mxu0 %v808
  %1090 = vmatmul.mubr.bf16.gmra.mrb[0].mxu0 %v801
  %v1091 = vpop.f32.mrb[0].mxu0
  %v1092 = vadd.f32 0.0, %v1091
  %v1093 = vpop.f32.mrb[0].mxu0
  %v1094 = vadd.f32 0.0, %v1093
  %v1095 = vpop.f32.mrb[0].mxu0
  %v1096 = vpop.f32.mrb[0].mxu0
  %1097 = vdwg.mxu0
  %1098 = vmatprep.subr.bf16.mxu0 %v289
  %1099 = vmatpush1.bf16.msra.mxu0 %v288
  %1100 = vmatprep.subr.bf16.mxu0 %v321
  %1101 = vmatpush1.bf16.msra.mxu0 %v320
  %1102 = vmatprep.subr.bf16.mxu0 %v353
  %1103 = vmatpush1.bf16.msra.mxu0 %v352
  %1104 = vmatprep.subr.bf16.mxu0 %v385
  %1105 = vmatpush1.bf16.msra.mxu0 %v384
  %1106 = vmatprep.subr.bf16.mxu0 %v417
  %1107 = vmatpush1.bf16.msra.mxu0 %v416
  %1108 = vmatprep.subr.bf16.mxu0 %v449
  %1109 = vmatpush1.bf16.msra.mxu0 %v448
  %1110 = vmatprep.subr.bf16.mxu0 %v481
  %1111 = vmatpush1.bf16.msra.mxu0 %v480
  %1112 = vmatprep.subr.bf16.mxu0 %v513
  %1113 = vmatpush1.bf16.msra.mxu0 %v512
  %1114 = vmatprep.subr.bf16.mxu0 %v545
  %1115 = vmatpush1.bf16.msra.mxu0 %v544
  %1116 = vmatprep.subr.bf16.mxu0 %v577
  %1117 = vmatpush1.bf16.msra.mxu0 %v576
  %1118 = vmatprep.subr.bf16.mxu0 %v609
  %1119 = vmatpush1.bf16.msra.mxu0 %v608
  %1120 = vmatprep.subr.bf16.mxu0 %v641
  %1121 = vmatpush1.bf16.msra.mxu0 %v640
  %1122 = vmatprep.subr.bf16.mxu0 %v673
  %1123 = vmatpush1.bf16.msra.mxu0 %v672
  %1124 = vmatprep.subr.bf16.mxu0 %v705
  %1125 = vmatpush1.bf16.msra.mxu0 %v704
  %1126 = vmatprep.subr.bf16.mxu0 %v737
  %1127 = vmatpush1.bf16.msra.mxu0 %v736
  %1128 = vmatprep.subr.bf16.mxu0 %v769
  %1129 = vmatpush1.bf16.msra.mxu0 %v768
  %1130 = vmatprep.mubr.bf16.mxu0 %v808
  %1131 = vmatmul.mubr.bf16.gmra.mrb[0].mxu0 %v801
  %v1132 = vpop.f32.mrb[0].mxu0
  %v1133 = vadd.f32 0.0, %v1132
  %v1134 = vpop.f32.mrb[0].mxu0
  %v1135 = vadd.f32 0.0, %v1134
  %v1136 = vpop.f32.mrb[0].mxu0
  %v1137 = vpop.f32.mrb[0].mxu0
  %1138 = vdwg.mxu0
  %1139 = vmatprep.subr.bf16.mxu0 %v291
  %1140 = vmatpush1.bf16.msra.mxu0 %v290
  %1141 = vmatprep.subr.bf16.mxu0 %v323
  %1142 = vmatpush1.bf16.msra.mxu0 %v322
  %1143 = vmatprep.subr.bf16.mxu0 %v355
  %1144 = vmatpush1.bf16.msra.mxu0 %v354
  %1145 = vmatprep.subr.bf16.mxu0 %v387
  %1146 = vmatpush1.bf16.msra.mxu0 %v386
  %1147 = vmatprep.subr.bf16.mxu0 %v419
  %1148 = vmatpush1.bf16.msra.mxu0 %v418
  %1149 = vmatprep.subr.bf16.mxu0 %v451
  %1150 = vmatpush1.bf16.msra.mxu0 %v450
  %1151 = vmatprep.subr.bf16.mxu0 %v483
  %1152 = vmatpush1.bf16.msra.mxu0 %v482
  %1153 = vmatprep.subr.bf16.mxu0 %v515
  %1154 = vmatpush1.bf16.msra.mxu0 %v514
  %1155 = vmatprep.subr.bf16.mxu0 %v547
  %1156 = vmatpush1.bf16.msra.mxu0 %v546
  %1157 = vmatprep.subr.bf16.mxu0 %v579
  %1158 = vmatpush1.bf16.msra.mxu0 %v578
  %1159 = vmatprep.subr.bf16.mxu0 %v611
  %1160 = vmatpush1.bf16.msra.mxu0 %v610
  %1161 = vmatprep.subr.bf16.mxu0 %v643
  %1162 = vmatpush1.bf16.msra.mxu0 %v642
  %1163 = vmatprep.subr.bf16.mxu0 %v675
  %1164 = vmatpush1.bf16.msra.mxu0 %v674
  %1165 = vmatprep.subr.bf16.mxu0 %v707
  %1166 = vmatpush1.bf16.msra.mxu0 %v706
  %1167 = vmatprep.subr.bf16.mxu0 %v739
  %1168 = vmatpush1.bf16.msra.mxu0 %v738
  %1169 = vmatprep.subr.bf16.mxu0 %v771
  %1170 = vmatpush1.bf16.msra.mxu0 %v770
  %1171 = vmatprep.mubr.bf16.mxu0 %v808
  %1172 = vmatmul.mubr.bf16.gmra.mrb[0].mxu0 %v801
  %v1173 = vpop.f32.mrb[0].mxu0
  %v1174 = vadd.f32 0.0, %v1173
  %v1175 = vpop.f32.mrb[0].mxu0
  %v1176 = vadd.f32 0.0, %v1175
  %v1177 = vpop.f32.mrb[0].mxu0
  %v1178 = vpop.f32.mrb[0].mxu0
  %1179 = vdwg.mxu0
  %1180 = vmatprep.subr.bf16.mxu0 %v293
  %1181 = vmatpush1.bf16.msra.mxu0 %v292
  %1182 = vmatprep.subr.bf16.mxu0 %v325
  %1183 = vmatpush1.bf16.msra.mxu0 %v324
  %1184 = vmatprep.subr.bf16.mxu0 %v357
  %1185 = vmatpush1.bf16.msra.mxu0 %v356
  %1186 = vmatprep.subr.bf16.mxu0 %v389
  %1187 = vmatpush1.bf16.msra.mxu0 %v388
  %1188 = vmatprep.subr.bf16.mxu0 %v421
  %1189 = vmatpush1.bf16.msra.mxu0 %v420
  %1190 = vmatprep.subr.bf16.mxu0 %v453
  %1191 = vmatpush1.bf16.msra.mxu0 %v452
  %1192 = vmatprep.subr.bf16.mxu0 %v485
  %1193 = vmatpush1.bf16.msra.mxu0 %v484
  %1194 = vmatprep.subr.bf16.mxu0 %v517
  %1195 = vmatpush1.bf16.msra.mxu0 %v516
  %1196 = vmatprep.subr.bf16.mxu0 %v549
  %1197 = vmatpush1.bf16.msra.mxu0 %v548
  %1198 = vmatprep.subr.bf16.mxu0 %v581
  %1199 = vmatpush1.bf16.msra.mxu0 %v580
  %1200 = vmatprep.subr.bf16.mxu0 %v613
  %1201 = vmatpush1.bf16.msra.mxu0 %v612
  %1202 = vmatprep.subr.bf16.mxu0 %v645
  %1203 = vmatpush1.bf16.msra.mxu0 %v644
  %1204 = vmatprep.subr.bf16.mxu0 %v677
  %1205 = vmatpush1.bf16.msra.mxu0 %v676
  %1206 = vmatprep.subr.bf16.mxu0 %v709
  %1207 = vmatpush1.bf16.msra.mxu0 %v708
  %1208 = vmatprep.subr.bf16.mxu0 %v741
  %1209 = vmatpush1.bf16.msra.mxu0 %v740
  %1210 = vmatprep.subr.bf16.mxu0 %v773
  %1211 = vmatpush1.bf16.msra.mxu0 %v772
  %1212 = vmatprep.mubr.bf16.mxu0 %v808
  %1213 = vmatmul.mubr.bf16.gmra.mrb[0].mxu0 %v801
  %v1214 = vpop.f32.mrb[0].mxu0
  %v1215 = vadd.f32 0.0, %v1214
  %v1216 = vpop.f32.mrb[0].mxu0
  %v1217 = vadd.f32 0.0, %v1216
  %v1218 = vpop.f32.mrb[0].mxu0
  %v1219 = vpop.f32.mrb[0].mxu0
  %1220 = vdwg.mxu0
  %1221 = vmatprep.subr.bf16.mxu0 %v295
  %1222 = vmatpush1.bf16.msra.mxu0 %v294
  %1223 = vmatprep.subr.bf16.mxu0 %v327
  %1224 = vmatpush1.bf16.msra.mxu0 %v326
  %1225 = vmatprep.subr.bf16.mxu0 %v359
  %1226 = vmatpush1.bf16.msra.mxu0 %v358
  %1227 = vmatprep.subr.bf16.mxu0 %v391
  %1228 = vmatpush1.bf16.msra.mxu0 %v390
  %1229 = vmatprep.subr.bf16.mxu0 %v423
  %1230 = vmatpush1.bf16.msra.mxu0 %v422
  %1231 = vmatprep.subr.bf16.mxu0 %v455
  %1232 = vmatpush1.bf16.msra.mxu0 %v454
  %1233 = vmatprep.subr.bf16.mxu0 %v487
  %1234 = vmatpush1.bf16.msra.mxu0 %v486
  %1235 = vmatprep.subr.bf16.mxu0 %v519
  %1236 = vmatpush1.bf16.msra.mxu0 %v518
  %1237 = vmatprep.subr.bf16.mxu0 %v551
  %1238 = vmatpush1.bf16.msra.mxu0 %v550
  %1239 = vmatprep.subr.bf16.mxu0 %v583
  %1240 = vmatpush1.bf16.msra.mxu0 %v582
  %1241 = vmatprep.subr.bf16.mxu0 %v615
  %1242 = vmatpush1.bf16.msra.mxu0 %v614
  %1243 = vmatprep.subr.bf16.mxu0 %v647
  %1244 = vmatpush1.bf16.msra.mxu0 %v646
  %1245 = vmatprep.subr.bf16.mxu0 %v679
  %1246 = vmatpush1.bf16.msra.mxu0 %v678
  %1247 = vmatprep.subr.bf16.mxu0 %v711
  %1248 = vmatpush1.bf16.msra.mxu0 %v710
  %1249 = vmatprep.subr.bf16.mxu0 %v743
  %1250 = vmatpush1.bf16.msra.mxu0 %v742
  %1251 = vmatprep.subr.bf16.mxu0 %v775
  %1252 = vmatpush1.bf16.msra.mxu0 %v774
  %1253 = vmatprep.mubr.bf16.mxu0 %v808
  %1254 = vmatmul.mubr.bf16.gmra.mrb[0].mxu0 %v801
  %v1255 = vpop.f32.mrb[0].mxu0
  %v1256 = vadd.f32 0.0, %v1255
  %v1257 = vpop.f32.mrb[0].mxu0
  %v1258 = vadd.f32 0.0, %v1257
  %v1259 = vpop.f32.mrb[0].mxu0
  %v1260 = vpop.f32.mrb[0].mxu0
  %1261 = vdwg.mxu0
  %1262 = vmatprep.subr.bf16.mxu0 %v297
  %1263 = vmatpush1.bf16.msra.mxu0 %v296
  %1264 = vmatprep.subr.bf16.mxu0 %v329
  %1265 = vmatpush1.bf16.msra.mxu0 %v328
  %1266 = vmatprep.subr.bf16.mxu0 %v361
  %1267 = vmatpush1.bf16.msra.mxu0 %v360
  %1268 = vmatprep.subr.bf16.mxu0 %v393
  %1269 = vmatpush1.bf16.msra.mxu0 %v392
  %1270 = vmatprep.subr.bf16.mxu0 %v425
  %1271 = vmatpush1.bf16.msra.mxu0 %v424
  %1272 = vmatprep.subr.bf16.mxu0 %v457
  %1273 = vmatpush1.bf16.msra.mxu0 %v456
  %1274 = vmatprep.subr.bf16.mxu0 %v489
  %1275 = vmatpush1.bf16.msra.mxu0 %v488
  %1276 = vmatprep.subr.bf16.mxu0 %v521
  %1277 = vmatpush1.bf16.msra.mxu0 %v520
  %1278 = vmatprep.subr.bf16.mxu0 %v553
  %1279 = vmatpush1.bf16.msra.mxu0 %v552
  %1280 = vmatprep.subr.bf16.mxu0 %v585
  %1281 = vmatpush1.bf16.msra.mxu0 %v584
  %1282 = vmatprep.subr.bf16.mxu0 %v617
  %1283 = vmatpush1.bf16.msra.mxu0 %v616
  %1284 = vmatprep.subr.bf16.mxu0 %v649
  %1285 = vmatpush1.bf16.msra.mxu0 %v648
  %1286 = vmatprep.subr.bf16.mxu0 %v681
  %1287 = vmatpush1.bf16.msra.mxu0 %v680
  %1288 = vmatprep.subr.bf16.mxu0 %v713
  %1289 = vmatpush1.bf16.msra.mxu0 %v712
  %1290 = vmatprep.subr.bf16.mxu0 %v745
  %1291 = vmatpush1.bf16.msra.mxu0 %v744
  %1292 = vmatprep.subr.bf16.mxu0 %v777
  %1293 = vmatpush1.bf16.msra.mxu0 %v776
  %1294 = vmatprep.mubr.bf16.mxu0 %v808
  %1295 = vmatmul.mubr.bf16.gmra.mrb[0].mxu0 %v801
  %v1296 = vpop.f32.mrb[0].mxu0
  %v1297 = vadd.f32 0.0, %v1296
  %v1298 = vpop.f32.mrb[0].mxu0
  %v1299 = vadd.f32 0.0, %v1298
  %v1300 = vpop.f32.mrb[0].mxu0
  %v1301 = vpop.f32.mrb[0].mxu0
  %1302 = vdwg.mxu0
  %1303 = vmatprep.subr.bf16.mxu0 %v299
  %1304 = vmatpush1.bf16.msra.mxu0 %v298
  %1305 = vmatprep.subr.bf16.mxu0 %v331
  %1306 = vmatpush1.bf16.msra.mxu0 %v330
  %1307 = vmatprep.subr.bf16.mxu0 %v363
  %1308 = vmatpush1.bf16.msra.mxu0 %v362
  %1309 = vmatprep.subr.bf16.mxu0 %v395
  %1310 = vmatpush1.bf16.msra.mxu0 %v394
  %1311 = vmatprep.subr.bf16.mxu0 %v427
  %1312 = vmatpush1.bf16.msra.mxu0 %v426
  %1313 = vmatprep.subr.bf16.mxu0 %v459
  %1314 = vmatpush1.bf16.msra.mxu0 %v458
  %1315 = vmatprep.subr.bf16.mxu0 %v491
  %1316 = vmatpush1.bf16.msra.mxu0 %v490
  %1317 = vmatprep.subr.bf16.mxu0 %v523
  %1318 = vmatpush1.bf16.msra.mxu0 %v522
  %1319 = vmatprep.subr.bf16.mxu0 %v555
  %1320 = vmatpush1.bf16.msra.mxu0 %v554
  %1321 = vmatprep.subr.bf16.mxu0 %v587
  %1322 = vmatpush1.bf16.msra.mxu0 %v586
  %1323 = vmatprep.subr.bf16.mxu0 %v619
  %1324 = vmatpush1.bf16.msra.mxu0 %v618
  %1325 = vmatprep.subr.bf16.mxu0 %v651
  %1326 = vmatpush1.bf16.msra.mxu0 %v650
  %1327 = vmatprep.subr.bf16.mxu0 %v683
  %1328 = vmatpush1.bf16.msra.mxu0 %v682
  %1329 = vmatprep.subr.bf16.mxu0 %v715
  %1330 = vmatpush1.bf16.msra.mxu0 %v714
  %1331 = vmatprep.subr.bf16.mxu0 %v747
  %1332 = vmatpush1.bf16.msra.mxu0 %v746
  %1333 = vmatprep.subr.bf16.mxu0 %v779
  %1334 = vmatpush1.bf16.msra.mxu0 %v778
  %1335 = vmatprep.mubr.bf16.mxu0 %v808
  %1336 = vmatmul.mubr.bf16.gmra.mrb[0].mxu0 %v801
  %v1337 = vpop.f32.mrb[0].mxu0
  %v1338 = vadd.f32 0.0, %v1337
  %v1339 = vpop.f32.mrb[0].mxu0
  %v1340 = vadd.f32 0.0, %v1339
  %v1341 = vpop.f32.mrb[0].mxu0
  %v1342 = vpop.f32.mrb[0].mxu0
  %1343 = vdwg.mxu0
  %1344 = vmatprep.subr.bf16.mxu0 %v301
  %1345 = vmatpush1.bf16.msra.mxu0 %v300
  %1346 = vmatprep.subr.bf16.mxu0 %v333
  %1347 = vmatpush1.bf16.msra.mxu0 %v332
  %1348 = vmatprep.subr.bf16.mxu0 %v365
  %1349 = vmatpush1.bf16.msra.mxu0 %v364
  %1350 = vmatprep.subr.bf16.mxu0 %v397
  %1351 = vmatpush1.bf16.msra.mxu0 %v396
  %1352 = vmatprep.subr.bf16.mxu0 %v429
  %1353 = vmatpush1.bf16.msra.mxu0 %v428
  %1354 = vmatprep.subr.bf16.mxu0 %v461
  %1355 = vmatpush1.bf16.msra.mxu0 %v460
  %1356 = vmatprep.subr.bf16.mxu0 %v493
  %1357 = vmatpush1.bf16.msra.mxu0 %v492
  %1358 = vmatprep.subr.bf16.mxu0 %v525
  %1359 = vmatpush1.bf16.msra.mxu0 %v524
  %1360 = vmatprep.subr.bf16.mxu0 %v557
  %1361 = vmatpush1.bf16.msra.mxu0 %v556
  %1362 = vmatprep.subr.bf16.mxu0 %v589
  %1363 = vmatpush1.bf16.msra.mxu0 %v588
  %1364 = vmatprep.subr.bf16.mxu0 %v621
  %1365 = vmatpush1.bf16.msra.mxu0 %v620
  %1366 = vmatprep.subr.bf16.mxu0 %v653
  %1367 = vmatpush1.bf16.msra.mxu0 %v652
  %1368 = vmatprep.subr.bf16.mxu0 %v685
  %1369 = vmatpush1.bf16.msra.mxu0 %v684
  %1370 = vmatprep.subr.bf16.mxu0 %v717
  %1371 = vmatpush1.bf16.msra.mxu0 %v716
  %1372 = vmatprep.subr.bf16.mxu0 %v749
  %1373 = vmatpush1.bf16.msra.mxu0 %v748
  %1374 = vmatprep.subr.bf16.mxu0 %v781
  %1375 = vmatpush1.bf16.msra.mxu0 %v780
  %1376 = vmatprep.mubr.bf16.mxu0 %v808
  %1377 = vmatmul.mubr.bf16.gmra.mrb[0].mxu0 %v801
  %v1378 = vpop.f32.mrb[0].mxu0
  %v1379 = vadd.f32 0.0, %v1378
  %v1380 = vpop.f32.mrb[0].mxu0
  %v1381 = vadd.f32 0.0, %v1380
  %v1382 = vpop.f32.mrb[0].mxu0
  %v1383 = vpop.f32.mrb[0].mxu0
  %1384 = vdwg.mxu0
  %1385 = vmatprep.subr.bf16.mxu0 %v303
  %1386 = vmatpush1.bf16.msra.mxu0 %v302
  %1387 = vmatprep.subr.bf16.mxu0 %v335
  %1388 = vmatpush1.bf16.msra.mxu0 %v334
  %1389 = vmatprep.subr.bf16.mxu0 %v367
  %1390 = vmatpush1.bf16.msra.mxu0 %v366
  %1391 = vmatprep.subr.bf16.mxu0 %v399
  %1392 = vmatpush1.bf16.msra.mxu0 %v398
  %1393 = vmatprep.subr.bf16.mxu0 %v431
  %1394 = vmatpush1.bf16.msra.mxu0 %v430
  %1395 = vmatprep.subr.bf16.mxu0 %v463
  %1396 = vmatpush1.bf16.msra.mxu0 %v462
  %1397 = vmatprep.subr.bf16.mxu0 %v495
  %1398 = vmatpush1.bf16.msra.mxu0 %v494
  %1399 = vmatprep.subr.bf16.mxu0 %v527
  %1400 = vmatpush1.bf16.msra.mxu0 %v526
  %1401 = vmatprep.subr.bf16.mxu0 %v559
  %1402 = vmatpush1.bf16.msra.mxu0 %v558
  %1403 = vmatprep.subr.bf16.mxu0 %v591
  %1404 = vmatpush1.bf16.msra.mxu0 %v590
  %1405 = vmatprep.subr.bf16.mxu0 %v623
  %1406 = vmatpush1.bf16.msra.mxu0 %v622
  %1407 = vmatprep.subr.bf16.mxu0 %v655
  %1408 = vmatpush1.bf16.msra.mxu0 %v654
  %1409 = vmatprep.subr.bf16.mxu0 %v687
  %1410 = vmatpush1.bf16.msra.mxu0 %v686
  %1411 = vmatprep.subr.bf16.mxu0 %v719
  %1412 = vmatpush1.bf16.msra.mxu0 %v718
  %1413 = vmatprep.subr.bf16.mxu0 %v751
  %1414 = vmatpush1.bf16.msra.mxu0 %v750
  %1415 = vmatprep.subr.bf16.mxu0 %v783
  %1416 = vmatpush1.bf16.msra.mxu0 %v782
  %1417 = vmatprep.mubr.bf16.mxu0 %v808
  %1418 = vmatmul.mubr.bf16.gmra.mrb[0].mxu0 %v801
  %v1419 = vpop.f32.mrb[0].mxu0
  %v1420 = vadd.f32 0.0, %v1419
  %v1421 = vpop.f32.mrb[0].mxu0
  %v1422 = vadd.f32 0.0, %v1421
  %v1423 = vpop.f32.mrb[0].mxu0
  %v1424 = vpop.f32.mrb[0].mxu0
  %1425 = vdwg.mxu0
  %1426 = vmatprep.subr.bf16.mxu0 %v305
  %1427 = vmatpush1.bf16.msra.mxu0 %v304
  %1428 = vmatprep.subr.bf16.mxu0 %v337
  %1429 = vmatpush1.bf16.msra.mxu0 %v336
  %1430 = vmatprep.subr.bf16.mxu0 %v369
  %1431 = vmatpush1.bf16.msra.mxu0 %v368
  %1432 = vmatprep.subr.bf16.mxu0 %v401
  %1433 = vmatpush1.bf16.msra.mxu0 %v400
  %1434 = vmatprep.subr.bf16.mxu0 %v433
  %1435 = vmatpush1.bf16.msra.mxu0 %v432
  %1436 = vmatprep.subr.bf16.mxu0 %v465
  %1437 = vmatpush1.bf16.msra.mxu0 %v464
  %1438 = vmatprep.subr.bf16.mxu0 %v497
  %1439 = vmatpush1.bf16.msra.mxu0 %v496
  %1440 = vmatprep.subr.bf16.mxu0 %v529
  %1441 = vmatpush1.bf16.msra.mxu0 %v528
  %1442 = vmatprep.subr.bf16.mxu0 %v561
  %1443 = vmatpush1.bf16.msra.mxu0 %v560
  %1444 = vmatprep.subr.bf16.mxu0 %v593
  %1445 = vmatpush1.bf16.msra.mxu0 %v592
  %1446 = vmatprep.subr.bf16.mxu0 %v625
  %1447 = vmatpush1.bf16.msra.mxu0 %v624
  %1448 = vmatprep.subr.bf16.mxu0 %v657
  %1449 = vmatpush1.bf16.msra.mxu0 %v656
  %1450 = vmatprep.subr.bf16.mxu0 %v689
  %1451 = vmatpush1.bf16.msra.mxu0 %v688
  %1452 = vmatprep.subr.bf16.mxu0 %v721
  %1453 = vmatpush1.bf16.msra.mxu0 %v720
  %1454 = vmatprep.subr.bf16.mxu0 %v753
  %1455 = vmatpush1.bf16.msra.mxu0 %v752
  %1456 = vmatprep.subr.bf16.mxu0 %v785
  %1457 = vmatpush1.bf16.msra.mxu0 %v784
  %1458 = vmatprep.mubr.bf16.mxu0 %v808
  %1459 = vmatmul.mubr.bf16.gmra.mrb[0].mxu0 %v801
  %v1460 = vpop.f32.mrb[0].mxu0
  %v1461 = vadd.f32 0.0, %v1460
  %v1462 = vpop.f32.mrb[0].mxu0
  %v1463 = vadd.f32 0.0, %v1462
  %v1464 = vpop.f32.mrb[0].mxu0
  %v1465 = vpop.f32.mrb[0].mxu0
  %1466 = vdwg.mxu0
  %v1467 = vld [vmem:[%s2] sm:$0xff]
  %v1468 = vld [vmem:[%s2 + $0x8] sm:$0xff]
  %v1469 = vld [vmem:[%s2 + $0x10] sm:$0xff]
  %v1470 = vld [vmem:[%s2 + $0x18] sm:$0xff]
  %v1475 = vlaneseq
  %v1476 = vshrl.u32 %v1475, 7
  %v1477 = vsub.s32 0, %v1476
  %v1478 = vrot.slane %v1467, %v1477
  %v1479 = vlaneseq
  %v1480 = vshrl.u32 %v1479, 7
  %v1481 = vsub.s32 1, %v1480
  %v1482 = vrot.slane %v1467, %v1481
  %v1483 = vlaneseq
  %v1484 = vshrl.u32 %v1483, 7
  %v1485 = vsub.s32 2, %v1484
  %v1486 = vrot.slane %v1467, %v1485
  %v1487 = vlaneseq
  %v1488 = vshrl.u32 %v1487, 7
  %v1489 = vsub.s32 3, %v1488
  %v1490 = vrot.slane %v1467, %v1489
  %v1491 = vlaneseq
  %v1492 = vshrl.u32 %v1491, 7
  %v1493 = vsub.s32 4, %v1492
  %v1494 = vrot.slane %v1467, %v1493
  %v1495 = vlaneseq
  %v1496 = vshrl.u32 %v1495, 7
  %v1497 = vsub.s32 5, %v1496
  %v1498 = vrot.slane %v1467, %v1497
  %v1499 = vlaneseq
  %v1500 = vshrl.u32 %v1499, 7
  %v1501 = vsub.s32 6, %v1500
  %v1502 = vrot.slane %v1467, %v1501
  %v1503 = vlaneseq
  %v1504 = vshrl.u32 %v1503, 7
  %v1505 = vsub.s32 7, %v1504
  %v1506 = vrot.slane %v1467, %v1505
  %v1507 = vlaneseq
  %v1508 = vshrl.u32 %v1507, 7
  %v1509 = vsub.s32 0, %v1508
  %v1510 = vrot.slane %v1468, %v1509
  %v1511 = vlaneseq
  %v1512 = vshrl.u32 %v1511, 7
  %v1513 = vsub.s32 1, %v1512
  %v1514 = vrot.slane %v1468, %v1513
  %v1515 = vlaneseq
  %v1516 = vshrl.u32 %v1515, 7
  %v1517 = vsub.s32 2, %v1516
  %v1518 = vrot.slane %v1468, %v1517
  %v1519 = vlaneseq
  %v1520 = vshrl.u32 %v1519, 7
  %v1521 = vsub.s32 3, %v1520
  %v1522 = vrot.slane %v1468, %v1521
  %v1523 = vlaneseq
  %v1524 = vshrl.u32 %v1523, 7
  %v1525 = vsub.s32 4, %v1524
  %v1526 = vrot.slane %v1468, %v1525
  %v1527 = vlaneseq
  %v1528 = vshrl.u32 %v1527, 7
  %v1529 = vsub.s32 5, %v1528
  %v1530 = vrot.slane %v1468, %v1529
  %v1531 = vlaneseq
  %v1532 = vshrl.u32 %v1531, 7
  %v1533 = vsub.s32 6, %v1532
  %v1534 = vrot.slane %v1468, %v1533
  %v1535 = vlaneseq
  %v1536 = vshrl.u32 %v1535, 7
  %v1537 = vsub.s32 7, %v1536
  %v1538 = vrot.slane %v1468, %v1537
  %v1539 = vlaneseq
  %v1540 = vshrl.u32 %v1539, 7
  %v1541 = vsub.s32 0, %v1540
  %v1542 = vrot.slane %v1469, %v1541
  %v1543 = vlaneseq
  %v1544 = vshrl.u32 %v1543, 7
  %v1545 = vsub.s32 1, %v1544
  %v1546 = vrot.slane %v1469, %v1545
  %v1547 = vlaneseq
  %v1548 = vshrl.u32 %v1547, 7
  %v1549 = vsub.s32 2, %v1548
  %v1550 = vrot.slane %v1469, %v1549
  %v1551 = vlaneseq
  %v1552 = vshrl.u32 %v1551, 7
  %v1553 = vsub.s32 3, %v1552
  %v1554 = vrot.slane %v1469, %v1553
  %v1555 = vlaneseq
  %v1556 = vshrl.u32 %v1555, 7
  %v1557 = vsub.s32 4, %v1556
  %v1558 = vrot.slane %v1469, %v1557
  %v1559 = vlaneseq
  %v1560 = vshrl.u32 %v1559, 7
  %v1561 = vsub.s32 5, %v1560
  %v1562 = vrot.slane %v1469, %v1561
  %v1563 = vlaneseq
  %v1564 = vshrl.u32 %v1563, 7
  %v1565 = vsub.s32 6, %v1564
  %v1566 = vrot.slane %v1469, %v1565
  %v1567 = vlaneseq
  %v1568 = vshrl.u32 %v1567, 7
  %v1569 = vsub.s32 7, %v1568
  %v1570 = vrot.slane %v1469, %v1569
  %v1571 = vlaneseq
  %v1572 = vshrl.u32 %v1571, 7
  %v1573 = vsub.s32 0, %v1572
  %v1574 = vrot.slane %v1470, %v1573
  %v1575 = vlaneseq
  %v1576 = vshrl.u32 %v1575, 7
  %v1577 = vsub.s32 1, %v1576
  %v1578 = vrot.slane %v1470, %v1577
  %v1579 = vlaneseq
  %v1580 = vshrl.u32 %v1579, 7
  %v1581 = vsub.s32 2, %v1580
  %v1582 = vrot.slane %v1470, %v1581
  %v1583 = vlaneseq
  %v1584 = vshrl.u32 %v1583, 7
  %v1585 = vsub.s32 3, %v1584
  %v1586 = vrot.slane %v1470, %v1585
  %v1587 = vlaneseq
  %v1588 = vshrl.u32 %v1587, 7
  %v1589 = vsub.s32 4, %v1588
  %v1590 = vrot.slane %v1470, %v1589
  %v1591 = vlaneseq
  %v1592 = vshrl.u32 %v1591, 7
  %v1593 = vsub.s32 5, %v1592
  %v1594 = vrot.slane %v1470, %v1593
  %v1595 = vlaneseq
  %v1596 = vshrl.u32 %v1595, 7
  %v1597 = vsub.s32 6, %v1596
  %v1598 = vrot.slane %v1470, %v1597
  %v1599 = vlaneseq
  %v1600 = vshrl.u32 %v1599, 7
  %v1601 = vsub.s32 7, %v1600
  %v1602 = vrot.slane %v1470, %v1601
  %v1635 = vmul.f32 %v846, %v1478
  %v1636 = vmul.f32 %v848, %v1482
  %v1637 = vmul.f32 %v887, %v1486
  %v1638 = vmul.f32 %v889, %v1490
  %v1639 = vmul.f32 %v928, %v1494
  %v1640 = vmul.f32 %v930, %v1498
  %v1641 = vmul.f32 %v969, %v1502
  %v1642 = vmul.f32 %v971, %v1506
  %v1643 = vmul.f32 %v1010, %v1510
  %v1644 = vmul.f32 %v1012, %v1514
  %v1645 = vmul.f32 %v1051, %v1518
  %v1646 = vmul.f32 %v1053, %v1522
  %v1647 = vmul.f32 %v1092, %v1526
  %v1648 = vmul.f32 %v1094, %v1530
  %v1649 = vmul.f32 %v1133, %v1534
  %v1650 = vmul.f32 %v1135, %v1538
  %v1651 = vmul.f32 %v1174, %v1542
  %v1652 = vmul.f32 %v1176, %v1546
  %v1653 = vmul.f32 %v1215, %v1550
  %v1654 = vmul.f32 %v1217, %v1554
  %v1655 = vmul.f32 %v1256, %v1558
  %v1656 = vmul.f32 %v1258, %v1562
  %v1657 = vmul.f32 %v1297, %v1566
  %v1658 = vmul.f32 %v1299, %v1570
  %v1659 = vmul.f32 %v1338, %v1574
  %v1660 = vmul.f32 %v1340, %v1578
  %v1661 = vmul.f32 %v1379, %v1582
  %v1662 = vmul.f32 %v1381, %v1586
  %v1663 = vmul.f32 %v1420, %v1590
  %v1664 = vmul.f32 %v1422, %v1594
  %v1665 = vmul.f32 %v1461, %v1598
  %v1666 = vmul.f32 %v1463, %v1602
  %v1667 = vld [vmem:[%s3] sm:$0xff]
  %v1668 = vld [vmem:[%s3 + $0x8] sm:$0xff]
  %v1669 = vld [vmem:[%s3 + $0x10] sm:$0xff]
  %v1670 = vld [vmem:[%s3 + $0x18] sm:$0xff]
  %v1675 = vlaneseq
  %v1676 = vshrl.u32 %v1675, 7
  %v1677 = vsub.s32 0, %v1676
  %v1678 = vrot.slane %v1667, %v1677
  %v1679 = vlaneseq
  %v1680 = vshrl.u32 %v1679, 7
  %v1681 = vsub.s32 1, %v1680
  %v1682 = vrot.slane %v1667, %v1681
  %v1683 = vlaneseq
  %v1684 = vshrl.u32 %v1683, 7
  %v1685 = vsub.s32 2, %v1684
  %v1686 = vrot.slane %v1667, %v1685
  %v1687 = vlaneseq
  %v1688 = vshrl.u32 %v1687, 7
  %v1689 = vsub.s32 3, %v1688
  %v1690 = vrot.slane %v1667, %v1689
  %v1691 = vlaneseq
  %v1692 = vshrl.u32 %v1691, 7
  %v1693 = vsub.s32 4, %v1692
  %v1694 = vrot.slane %v1667, %v1693
  %v1695 = vlaneseq
  %v1696 = vshrl.u32 %v1695, 7
  %v1697 = vsub.s32 5, %v1696
  %v1698 = vrot.slane %v1667, %v1697
  %v1699 = vlaneseq
  %v1700 = vshrl.u32 %v1699, 7
  %v1701 = vsub.s32 6, %v1700
  %v1702 = vrot.slane %v1667, %v1701
  %v1703 = vlaneseq
  %v1704 = vshrl.u32 %v1703, 7
  %v1705 = vsub.s32 7, %v1704
  %v1706 = vrot.slane %v1667, %v1705
  %v1707 = vlaneseq
  %v1708 = vshrl.u32 %v1707, 7
  %v1709 = vsub.s32 0, %v1708
  %v1710 = vrot.slane %v1668, %v1709
  %v1711 = vlaneseq
  %v1712 = vshrl.u32 %v1711, 7
  %v1713 = vsub.s32 1, %v1712
  %v1714 = vrot.slane %v1668, %v1713
  %v1715 = vlaneseq
  %v1716 = vshrl.u32 %v1715, 7
  %v1717 = vsub.s32 2, %v1716
  %v1718 = vrot.slane %v1668, %v1717
  %v1719 = vlaneseq
  %v1720 = vshrl.u32 %v1719, 7
  %v1721 = vsub.s32 3, %v1720
  %v1722 = vrot.slane %v1668, %v1721
  %v1723 = vlaneseq
  %v1724 = vshrl.u32 %v1723, 7
  %v1725 = vsub.s32 4, %v1724
  %v1726 = vrot.slane %v1668, %v1725
  %v1727 = vlaneseq
  %v1728 = vshrl.u32 %v1727, 7
  %v1729 = vsub.s32 5, %v1728
  %v1730 = vrot.slane %v1668, %v1729
  %v1731 = vlaneseq
  %v1732 = vshrl.u32 %v1731, 7
  %v1733 = vsub.s32 6, %v1732
  %v1734 = vrot.slane %v1668, %v1733
  %v1735 = vlaneseq
  %v1736 = vshrl.u32 %v1735, 7
  %v1737 = vsub.s32 7, %v1736
  %v1738 = vrot.slane %v1668, %v1737
  %v1739 = vlaneseq
  %v1740 = vshrl.u32 %v1739, 7
  %v1741 = vsub.s32 0, %v1740
  %v1742 = vrot.slane %v1669, %v1741
  %v1743 = vlaneseq
  %v1744 = vshrl.u32 %v1743, 7
  %v1745 = vsub.s32 1, %v1744
  %v1746 = vrot.slane %v1669, %v1745
  %v1747 = vlaneseq
  %v1748 = vshrl.u32 %v1747, 7
  %v1749 = vsub.s32 2, %v1748
  %v1750 = vrot.slane %v1669, %v1749
  %v1751 = vlaneseq
  %v1752 = vshrl.u32 %v1751, 7
  %v1753 = vsub.s32 3, %v1752
  %v1754 = vrot.slane %v1669, %v1753
  %v1755 = vlaneseq
  %v1756 = vshrl.u32 %v1755, 7
  %v1757 = vsub.s32 4, %v1756
  %v1758 = vrot.slane %v1669, %v1757
  %v1759 = vlaneseq
  %v1760 = vshrl.u32 %v1759, 7
  %v1761 = vsub.s32 5, %v1760
  %v1762 = vrot.slane %v1669, %v1761
  %v1763 = vlaneseq
  %v1764 = vshrl.u32 %v1763, 7
  %v1765 = vsub.s32 6, %v1764
  %v1766 = vrot.slane %v1669, %v1765
  %v1767 = vlaneseq
  %v1768 = vshrl.u32 %v1767, 7
  %v1769 = vsub.s32 7, %v1768
  %v1770 = vrot.slane %v1669, %v1769
  %v1771 = vlaneseq
  %v1772 = vshrl.u32 %v1771, 7
  %v1773 = vsub.s32 0, %v1772
  %v1774 = vrot.slane %v1670, %v1773
  %v1775 = vlaneseq
  %v1776 = vshrl.u32 %v1775, 7
  %v1777 = vsub.s32 1, %v1776
  %v1778 = vrot.slane %v1670, %v1777
  %v1779 = vlaneseq
  %v1780 = vshrl.u32 %v1779, 7
  %v1781 = vsub.s32 2, %v1780
  %v1782 = vrot.slane %v1670, %v1781
  %v1783 = vlaneseq
  %v1784 = vshrl.u32 %v1783, 7
  %v1785 = vsub.s32 3, %v1784
  %v1786 = vrot.slane %v1670, %v1785
  %v1787 = vlaneseq
  %v1788 = vshrl.u32 %v1787, 7
  %v1789 = vsub.s32 4, %v1788
  %v1790 = vrot.slane %v1670, %v1789
  %v1791 = vlaneseq
  %v1792 = vshrl.u32 %v1791, 7
  %v1793 = vsub.s32 5, %v1792
  %v1794 = vrot.slane %v1670, %v1793
  %v1795 = vlaneseq
  %v1796 = vshrl.u32 %v1795, 7
  %v1797 = vsub.s32 6, %v1796
  %v1798 = vrot.slane %v1670, %v1797
  %v1799 = vlaneseq
  %v1800 = vshrl.u32 %v1799, 7
  %v1801 = vsub.s32 7, %v1800
  %v1802 = vrot.slane %v1670, %v1801
  %v1835 = vadd.f32 %v1635, %v1678
  %v1836 = vadd.f32 %v1636, %v1682
  %v1837 = vadd.f32 %v1637, %v1686
  %v1838 = vadd.f32 %v1638, %v1690
  %v1839 = vadd.f32 %v1639, %v1694
  %v1840 = vadd.f32 %v1640, %v1698
  %v1841 = vadd.f32 %v1641, %v1702
  %v1842 = vadd.f32 %v1642, %v1706
  %v1843 = vadd.f32 %v1643, %v1710
  %v1844 = vadd.f32 %v1644, %v1714
  %v1845 = vadd.f32 %v1645, %v1718
  %v1846 = vadd.f32 %v1646, %v1722
  %v1847 = vadd.f32 %v1647, %v1726
  %v1848 = vadd.f32 %v1648, %v1730
  %v1849 = vadd.f32 %v1649, %v1734
  %v1850 = vadd.f32 %v1650, %v1738
  %v1851 = vadd.f32 %v1651, %v1742
  %v1852 = vadd.f32 %v1652, %v1746
  %v1853 = vadd.f32 %v1653, %v1750
  %v1854 = vadd.f32 %v1654, %v1754
  %v1855 = vadd.f32 %v1655, %v1758
  %v1856 = vadd.f32 %v1656, %v1762
  %v1857 = vadd.f32 %v1657, %v1766
  %v1858 = vadd.f32 %v1658, %v1770
  %v1859 = vadd.f32 %v1659, %v1774
  %v1860 = vadd.f32 %v1660, %v1778
  %v1861 = vadd.f32 %v1661, %v1782
  %v1862 = vadd.f32 %v1662, %v1786
  %v1863 = vadd.f32 %v1663, %v1790
  %v1864 = vadd.f32 %v1664, %v1794
  %v1865 = vadd.f32 %v1665, %v1798
  %v1866 = vadd.f32 %v1666, %v1802
  %v1867 = vmax.f32 %v1835, 0.0
  %v1868 = vmax.f32 %v1836, 0.0
  %v1869 = vmax.f32 %v1837, 0.0
  %v1870 = vmax.f32 %v1838, 0.0
  %v1871 = vmax.f32 %v1839, 0.0
  %v1872 = vmax.f32 %v1840, 0.0
  %v1873 = vmax.f32 %v1841, 0.0
  %v1874 = vmax.f32 %v1842, 0.0
  %v1875 = vmax.f32 %v1843, 0.0
  %v1876 = vmax.f32 %v1844, 0.0
  %v1877 = vmax.f32 %v1845, 0.0
  %v1878 = vmax.f32 %v1846, 0.0
  %v1879 = vmax.f32 %v1847, 0.0
  %v1880 = vmax.f32 %v1848, 0.0
  %v1881 = vmax.f32 %v1849, 0.0
  %v1882 = vmax.f32 %v1850, 0.0
  %v1883 = vmax.f32 %v1851, 0.0
  %v1884 = vmax.f32 %v1852, 0.0
  %v1885 = vmax.f32 %v1853, 0.0
  %v1886 = vmax.f32 %v1854, 0.0
  %v1887 = vmax.f32 %v1855, 0.0
  %v1888 = vmax.f32 %v1856, 0.0
  %v1889 = vmax.f32 %v1857, 0.0
  %v1890 = vmax.f32 %v1858, 0.0
  %v1891 = vmax.f32 %v1859, 0.0
  %v1892 = vmax.f32 %v1860, 0.0
  %v1893 = vmax.f32 %v1861, 0.0
  %v1894 = vmax.f32 %v1862, 0.0
  %v1895 = vmax.f32 %v1863, 0.0
  %v1896 = vmax.f32 %v1864, 0.0
  %v1897 = vmax.f32 %v1865, 0.0
  %v1898 = vmax.f32 %v1866, 0.0
  %v1899 = vpack.c.bf16 %v1867, %v1867
  %v1900 = vpack.c.bf16 %v1868, %v1868
  %v1901 = vpack.c.bf16 %v1869, %v1869
  %v1902 = vpack.c.bf16 %v1870, %v1870
  %v1903 = vpack.c.bf16 %v1871, %v1871
  %v1904 = vpack.c.bf16 %v1872, %v1872
  %v1905 = vpack.c.bf16 %v1873, %v1873
  %v1906 = vpack.c.bf16 %v1874, %v1874
  %v1907 = vpack.c.bf16 %v1875, %v1875
  %v1908 = vpack.c.bf16 %v1876, %v1876
  %v1909 = vpack.c.bf16 %v1877, %v1877
  %v1910 = vpack.c.bf16 %v1878, %v1878
  %v1911 = vpack.c.bf16 %v1879, %v1879
  %v1912 = vpack.c.bf16 %v1880, %v1880
  %v1913 = vpack.c.bf16 %v1881, %v1881
  %v1914 = vpack.c.bf16 %v1882, %v1882
  %v1915 = vpack.c.bf16 %v1883, %v1883
  %v1916 = vpack.c.bf16 %v1884, %v1884
  %v1917 = vpack.c.bf16 %v1885, %v1885
  %v1918 = vpack.c.bf16 %v1886, %v1886
  %v1919 = vpack.c.bf16 %v1887, %v1887
  %v1920 = vpack.c.bf16 %v1888, %v1888
  %v1921 = vpack.c.bf16 %v1889, %v1889
  %v1922 = vpack.c.bf16 %v1890, %v1890
  %v1923 = vpack.c.bf16 %v1891, %v1891
  %v1924 = vpack.c.bf16 %v1892, %v1892
  %v1925 = vpack.c.bf16 %v1893, %v1893
  %v1926 = vpack.c.bf16 %v1894, %v1894
  %v1927 = vpack.c.bf16 %v1895, %v1895
  %v1928 = vpack.c.bf16 %v1896, %v1896
  %v1929 = vpack.c.bf16 %v1897, %v1897
  %v1930 = vpack.c.bf16 %v1898, %v1898
  %v1963 = vcombine.low %v1899, %v1900
  %v1964 = vcombine.low %v1901, %v1902
  %v1965 = vcombine.low %v1903, %v1904
  %v1966 = vcombine.low %v1905, %v1906
  %v1968 = vunpack.c.l.s4 1966171168
  %v1969 = vunpack.c.0.s8 %v1968
  %v1970 = vlaneseq
  %v1971 = vshrl.u32 %v1970, 7
  %v1972 = vsub.s32 %v1969, %v1971
  %v1973 = vrot.slane %v1963, %v1972
  %v1975 = vunpack.c.l.s4 1966171168
  %v1976 = vunpack.c.0.s8 %v1975
  %v1977 = vlaneseq
  %v1978 = vshrl.u32 %v1977, 7
  %v1979 = vsub.s32 %v1976, %v1978
  %v1980 = vrot.slane %v1964, %v1979
  %v1982 = vunpack.c.l.s4 1966171168
  %v1983 = vunpack.c.0.s8 %v1982
  %v1984 = vlaneseq
  %v1985 = vshrl.u32 %v1984, 7
  %v1986 = vsub.s32 %v1983, %v1985
  %v1987 = vrot.slane %v1965, %v1986
  %v1989 = vunpack.c.l.s4 1966171168
  %v1990 = vunpack.c.0.s8 %v1989
  %v1991 = vlaneseq
  %v1992 = vshrl.u32 %v1991, 7
  %v1993 = vsub.s32 %v1990, %v1992
  %v1994 = vrot.slane %v1966, %v1993
  %v1995 = vcombine.low %v1973, %v1980
  %v1996 = vcombine.low %v1987, %v1994
  %v1998 = vunpack.c.l.s4 1966171168
  %v1999 = vunpack.c.0.s8 %v1998
  %v2000 = vlaneseq
  %v2001 = vshrl.u32 %v2000, 7
  %v2002 = vsub.s32 %v1999, %v2001
  %v2003 = vrot.slane %v1995, %v2002
  %v2005 = vunpack.c.l.s4 1966171168
  %v2006 = vunpack.c.0.s8 %v2005
  %v2007 = vlaneseq
  %v2008 = vshrl.u32 %v2007, 7
  %v2009 = vsub.s32 %v2006, %v2008
  %v2010 = vrot.slane %v1996, %v2009
  %v2011 = vcombine.low %v2003, %v2010
  %v2012 = vcombine.low %v1907, %v1908
  %v2013 = vcombine.low %v1909, %v1910
  %v2014 = vcombine.low %v1911, %v1912
  %v2015 = vcombine.low %v1913, %v1914
  %v2017 = vunpack.c.l.s4 1966171168
  %v2018 = vunpack.c.0.s8 %v2017
  %v2019 = vlaneseq
  %v2020 = vshrl.u32 %v2019, 7
  %v2021 = vsub.s32 %v2018, %v2020
  %v2022 = vrot.slane %v2012, %v2021
  %v2024 = vunpack.c.l.s4 1966171168
  %v2025 = vunpack.c.0.s8 %v2024
  %v2026 = vlaneseq
  %v2027 = vshrl.u32 %v2026, 7
  %v2028 = vsub.s32 %v2025, %v2027
  %v2029 = vrot.slane %v2013, %v2028
  %v2031 = vunpack.c.l.s4 1966171168
  %v2032 = vunpack.c.0.s8 %v2031
  %v2033 = vlaneseq
  %v2034 = vshrl.u32 %v2033, 7
  %v2035 = vsub.s32 %v2032, %v2034
  %v2036 = vrot.slane %v2014, %v2035
  %v2038 = vunpack.c.l.s4 1966171168
  %v2039 = vunpack.c.0.s8 %v2038
  %v2040 = vlaneseq
  %v2041 = vshrl.u32 %v2040, 7
  %v2042 = vsub.s32 %v2039, %v2041
  %v2043 = vrot.slane %v2015, %v2042
  %v2044 = vcombine.low %v2022, %v2029
  %v2045 = vcombine.low %v2036, %v2043
  %v2047 = vunpack.c.l.s4 1966171168
  %v2048 = vunpack.c.0.s8 %v2047
  %v2049 = vlaneseq
  %v2050 = vshrl.u32 %v2049, 7
  %v2051 = vsub.s32 %v2048, %v2050
  %v2052 = vrot.slane %v2044, %v2051
  %v2054 = vunpack.c.l.s4 1966171168
  %v2055 = vunpack.c.0.s8 %v2054
  %v2056 = vlaneseq
  %v2057 = vshrl.u32 %v2056, 7
  %v2058 = vsub.s32 %v2055, %v2057
  %v2059 = vrot.slane %v2045, %v2058
  %v2060 = vcombine.low %v2052, %v2059
  %v2061 = vcombine.low %v1915, %v1916
  %v2062 = vcombine.low %v1917, %v1918
  %v2063 = vcombine.low %v1919, %v1920
  %v2064 = vcombine.low %v1921, %v1922
  %v2066 = vunpack.c.l.s4 1966171168
  %v2067 = vunpack.c.0.s8 %v2066
  %v2068 = vlaneseq
  %v2069 = vshrl.u32 %v2068, 7
  %v2070 = vsub.s32 %v2067, %v2069
  %v2071 = vrot.slane %v2061, %v2070
  %v2073 = vunpack.c.l.s4 1966171168
  %v2074 = vunpack.c.0.s8 %v2073
  %v2075 = vlaneseq
  %v2076 = vshrl.u32 %v2075, 7
  %v2077 = vsub.s32 %v2074, %v2076
  %v2078 = vrot.slane %v2062, %v2077
  %v2080 = vunpack.c.l.s4 1966171168
  %v2081 = vunpack.c.0.s8 %v2080
  %v2082 = vlaneseq
  %v2083 = vshrl.u32 %v2082, 7
  %v2084 = vsub.s32 %v2081, %v2083
  %v2085 = vrot.slane %v2063, %v2084
  %v2087 = vunpack.c.l.s4 1966171168
  %v2088 = vunpack.c.0.s8 %v2087
  %v2089 = vlaneseq
  %v2090 = vshrl.u32 %v2089, 7
  %v2091 = vsub.s32 %v2088, %v2090
  %v2092 = vrot.slane %v2064, %v2091
  %v2093 = vcombine.low %v2071, %v2078
  %v2094 = vcombine.low %v2085, %v2092
  %v2096 = vunpack.c.l.s4 1966171168
  %v2097 = vunpack.c.0.s8 %v2096
  %v2098 = vlaneseq
  %v2099 = vshrl.u32 %v2098, 7
  %v2100 = vsub.s32 %v2097, %v2099
  %v2101 = vrot.slane %v2093, %v2100
  %v2103 = vunpack.c.l.s4 1966171168
  %v2104 = vunpack.c.0.s8 %v2103
  %v2105 = vlaneseq
  %v2106 = vshrl.u32 %v2105, 7
  %v2107 = vsub.s32 %v2104, %v2106
  %v2108 = vrot.slane %v2094, %v2107
  %v2109 = vcombine.low %v2101, %v2108
  %v2110 = vcombine.low %v1923, %v1924
  %v2111 = vcombine.low %v1925, %v1926
  %v2112 = vcombine.low %v1927, %v1928
  %v2113 = vcombine.low %v1929, %v1930
  %v2115 = vunpack.c.l.s4 1966171168
  %v2116 = vunpack.c.0.s8 %v2115
  %v2117 = vlaneseq
  %v2118 = vshrl.u32 %v2117, 7
  %v2119 = vsub.s32 %v2116, %v2118
  %v2120 = vrot.slane %v2110, %v2119
  %v2122 = vunpack.c.l.s4 1966171168
  %v2123 = vunpack.c.0.s8 %v2122
  %v2124 = vlaneseq
  %v2125 = vshrl.u32 %v2124, 7
  %v2126 = vsub.s32 %v2123, %v2125
  %v2127 = vrot.slane %v2111, %v2126
  %v2129 = vunpack.c.l.s4 1966171168
  %v2130 = vunpack.c.0.s8 %v2129
  %v2131 = vlaneseq
  %v2132 = vshrl.u32 %v2131, 7
  %v2133 = vsub.s32 %v2130, %v2132
  %v2134 = vrot.slane %v2112, %v2133
  %v2136 = vunpack.c.l.s4 1966171168
  %v2137 = vunpack.c.0.s8 %v2136
  %v2138 = vlaneseq
  %v2139 = vshrl.u32 %v2138, 7
  %v2140 = vsub.s32 %v2137, %v2139
  %v2141 = vrot.slane %v2113, %v2140
  %v2142 = vcombine.low %v2120, %v2127
  %v2143 = vcombine.low %v2134, %v2141
  %v2145 = vunpack.c.l.s4 1966171168
  %v2146 = vunpack.c.0.s8 %v2145
  %v2147 = vlaneseq
  %v2148 = vshrl.u32 %v2147, 7
  %v2149 = vsub.s32 %v2146, %v2148
  %v2150 = vrot.slane %v2142, %v2149
  %v2152 = vunpack.c.l.s4 1966171168
  %v2153 = vunpack.c.0.s8 %v2152
  %v2154 = vlaneseq
  %v2155 = vshrl.u32 %v2154, 7
  %v2156 = vsub.s32 %v2153, %v2155
  %v2157 = vrot.slane %v2143, %v2156
  %v2158 = vcombine.low %v2150, %v2157
  %2163 = vst [vmem:[%s4] sm:$0xff] %v2011
  %2164 = vst [vmem:[%s4 + $0x8] sm:$0xff] %v2060
  %2165 = vst [vmem:[%s4 + $0x10] sm:$0xff] %v2109
  %2166 = vst [vmem:[%s4 + $0x18] sm:$0xff] %v2158
  // Predicated region
  $region18: #{vae_forward.8} parent=0 // pred_check
    _
  $region19: #{vae_forward.8} parent=0 // pred_check_branch
    %2168 = sbr.rel (0) target = $region21
  $region20: #{vae_forward.8} parent=0 // pred_region
    _
  $region21: #{vae_forward.8} parent=0 // pred_fallthru
    _
  // Predicated region
  $region22: #{vae_forward.8} parent=0 // pred_check
    _
  $region23: #{vae_forward.8} parent=0 // pred_check_branch
    %2170 = sbr.rel (0) target = $region25
  $region24: #{vae_forward.8} parent=0 // pred_region
    _
  $region25: #{vae_forward.8} parent=0 // pred_fallthru
    _

// kernel: vae_forward.9
$region0: #{vae_forward.9}
  #allocation0 [shape = 'u32[]', space=smem, size = 0x4, offset = 0x4, fixed_abs, tag = 'smem constant byte address 0x4 - core index']
  #allocation1 [shape = 'u32[144,128]{1,0:T(1,128)}', space=vmem, size = 0x12000, scoped, tag = 'internal scratch']
  %s0 = inlined_call_operand.vmem [shape: bf16[2,128,32], index: 0, kind: input, shape index: {}]
  %s1 = inlined_call_operand.vmem [shape: f32[64,128], index: 1, kind: input, shape index: {}]
  %s2 = inlined_call_operand.vmem [shape: f32[64,1], index: 2, kind: input, shape index: {}]
  %s3 = inlined_call_operand.vmem [shape: f32[3,64], index: 3, kind: input, shape index: {}]
  %s4 = inlined_call_operand.vmem [shape: f32[3,1], index: 4, kind: input, shape index: {}]
  %s5 = inlined_call_operand.vmem [shape: f32[2,3,32], index: 5, kind: output, shape index: {}]
  %s6 = sld [smem:[#allocation0]]
  $region53: #{vae_forward.9} parent=0
    _
  %s8 = ssub.s32 1, %s6
  %s9 = scalar_select 0, %s8, %s6
  loop: start=0, step=1, limit=4
  $region2: #{vae_forward.9} parent=0 // loop_pre_header
    _
  $region3: #{vae_forward.9} parent=0 // loop_header
    %s11 = sphi 0, %s15
    %p12 = scmp.ge.s32.totalorder %s11, 4
    %s21 = sphi 0, %s23
    %s24 = sphi 0, %s21
    %s25 = sphi 0, %s24
    %s41 = sphi 0, %s25
    %s45 = sphi 0, %s45
    %s47 = sphi 0, %s45
    %s48 = sphi 0, %s47
    %s62 = sphi 0, %s48
    %s66 = sphi 0, %s66
    %s68 = sphi 0, %s66
    %s69 = sphi 0, %s68
    %s83 = sphi 0, %s69
    %s87 = sphi 0, %s87
    %s89 = sphi 0, %s87
    %s90 = sphi 0, %s89
    %s104 = sphi 0, %s90
    %s108 = sphi 0, %s108
    %s110 = sphi 0, %s108
    %s111 = sphi 0, %s110
    %s125 = sphi 0, %s111
    %s131 = sphi 0, %s133
    %s134 = sphi 0, %s131
    %s135 = sphi 0, %s134
    %s151 = sphi 0, %s135
  $region4: #{vae_forward.9} parent=0 // loop_header_branch
    %14 = sbr.rel (%p12) target = $region8
  $region5: #{vae_forward.9} parent=0 // loop_body
    %s16 = ssub.s32 %s11, 1
    %s17 = ssub.s32 %s11, 2
    %s18 = sadd.s32 %s11, 1
    %s19 = ssub.s32 %s11, %s18
    %p20 = scmp.eq.s32.totalorder %s19, 0
    %s22 = sadd.s32 %s21, 1
    %s23 = scalar_select %p20, %s21, %s22
    %p26 = pneg %p20
    %p27 = scmp.eq.s32.totalorder %s11, 1
    %p28 = por %p26, %p27
    %p29 = scmp.ne.s32.totalorder %s21, %s24
    %p30 = scmp.eq.s32.totalorder %s11, 0
    %p31 = por %p29, %p30
    %p32 = scmp.ne.s32.totalorder %s21, %s24
    %p33 = scmp.eq.s32.totalorder %s16, 1
    %p34 = por %p32, %p33
    %p35 = scmp.ne.s32.totalorder %s24, %s25
    %p36 = scmp.eq.s32.totalorder %s16, 0
    %p37 = por %p35, %p36
    %p38 = scmp.ne.s32.totalorder %s24, %s25
    %p39 = scmp.eq.s32.totalorder %s17, 1
    %p40 = por %p38, %p39
    %p42 = scmp.ne.s32.totalorder %s25, %s41
    %p43 = scmp.eq.s32.totalorder %s17, 0
    %p44 = por %p42, %p43
    %s46 = sadd.s32 %s45, 1
    %p49 = scmp.eq.s32.totalorder %s11, 1
    %p50 = scmp.ne.s32.totalorder %s45, %s47
    %p51 = scmp.eq.s32.totalorder %s11, 0
    %p52 = por %p50, %p51
    %p53 = scmp.ne.s32.totalorder %s45, %s47
    %p54 = scmp.eq.s32.totalorder %s16, 1
    %p55 = por %p53, %p54
    %p56 = scmp.ne.s32.totalorder %s47, %s48
    %p57 = scmp.eq.s32.totalorder %s16, 0
    %p58 = por %p56, %p57
    %p59 = scmp.ne.s32.totalorder %s47, %s48
    %p60 = scmp.eq.s32.totalorder %s17, 1
    %p61 = por %p59, %p60
    %p63 = scmp.ne.s32.totalorder %s48, %s62
    %p64 = scmp.eq.s32.totalorder %s17, 0
    %p65 = por %p63, %p64
    %s67 = sadd.s32 %s66, 1
    %p70 = scmp.eq.s32.totalorder %s11, 1
    %p71 = scmp.ne.s32.totalorder %s66, %s68
    %p72 = scmp.eq.s32.totalorder %s11, 0
    %p73 = por %p71, %p72
    %p74 = scmp.ne.s32.totalorder %s66, %s68
    %p75 = scmp.eq.s32.totalorder %s16, 1
    %p76 = por %p74, %p75
    %p77 = scmp.ne.s32.totalorder %s68, %s69
    %p78 = scmp.eq.s32.totalorder %s16, 0
    %p79 = por %p77, %p78
    %p80 = scmp.ne.s32.totalorder %s68, %s69
    %p81 = scmp.eq.s32.totalorder %s17, 1
    %p82 = por %p80, %p81
    %p84 = scmp.ne.s32.totalorder %s69, %s83
    %p85 = scmp.eq.s32.totalorder %s17, 0
    %p86 = por %p84, %p85
    %s88 = sadd.s32 %s87, 1
    %p91 = scmp.eq.s32.totalorder %s11, 1
    %p92 = scmp.ne.s32.totalorder %s87, %s89
    %p93 = scmp.eq.s32.totalorder %s11, 0
    %p94 = por %p92, %p93
    %p95 = scmp.ne.s32.totalorder %s87, %s89
    %p96 = scmp.eq.s32.totalorder %s16, 1
    %p97 = por %p95, %p96
    %p98 = scmp.ne.s32.totalorder %s89, %s90
    %p99 = scmp.eq.s32.totalorder %s16, 0
    %p100 = por %p98, %p99
    %p101 = scmp.ne.s32.totalorder %s89, %s90
    %p102 = scmp.eq.s32.totalorder %s17, 1
    %p103 = por %p101, %p102
    %p105 = scmp.ne.s32.totalorder %s90, %s104
    %p106 = scmp.eq.s32.totalorder %s17, 0
    %p107 = por %p105, %p106
    %s109 = sadd.s32 %s108, 1
    %p112 = scmp.eq.s32.totalorder %s11, 1
    %p113 = scmp.ne.s32.totalorder %s108, %s110
    %p114 = scmp.eq.s32.totalorder %s11, 0
    %p115 = por %p113, %p114
    %p116 = scmp.ne.s32.totalorder %s108, %s110
    %p117 = scmp.eq.s32.totalorder %s16, 1
    %p118 = por %p116, %p117
    %p119 = scmp.ne.s32.totalorder %s110, %s111
    %p120 = scmp.eq.s32.totalorder %s16, 0
    %p121 = por %p119, %p120
    %p122 = scmp.ne.s32.totalorder %s110, %s111
    %p123 = scmp.eq.s32.totalorder %s17, 1
    %p124 = por %p122, %p123
    %p126 = scmp.ne.s32.totalorder %s111, %s125
    %p127 = scmp.eq.s32.totalorder %s17, 0
    %p128 = por %p126, %p127
    %s129 = ssub.s32 %s11, %s18
    %p130 = scmp.eq.s32.totalorder %s129, 0
    %s132 = sadd.s32 %s131, 1
    %s133 = scalar_select %p130, %s131, %s132
    %p136 = pneg %p130
    %p137 = scmp.eq.s32.totalorder %s11, 1
    %p138 = por %p136, %p137
    %p139 = scmp.ne.s32.totalorder %s131, %s134
    %p140 = scmp.eq.s32.totalorder %s11, 0
    %p141 = por %p139, %p140
    %p142 = scmp.ne.s32.totalorder %s131, %s134
    %p143 = scmp.eq.s32.totalorder %s16, 1
    %p144 = por %p142, %p143
    %p145 = scmp.ne.s32.totalorder %s134, %s135
    %p146 = scmp.eq.s32.totalorder %s16, 0
    %p147 = por %p145, %p146
    %p148 = scmp.ne.s32.totalorder %s134, %s135
    %p149 = scmp.eq.s32.totalorder %s17, 1
    %p150 = por %p148, %p149
    %p152 = scmp.ne.s32.totalorder %s135, %s151
    %p153 = scmp.eq.s32.totalorder %s17, 0
    %p154 = por %p152, %p153
    %p155 = scmp.le.s32.totalorder 1, %s11
    %p156 = scmp.lt.s32.totalorder %s11, 3
    %p157 = pnand %p155, %p156
    %p158 = pneg %p157
    // Predicated region
    $region9: #{vae_forward.9} parent=5 // pred_check
      _
    $region10: #{vae_forward.9} parent=5 // pred_check_branch
      %160 = sbr.rel (%p157) target = $region12
    $region11: #{vae_forward.9} parent=5 // pred_region
      %s161 = ssub.s32 %s11, 1
      // Predicated region
      $region13: #{vae_forward.9} parent=11 // pred_check
        %p162 = pneg %p58
      $region14: #{vae_forward.9} parent=11 // pred_check_branch
        %164 = sbr.rel (%p162) target = $region16
      $region15: #{vae_forward.9} parent=11 // pred_region
        _
      $region16: #{vae_forward.9} parent=11 // pred_fallthru
        _
      // Predicated region
      $region17: #{vae_forward.9} parent=11 // pred_check
        %p165 = pneg %p79
      $region18: #{vae_forward.9} parent=11 // pred_check_branch
        %167 = sbr.rel (%p165) target = $region20
      $region19: #{vae_forward.9} parent=11 // pred_region
        _
      $region20: #{vae_forward.9} parent=11 // pred_fallthru
        _
      // Predicated region
      $region21: #{vae_forward.9} parent=11 // pred_check
        %p168 = pneg %p100
      $region22: #{vae_forward.9} parent=11 // pred_check_branch
        %170 = sbr.rel (%p168) target = $region24
      $region23: #{vae_forward.9} parent=11 // pred_region
        _
      $region24: #{vae_forward.9} parent=11 // pred_fallthru
        _
      // Predicated region
      $region25: #{vae_forward.9} parent=11 // pred_check
        %p171 = pneg %p121
      $region26: #{vae_forward.9} parent=11 // pred_check_branch
        %173 = sbr.rel (%p171) target = $region28
      $region27: #{vae_forward.9} parent=11 // pred_region
        _
      $region28: #{vae_forward.9} parent=11 // pred_fallthru
        _
    $region12: #{vae_forward.9} parent=5 // pred_fallthru
      _
    %p174 = scmp.lt.s32.totalorder %s11, 2
    // Predicated region
    $region29: #{vae_forward.9} parent=5 // pred_check
      %p175 = pneg %p174
    $region30: #{vae_forward.9} parent=5 // pred_check_branch
      %177 = sbr.rel (%p175) target = $region32
    $region31: #{vae_forward.9} parent=5 // pred_region
      // Predicated region
      $region33: #{vae_forward.9} parent=31 // pred_check
        %p178 = pneg %p31
      $region34: #{vae_forward.9} parent=31 // pred_check_branch
        %180 = sbr.rel (%p178) target = $region36
      $region35: #{vae_forward.9} parent=31 // pred_region
        %p181 = scmp.lt.s32.totalorder %s11, 1
        %s182 = scalar_select %p181, %s11, 1
        %s183 = smul.addr %s182, 16
        %s184 = smul.addr %s183, 4
        %s185 = scalar_lea.vmem %s0, %s184
      $region36: #{vae_forward.9} parent=31 // pred_fallthru
        _
    $region32: #{vae_forward.9} parent=5 // pred_fallthru
      _
    %p186 = scmp.le.s32.totalorder 1, %s11
    %p187 = scmp.lt.s32.totalorder %s11, 3
    %p188 = pnand %p186, %p187
    %p189 = pneg %p188
    // Predicated region
    $region37: #{vae_forward.9} parent=5 // pred_check
      _
    $region38: #{vae_forward.9} parent=5 // pred_check_branch
      %191 = sbr.rel (%p188) target = $region40
    $region39: #{vae_forward.9} parent=5 // pred_region
      %s192 = ssub.s32 %s11, 1
      %p193 = scmp.lt.s32.totalorder %s16, 1
      %s194 = scalar_select %p193, %s16, 1
      %s195 = smul.addr %s194, 16
      %s196 = smul.addr %s195, 4
      %s197 = scalar_lea.vmem %s0, %s196
      %p198 = pneg %p37
      %p199 = pneg %p34
      %p200 = pneg %p58
      %p201 = pneg %p55
      %p202 = pneg %p79
      %p203 = pneg %p76
      %p204 = pneg %p100
      %p205 = pneg %p97
      %p206 = pneg %p121
      %p207 = pneg %p118
      %p208 = pneg %p147
      %p209 = pneg %p144
      %p210 = scmp.lt.s32.totalorder %s16, 1
      %s211 = scalar_select %p210, %s16, 1
      %s212 = smul.addr %s211, 4
      %s213 = scalar_lea.vmem %s5, %s212
      %p214 = scmp.lt.s32.totalorder %s16, 1
      %s215 = scalar_select %p214, %s16, 1
      %s216 = smul.addr %s215, 16
      %s217 = smul.addr %s216, 4
      %s218 = scalar_lea.vmem %s0, %s217
      %p219 = scmp.lt.s32.totalorder %s16, 1
      %s220 = scalar_select %p219, %s16, 1
      %s221 = smul.addr %s220, 4
      %s222 = scalar_lea.vmem %s5, %s221
      %v224 = vld [vmem:[%s1] sm:$0xff]
      %v225 = vld [vmem:[%s1 + $0x8] sm:$0xff]
      %v226 = vld [vmem:[%s1 + $0x10] sm:$0xff]
      %v227 = vld [vmem:[%s1 + $0x18] sm:$0xff]
      %v228 = vld [vmem:[%s1 + $0x20] sm:$0xff]
      %v229 = vld [vmem:[%s1 + $0x28] sm:$0xff]
      %v230 = vld [vmem:[%s1 + $0x30] sm:$0xff]
      %v231 = vld [vmem:[%s1 + $0x38] sm:$0xff]
      %v232 = vld [vmem:[%s218] sm:$0xf]
      %v233 = vld [vmem:[%s218 + $0x4] sm:$0xf]
      %v234 = vld [vmem:[%s218 + $0x8] sm:$0xf]
      %v235 = vld [vmem:[%s218 + $0xc] sm:$0xf]
      %v236 = vld [vmem:[%s218 + $0x10] sm:$0xf]
      %v237 = vld [vmem:[%s218 + $0x14] sm:$0xf]
      %v238 = vld [vmem:[%s218 + $0x18] sm:$0xf]
      %v239 = vld [vmem:[%s218 + $0x1c] sm:$0xf]
      %v240 = vld [vmem:[%s218 + $0x20] sm:$0xf]
      %v241 = vld [vmem:[%s218 + $0x24] sm:$0xf]
      %v242 = vld [vmem:[%s218 + $0x28] sm:$0xf]
      %v243 = vld [vmem:[%s218 + $0x2c] sm:$0xf]
      %v244 = vld [vmem:[%s218 + $0x30] sm:$0xf]
      %v245 = vld [vmem:[%s218 + $0x34] sm:$0xf]
      %v246 = vld [vmem:[%s218 + $0x38] sm:$0xf]
      %v247 = vld [vmem:[%s218 + $0x3c] sm:$0xf]
      %v248 = vld [vmem:[%s2] sm:$0xff]
      %v249 = vld [vmem:[%s2 + $0x8] sm:$0xff]
      %v250 = vld [vmem:[%s2 + $0x10] sm:$0xff]
      %v251 = vld [vmem:[%s2 + $0x18] sm:$0xff]
      %v252 = vld [vmem:[%s2 + $0x20] sm:$0xff]
      %v253 = vld [vmem:[%s2 + $0x28] sm:$0xff]
      %v254 = vld [vmem:[%s2 + $0x30] sm:$0xff]
      %v255 = vld [vmem:[%s2 + $0x38] sm:$0xff]
      %257 = vset.pattern.permute.xlu0 0
      %258 = vperm.xlu0 %257, %v248
      %v259 = vpop.permute.xlu0 %258
      %262 = vset.pattern.permute.xlu0 0
      %263 = vperm.xlu0 %262, %v249
      %v264 = vpop.permute.xlu0 %263
      %267 = vset.pattern.permute.xlu0 0
      %268 = vperm.xlu0 %267, %v250
      %v269 = vpop.permute.xlu0 %268
      %272 = vset.pattern.permute.xlu0 0
      %273 = vperm.xlu0 %272, %v251
      %v274 = vpop.permute.xlu0 %273
      %277 = vset.pattern.permute.xlu0 0
      %278 = vperm.xlu0 %277, %v252
      %v279 = vpop.permute.xlu0 %278
      %282 = vset.pattern.permute.xlu0 0
      %283 = vperm.xlu0 %282, %v253
      %v284 = vpop.permute.xlu0 %283
      %287 = vset.pattern.permute.xlu0 0
      %288 = vperm.xlu0 %287, %v254
      %v289 = vpop.permute.xlu0 %288
      %292 = vset.pattern.permute.xlu0 0
      %293 = vperm.xlu0 %292, %v255
      %v294 = vpop.permute.xlu0 %293
      %v312 = vunpack.c.l.b16 %v232
      %v313 = vunpack.c.l.b16 %v233
      %v314 = vunpack.c.l.b16 %v234
      %v315 = vunpack.c.l.b16 %v235
      %v316 = vunpack.c.l.b16 %v236
      %v317 = vunpack.c.l.b16 %v237
      %v318 = vunpack.c.l.b16 %v238
      %v319 = vunpack.c.l.b16 %v239
      %v320 = vunpack.c.l.b16 %v240
      %v321 = vunpack.c.l.b16 %v241
      %v322 = vunpack.c.l.b16 %v242
      %v323 = vunpack.c.l.b16 %v243
      %v324 = vunpack.c.l.b16 %v244
      %v325 = vunpack.c.l.b16 %v245
      %v326 = vunpack.c.l.b16 %v246
      %v327 = vunpack.c.l.b16 %v247
      %v328 = vpack.c.b16 %v313, %v312
      %v329 = vpack.c.b16 %v315, %v314
      %v330 = vpack.c.b16 %v317, %v316
      %v331 = vpack.c.b16 %v319, %v318
      %v332 = vpack.c.b16 %v321, %v320
      %v333 = vpack.c.b16 %v323, %v322
      %v334 = vpack.c.b16 %v325, %v324
      %v335 = vpack.c.b16 %v327, %v326
      %344 = vmatprep.subr.bf16.mxu0 0
      %345 = vmatpush1.bf16.msra.mxu0 %v328
      %346 = vmatprep.subr.bf16.mxu0 0
      %347 = vmatpush1.bf16.msra.mxu0 %v329
      %348 = vmatprep.subr.bf16.mxu0 0
      %349 = vmatpush1.bf16.msra.mxu0 %v330
      %350 = vmatprep.subr.bf16.mxu0 0
      %351 = vmatpush1.bf16.msra.mxu0 %v331
      %352 = vmatprep.subr.bf16.mxu0 0
      %353 = vmatpush1.bf16.msra.mxu0 %v332
      %354 = vmatprep.subr.bf16.mxu0 0
      %355 = vmatpush1.bf16.msra.mxu0 %v333
      %356 = vmatprep.subr.bf16.mxu0 0
      %357 = vmatpush1.bf16.msra.mxu0 %v334
      %358 = vmatprep.subr.bf16.mxu0 0
      %359 = vmatpush1.bf16.msra.mxu0 %v335
      %360 = vmatprep.subr.bf16.mxu0 0
      %361 = vmatpush1.bf16.msra.mxu0 0
      %362 = vmatprep.subr.bf16.mxu0 0
      %363 = vmatpush1.bf16.msra.mxu0 0
      %364 = vmatprep.subr.bf16.mxu0 0
      %365 = vmatpush1.bf16.msra.mxu0 0
      %366 = vmatprep.subr.bf16.mxu0 0
      %367 = vmatpush1.bf16.msra.mxu0 0
      %368 = vmatprep.subr.bf16.mxu0 0
      %369 = vmatpush1.bf16.msra.mxu0 0
      %370 = vmatprep.subr.bf16.mxu0 0
      %371 = vmatpush1.bf16.msra.mxu0 0
      %372 = vmatprep.subr.bf16.mxu0 0
      %373 = vmatpush1.bf16.msra.mxu0 0
      %374 = vmatprep.subr.bf16.mxu0 0
      %375 = vmatpush1.bf16.msra.mxu0 0
      %376 = vmatprep.mubr.f32.mxu0 0.0
      %377 = vmatmul.mubr.f32.gmra.mrb[0].mxu0 %v224
      %v378 = vpop.f32.mrb[0].mxu0
      %v379 = vadd.f32 %v259, %v378
      %v380 = vpop.f32.mrb[0].mxu0
      %381 = vmatprep.mubr.f32.mxu0 0.0
      %382 = vmatmul.mubr.f32.gmra.mrb[0].mxu0 %v225
      %v383 = vpop.f32.mrb[0].mxu0
      %v384 = vadd.f32 %v264, %v383
      %v385 = vpop.f32.mrb[0].mxu0
      %386 = vmatprep.mubr.f32.mxu0 0.0
      %387 = vmatmul.mubr.f32.gmra.mrb[0].mxu0 %v226
      %v388 = vpop.f32.mrb[0].mxu0
      %v389 = vadd.f32 %v269, %v388
      %v390 = vpop.f32.mrb[0].mxu0
      %391 = vmatprep.mubr.f32.mxu0 0.0
      %392 = vmatmul.mubr.f32.gmra.mrb[0].mxu0 %v227
      %v393 = vpop.f32.mrb[0].mxu0
      %v394 = vadd.f32 %v274, %v393
      %v395 = vpop.f32.mrb[0].mxu0
      %396 = vmatprep.mubr.f32.mxu0 0.0
      %397 = vmatmul.mubr.f32.gmra.mrb[0].mxu0 %v228
      %v398 = vpop.f32.mrb[0].mxu0
      %v399 = vadd.f32 %v279, %v398
      %v400 = vpop.f32.mrb[0].mxu0
      %401 = vmatprep.mubr.f32.mxu0 0.0
      %402 = vmatmul.mubr.f32.gmra.mrb[0].mxu0 %v229
      %v403 = vpop.f32.mrb[0].mxu0
      %v404 = vadd.f32 %v284, %v403
      %v405 = vpop.f32.mrb[0].mxu0
      %406 = vmatprep.mubr.f32.mxu0 0.0
      %407 = vmatmul.mubr.f32.gmra.mrb[0].mxu0 %v230
      %v408 = vpop.f32.mrb[0].mxu0
      %v409 = vadd.f32 %v289, %v408
      %v410 = vpop.f32.mrb[0].mxu0
      %411 = vmatprep.mubr.f32.mxu0 0.0
      %412 = vmatmul.mubr.f32.gmra.mrb[0].mxu0 %v231
      %v413 = vpop.f32.mrb[0].mxu0
      %v414 = vadd.f32 %v294, %v413
      %v415 = vpop.f32.mrb[0].mxu0
      %416 = vdwg.mxu0
      %v417 = vmax.f32 %v379, 0.0
      %v418 = vmax.f32 %v384, 0.0
      %v419 = vmax.f32 %v389, 0.0
      %v420 = vmax.f32 %v394, 0.0
      %v421 = vmax.f32 %v399, 0.0
      %v422 = vmax.f32 %v404, 0.0
      %v423 = vmax.f32 %v409, 0.0
      %v424 = vmax.f32 %v414, 0.0
      %v425 = vld [vmem:[%s3] sm:$0x7]
      %v426 = vld [vmem:[%s4] sm:$0x7]
      %428 = vset.pattern.permute.xlu0 0
      %429 = vperm.xlu0 %428, %v426
      %v430 = vpop.permute.xlu0 %429
      %vm432 = vcmask 523264
      %v434 = vsel %vm432, %v425, 0
      %436 = vmatprep.subr.mxu0 0.0
      %437 = vmatpush1.msra.mxu0 %v417
      %438 = vmatprep.subr.mxu0 0.0
      %439 = vmatpush1.msra.mxu0 %v418
      %440 = vmatprep.subr.mxu0 0.0
      %441 = vmatpush1.msra.mxu0 %v419
      %442 = vmatprep.subr.mxu0 0.0
      %443 = vmatpush1.msra.mxu0 %v420
      %444 = vmatprep.subr.mxu0 0.0
      %445 = vmatpush1.msra.mxu0 %v421
      %446 = vmatprep.subr.mxu0 0.0
      %447 = vmatpush1.msra.mxu0 %v422
      %448 = vmatprep.subr.mxu0 0.0
      %449 = vmatpush1.msra.mxu0 %v423
      %450 = vmatprep.subr.mxu0 0.0
      %451 = vmatpush1.msra.mxu0 %v424
      %452 = vmatprep.subr.mxu0 0.0
      %453 = vmatpush1.msra.mxu0 0.0
      %454 = vmatprep.subr.mxu0 0.0
      %455 = vmatpush1.msra.mxu0 0.0
      %456 = vmatprep.subr.mxu0 0.0
      %457 = vmatpush1.msra.mxu0 0.0
      %458 = vmatprep.subr.mxu0 0.0
      %459 = vmatpush1.msra.mxu0 0.0
      %460 = vmatprep.subr.mxu0 0.0
      %461 = vmatpush1.msra.mxu0 0.0
      %462 = vmatprep.subr.mxu0 0.0
      %463 = vmatpush1.msra.mxu0 0.0
      %464 = vmatprep.subr.mxu0 0.0
      %465 = vmatpush1.msra.mxu0 0.0
      %466 = vmatprep.subr.mxu0 0.0
      %467 = vmatpush1.msra.mxu0 0.0
      %468 = vmatprep.subr.mxu0 0.0
      %469 = vmatpush1.msra.mxu0 0.0
      %470 = vmatprep.subr.mxu0 0.0
      %471 = vmatpush1.msra.mxu0 0.0
      %472 = vmatprep.subr.mxu0 0.0
      %473 = vmatpush1.msra.mxu0 0.0
      %474 = vmatprep.subr.mxu0 0.0
      %475 = vmatpush1.msra.mxu0 0.0
      %476 = vmatprep.subr.mxu0 0.0
      %477 = vmatpush1.msra.mxu0 0.0
      %478 = vmatprep.subr.mxu0 0.0
      %479 = vmatpush1.msra.mxu0 0.0
      %480 = vmatprep.subr.mxu0 0.0
      %481 = vmatpush1.msra.mxu0 0.0
      %482 = vmatprep.subr.mxu0 0.0
      %483 = vmatpush1.msra.mxu0 0.0
      %484 = vmatprep.subr.mxu0 0.0
      %485 = vmatpush1.msra.mxu0 0.0
      %486 = vmatprep.subr.mxu0 0.0
      %487 = vmatpush1.msra.mxu0 0.0
      %488 = vmatprep.subr.mxu0 0.0
      %489 = vmatpush1.msra.mxu0 0.0
      %490 = vmatprep.subr.mxu0 0.0
      %491 = vmatpush1.msra.mxu0 0.0
      %492 = vmatprep.subr.mxu0 0.0
      %493 = vmatpush1.msra.mxu0 0.0
      %494 = vmatprep.subr.mxu0 0.0
      %495 = vmatpush1.msra.mxu0 0.0
      %496 = vmatprep.subr.mxu0 0.0
      %497 = vmatpush1.msra.mxu0 0.0
      %498 = vmatprep.subr.mxu0 0.0
      %499 = vmatpush1.msra.mxu0 0.0
      %500 = vmatprep.mubr.f32.mxu0 0.0
      %501 = vmatmul.mubr.f32.gmra.mrb[0].mxu0 %v434
      %v502 = vpop.f32.mrb[0].mxu0
      %v503 = vadd.f32 %v430, %v502
      %v504 = vpop.f32.mrb[0].mxu0
      %505 = vdwg.mxu0
      %vm506 = vcmask 256000
      %507 = vst.msk [vmem:[%s222] sm:$0x7] %vm506, %v503
      %p508 = scmp.lt.s32.totalorder %s16, 1
      %s509 = scalar_select %p508, %s16, 1
      %s510 = smul.addr %s509, 4
      %s511 = scalar_lea.vmem %s5, %s510
      // Predicated region
      $region41: #{vae_forward.9} parent=39 // pred_check
        %p512 = pneg %p144
      $region42: #{vae_forward.9} parent=39 // pred_check_branch
        %514 = sbr.rel (%p512) target = $region44
      $region43: #{vae_forward.9} parent=39 // pred_region
        _
      $region44: #{vae_forward.9} parent=39 // pred_fallthru
        _
    $region40: #{vae_forward.9} parent=5 // pred_fallthru
      _
    %p515 = scmp.le.s32.totalorder 2, %s11
    // Predicated region
    $region45: #{vae_forward.9} parent=5 // pred_check
      %p516 = pneg %p515
    $region46: #{vae_forward.9} parent=5 // pred_check_branch
      %518 = sbr.rel (%p516) target = $region48
    $region47: #{vae_forward.9} parent=5 // pred_region
      %s519 = ssub.s32 %s11, 2
      // Predicated region
      $region49: #{vae_forward.9} parent=47 // pred_check
        %p520 = pneg %p150
      $region50: #{vae_forward.9} parent=47 // pred_check_branch
        %522 = sbr.rel (%p520) target = $region52
      $region51: #{vae_forward.9} parent=47 // pred_region
        %p523 = scmp.lt.s32.totalorder %s17, 1
        %s524 = scalar_select %p523, %s17, 1
        %s525 = smul.addr %s524, 4
        %s526 = scalar_lea.vmem %s5, %s525
      $region52: #{vae_forward.9} parent=47 // pred_fallthru
        _
    $region48: #{vae_forward.9} parent=5 // pred_fallthru
      _
  $region6: #{vae_forward.9} parent=0 // loop_footer
    %s15 = sadd.s32 1, %s11
  $region7: #{vae_forward.9} parent=0 // loop_footer_branch
    %10 = sbr.rel target = $region3
  $region8: #{vae_forward.9} parent=0 // loop_exit
    _

</llo_original>
